<compile_context>
chip_gen: v7x
topology: tpu7x:2x2x1
jax: 0.10.0
libtpu: 0.0.40
codegen_flags: <defaults>
</compile_context>

<pallas_src>
import jax
import jax.numpy as jnp
from jax.experimental import pallas as pl
from jax.experimental.pallas import tpu as pltpu


def _round_up(x, m):
    return ((x + m - 1) // m) * m


# -----------------------------------------------------------------------------
# Pallas kernels
# -----------------------------------------------------------------------------
def _conv_matmul_relu_kernel(p_ref, w_ref, b_ref, o_ref):
    # p_ref: (tm, K) bf16 patches tile, w_ref: (K, Cout) bf16 (resident),
    # b_ref: (1, Cout) f32 (resident).  MXU matmul in bf16, f32 epilogue.
    acc = jnp.dot(p_ref[...], w_ref[...], preferred_element_type=jnp.float32)
    acc = acc + b_ref[...]
    o_ref[...] = jnp.maximum(acc, 0.0).astype(o_ref.dtype)


def _l1_partial_kernel(x_ref, y_ref, o_ref):
    # Tiled sum of |x - y|.  Output (1,1) has a constant index_map, so it stays
    # resident across the (arbitrary) reduction axis and is written back once.
    @pl.when(pl.program_id(0) == 0)
    def _():
        o_ref[...] = jnp.zeros_like(o_ref)

    d = x_ref[...].astype(jnp.float32) - y_ref[...].astype(jnp.float32)
    o_ref[...] += jnp.sum(jnp.abs(d))


# -----------------------------------------------------------------------------
# Wrappers
# -----------------------------------------------------------------------------
def conv2d_relu_pallas(x_nhwc, w_oihw, b, *, stride, pad, tm_max=2048):
    """3x3 conv + bias + ReLU. im2col in JAX (glue), tiled matmul in Pallas."""
    N, H, W, Cin = x_nhwc.shape
    Cout, _, kh, kw = w_oihw.shape

    x_bf = x_nhwc.astype(jnp.bfloat16)
    xp = jnp.pad(x_bf, ((0, 0), (pad, pad), (pad, pad), (0, 0)))
    Ho = (H + 2 * pad - kh) // stride + 1
    Wo = (W + 2 * pad - kw) // stride + 1

    # TODO(synk): gather the 3x3 taps inside the kernel (halo'd row blocks via
    # manual DMA) to avoid materializing the 9x im2col array in HBM.
    cols = []
    for dy in range(kh):
        for dx in range(kw):
            cols.append(xp[:, dy:dy + stride * Ho:stride,
                           dx:dx + stride * Wo:stride, :])
    patches = jnp.concatenate(cols, axis=-1)            # (N, Ho, Wo, kh*kw*Cin)
    M = N * Ho * Wo
    K = kh * kw * Cin
    patches = patches.reshape(M, K)

    # Pad K to a multiple of 8 (sublane-friendly), M to a multiple of 8.
    Kp = _round_up(K, 8)
    Mp = _round_up(M, 8)
    if Kp != K or Mp != M:
        patches = jnp.pad(patches, ((0, Mp - M), (0, Kp - K)))

    # Match im2col ordering (dy, dx, cin): weight matrix (kh*kw*Cin, Cout).
    w_mat = jnp.transpose(w_oihw, (2, 3, 1, 0)).reshape(K, Cout)
    if Kp != K:
        w_mat = jnp.pad(w_mat, ((0, Kp - K), (0, 0)))
    w_mat = w_mat.astype(jnp.bfloat16)
    b_mat = b.reshape(1, Cout).astype(jnp.float32)

    tm = min(tm_max, Mp)                  # tile rows; weights stay resident
    grid = (pl.cdiv(Mp, tm),)

    bf16_b = 2
    cost = pl.CostEstimate(
        flops=2 * Mp * Kp * Cout,
        transcendentals=0,
        bytes_accessed=(Mp * Kp * bf16_b + Kp * Cout * bf16_b
                        + Cout * 4 + Mp * Cout * bf16_b),
    )

    out = pl.pallas_call(
        _conv_matmul_relu_kernel,
        out_shape=jax.ShapeDtypeStruct((Mp, Cout), jnp.bfloat16),
        grid=grid,
        in_specs=[
            pl.BlockSpec((tm, Kp), lambda i: (i, 0)),
            pl.BlockSpec((Kp, Cout), lambda i: (0, 0)),
            pl.BlockSpec((1, Cout), lambda i: (0, 0)),
        ],
        out_specs=pl.BlockSpec((tm, Cout), lambda i: (i, 0)),
        compiler_params=pltpu.CompilerParams(
            dimension_semantics=("parallel",),        # shards M-grid on v7x megacore
            vmem_limit_bytes=32 * 1024 * 1024,        # safe on v5e/v6e/v7x
        ),
        cost_estimate=cost,
    )(patches, w_mat, b_mat)

    return out[:M].reshape(N, Ho, Wo, Cout)


def l1_mean_pallas(xf, yf, tr_max=512):
    """Mean absolute error between two feature maps (L1Loss, reduction='mean')."""
    n = xf.size
    xflat = xf.reshape(-1)
    yflat = yf.reshape(-1)

    rows = -(-n // 128)                       # ceil(n / 128)
    tr = min(tr_max, _round_up(rows, 8))      # row tile (sublane-aligned)
    rows_p = _round_up(rows, tr)              # exact multiple of tile -> no tail garbage
    total = rows_p * 128
    # Zero padding is exact for |x - y| sums.
    xp = jnp.pad(xflat, (0, total - n)).reshape(rows_p, 128)
    yp = jnp.pad(yflat, (0, total - n)).reshape(rows_p, 128)

    s = pl.pallas_call(
        _l1_partial_kernel,
        out_shape=jax.ShapeDtypeStruct((1, 1), jnp.float32),
        grid=(rows_p // tr,),
        in_specs=[
            pl.BlockSpec((tr, 128), lambda i: (i, 0)),
            pl.BlockSpec((tr, 128), lambda i: (i, 0)),
        ],
        out_specs=pl.BlockSpec((1, 1), lambda i: (0, 0)),
        compiler_params=pltpu.CompilerParams(
            dimension_semantics=("arbitrary",),       # reduction axis
            vmem_limit_bytes=32 * 1024 * 1024,
        ),
    )(xp, yp)
    return s[0, 0] / jnp.float32(n)


# -----------------------------------------------------------------------------
# SketchANet-style feature extractor (scaled down, deterministic init)
# -----------------------------------------------------------------------------
# (Cin, Cout, stride) for 5 stages of 3x3 conv + ReLU.
_STAGES = [(1, 8, 1), (8, 16, 2), (16, 16, 1), (16, 32, 2), (32, 32, 1)]
_LOSS_WEIGHTS = [1.0 / 32, 1.0 / 16, 1.0 / 8, 1.0 / 4, 1.0]


def init_sketchanet_params(key):
    params = []
    for i, (cin, cout, _) in enumerate(_STAGES):
        kw_, kb_ = jax.random.split(jax.random.fold_in(key, i))
        fan_in = cin * 3 * 3
        w = jax.random.normal(kw_, (cout, cin, 3, 3), jnp.float32) * (2.0 / fan_in) ** 0.5
        b = jax.random.normal(kb_, (cout,), jnp.float32) * 0.01
        params.append((w, b))
    return params


def sketchanet_features(params, x_nchw):
    # NCHW (PyTorch convention) -> NHWC for the kernel.
    h = jnp.transpose(x_nchw, (0, 2, 3, 1))
    feats = []
    for (w, b), (_, _, stride) in zip(params, _STAGES):
        h = conv2d_relu_pallas(h, w, b, stride=stride, pad=1)
        feats.append(h)
    return feats


@jax.jit
def sketchanet_loss(params, x, y):
    """Forward pass of SketchANetLoss: weighted sum of L1 losses over 5 levels."""
    n = x.shape[0]
    # Run x and y through the extractor in one batched pass (half the launches).
    xy = jnp.concatenate([x, y], axis=0).astype(jnp.float32)
    feats = sketchanet_features(params, xy)

    loss = jnp.float32(0.0)
    for i, f in enumerate(feats):
        xf = f[:n]
        yf = jax.lax.stop_gradient(f[n:])     # y features are .detach()'d in PyTorch
        loss = loss + jnp.float32(_LOSS_WEIGHTS[i]) * l1_mean_pallas(xf, yf)
    return loss


if __name__ == "__main__":
    key = jax.random.PRNGKey(0)
    kp, kx, ky = jax.random.split(key, 3)

    params = init_sketchanet_params(kp)
    # NCHW inputs, grayscale sketches, small spatial size.
    x = jax.random.normal(kx, (2, 1, 16, 16), jnp.float32)
    y = jax.random.normal(ky, (2, 1, 16, 16), jnp.float32)

    loss = sketchanet_loss(params, x, y)
    jax.block_until_ready(loss)
    assert loss.shape == () and jnp.isfinite(loss)
    print("KERNEL_OK")
</pallas_src>

<mosaic_0001>
module attributes {stable_mosaic.version = 11 : i64} {
  func.func @_conv_matmul_relu_kernel(%arg0: i32, %arg1: memref<1024x16xbf16, #tpu.memory_space<vmem>>, %arg2: memref<16x8xbf16, #tpu.memory_space<vmem>>, %arg3: memref<1x8xf32, #tpu.memory_space<vmem>>, %arg4: memref<1024x8xbf16, #tpu.memory_space<vmem>>) attributes {dimension_semantics = [#tpu.dimension_semantics<parallel>], iteration_bounds = array<i64: 1>, scalar_prefetch = 0 : i64, scratch_operands = 0 : i64, tpu.core_type = #tpu.core_type<tc>, window_params = [{transform_indices = @transform_0, window_bounds = array<i64: 1024, 16>}, {pipeline_mode = #tpu.pipeline_mode<synchronous>, transform_indices = @transform_1, window_bounds = array<i64: 16, 8>}, {pipeline_mode = #tpu.pipeline_mode<synchronous>, transform_indices = @transform_2, window_bounds = array<i64: 1, 8>}, {transform_indices = @transform_3, window_bounds = array<i64: 1024, 8>}]} {
    %c0 = arith.constant 0 : index
    %c0_0 = arith.constant 0 : index
    %0 = vector.load %arg1[%c0, %c0_0] : memref<1024x16xbf16, #tpu.memory_space<vmem>>, vector<1024x16xbf16>
    %c0_1 = arith.constant 0 : index
    %c0_2 = arith.constant 0 : index
    %1 = vector.load %arg2[%c0_1, %c0_2] : memref<16x8xbf16, #tpu.memory_space<vmem>>, vector<16x8xbf16>
    %cst = arith.constant dense<0.000000e+00> : vector<1024x8xf32>
    %2 = tpu.matmul %0, %1, %cst {dimension_numbers = #tpu.dot_dimension_numbers<[1], [0], [0], [1], [0, 0, 1, 1], [], []>} : vector<1024x16xbf16>, vector<16x8xbf16>, vector<1024x8xf32> -> vector<1024x8xf32>
    %c0_3 = arith.constant 0 : index
    %c0_4 = arith.constant 0 : index
    %3 = vector.load %arg3[%c0_3, %c0_4] : memref<1x8xf32, #tpu.memory_space<vmem>>, vector<1x8xf32>
    %4 = vector.broadcast %3 : vector<1x8xf32> to vector<1024x8xf32>
    %5 = arith.addf %2, %4 : vector<1024x8xf32>
    %cst_5 = arith.constant 0.000000e+00 : f32
    %6 = vector.broadcast %cst_5 : f32 to vector<1024x8xf32>
    %7 = arith.maximumf %5, %6 : vector<1024x8xf32>
    %8 = arith.truncf %7 : vector<1024x8xf32> to vector<1024x8xbf16>
    %c0_6 = arith.constant 0 : index
    %c0_7 = arith.constant 0 : index
    %9 = vector.load %arg4[%c0_6, %c0_7] : memref<1024x8xbf16, #tpu.memory_space<vmem>>, vector<1024x8xbf16>
    tpu.vector_store %arg4[%c0_6, %c0_7], %8 {strides = array<i32>} : memref<1024x8xbf16, #tpu.memory_space<vmem>>, vector<1024x8xbf16>,
    return
  }
  func.func @transform_0(%arg0: i32) -> (i32, i32) {
    %c0_i32 = arith.constant 0 : i32
    %c0_i32_0 = arith.constant 0 : i32
    return %arg0, %c0_i32 : i32, i32
  }
  func.func @transform_1(%arg0: i32) -> (i32, i32) {
    %c0_i32 = arith.constant 0 : i32
    %c0_i32_0 = arith.constant 0 : i32
    %c0_i32_1 = arith.constant 0 : i32
    return %c0_i32, %c0_i32_0 : i32, i32
  }
  func.func @transform_2(%arg0: i32) -> (i32, i32) {
    %c0_i32 = arith.constant 0 : i32
    %c0_i32_0 = arith.constant 0 : i32
    %c0_i32_1 = arith.constant 0 : i32
    return %c0_i32, %c0_i32_0 : i32, i32
  }
  func.func @transform_3(%arg0: i32) -> (i32, i32) {
    %c0_i32 = arith.constant 0 : i32
    %c0_i32_0 = arith.constant 0 : i32
    return %arg0, %c0_i32 : i32, i32
  }
}

module attributes {stable_mosaic.version = 11 : i64} {
  func.func @_l1_partial_kernel(%arg0: i32, %arg1: memref<32x128xbf16, #tpu.memory_space<vmem>>, %arg2: memref<32x128xbf16, #tpu.memory_space<vmem>>, %arg3: memref<1x1xf32, #tpu.memory_space<vmem>>) attributes {dimension_semantics = [#tpu.dimension_semantics<arbitrary>], iteration_bounds = array<i64: 1>, scalar_prefetch = 0 : i64, scratch_operands = 0 : i64, tpu.core_type = #tpu.core_type<tc>, window_params = [{transform_indices = @transform_0, window_bounds = array<i64: 32, 128>}, {transform_indices = @transform_1, window_bounds = array<i64: 32, 128>}, {pipeline_mode = #tpu.pipeline_mode<synchronous>, transform_indices = @transform_2, window_bounds = array<i64: 1, 1>}]} {
    %c0_i32 = arith.constant 0 : i32
    %0 = arith.cmpi eq, %arg0, %c0_i32 : i32
    %1 = arith.extui %0 : i1 to i32
    %c0_i32_0 = arith.constant 0 : i32
    %2 = arith.cmpi ne, %1, %c0_i32_0 : i32
    scf.if %2 {
      %cst_8 = arith.constant 0.000000e+00 : f32
      %17 = vector.broadcast %cst_8 : f32 to vector<1x1xf32>
      %c0_9 = arith.constant 0 : index
      %c0_10 = arith.constant 0 : index
      %18 = vector.load %arg3[%c0_9, %c0_10] : memref<1x1xf32, #tpu.memory_space<vmem>>, vector<1x1xf32>
      tpu.vector_store %arg3[%c0_9, %c0_10], %17 {strides = array<i32>} : memref<1x1xf32, #tpu.memory_space<vmem>>, vector<1x1xf32>,
    } else {
    }
    %c0 = arith.constant 0 : index
    %c0_1 = arith.constant 0 : index
    %3 = vector.load %arg1[%c0, %c0_1] : memref<32x128xbf16, #tpu.memory_space<vmem>>, vector<32x128xbf16>
    %4 = arith.extf %3 : vector<32x128xbf16> to vector<32x128xf32>
    %c0_2 = arith.constant 0 : index
    %c0_3 = arith.constant 0 : index
    %5 = vector.load %arg2[%c0_2, %c0_3] : memref<32x128xbf16, #tpu.memory_space<vmem>>, vector<32x128xbf16>
    %6 = arith.extf %5 : vector<32x128xbf16> to vector<32x128xf32>
    %7 = arith.subf %4, %6 : vector<32x128xf32>
    %c0_4 = arith.constant 0 : index
    %c0_5 = arith.constant 0 : index
    %8 = vector.load %arg3[%c0_4, %c0_5] : memref<1x1xf32, #tpu.memory_space<vmem>>, vector<1x1xf32>
    %9 = math.absf %7 : vector<32x128xf32>
    %10 = vector.shape_cast %9 : vector<32x128xf32> to vector<1x32x128xf32>
    %cst = arith.constant dense<0.000000e+00> : vector<1xf32>
    %11 = vector.multi_reduction <add>, %10, %cst [1, 2] : vector<1x32x128xf32> to vector<1xf32>
    %12 = vector.shape_cast %11 : vector<1xf32> to vector<1x1x1xf32>
    %13 = vector.extract %12[0, 0, 0] : f32 from vector<1x1x1xf32>
    %14 = vector.broadcast %13 : f32 to vector<1x1xf32>
    %15 = arith.addf %8, %14 : vector<1x1xf32>
    %c0_6 = arith.constant 0 : index
    %c0_7 = arith.constant 0 : index
    %16 = vector.load %arg3[%c0_6, %c0_7] : memref<1x1xf32, #tpu.memory_space<vmem>>, vector<1x1xf32>
    tpu.vector_store %arg3[%c0_6, %c0_7], %15 {strides = array<i32>} : memref<1x1xf32, #tpu.memory_space<vmem>>, vector<1x1xf32>,
    return
  }
  func.func @transform_0(%arg0: i32) -> (i32, i32) {
    %c0_i32 = arith.constant 0 : i32
    %c0_i32_0 = arith.constant 0 : i32
    return %arg0, %c0_i32 : i32, i32
  }
  func.func @transform_1(%arg0: i32) -> (i32, i32) {
    %c0_i32 = arith.constant 0 : i32
    %c0_i32_0 = arith.constant 0 : i32
    return %arg0, %c0_i32 : i32, i32
  }
  func.func @transform_2(%arg0: i32) -> (i32, i32) {
    %c0_i32 = arith.constant 0 : i32
    %c0_i32_0 = arith.constant 0 : i32
    %c0_i32_1 = arith.constant 0 : i32
    return %c0_i32, %c0_i32_0 : i32, i32
  }
}

module attributes {stable_mosaic.version = 11 : i64} {
  func.func @_conv_matmul_relu_kernel(%arg0: i32, %arg1: memref<256x72xbf16, #tpu.memory_space<vmem>>, %arg2: memref<72x16xbf16, #tpu.memory_space<vmem>>, %arg3: memref<1x16xf32, #tpu.memory_space<vmem>>, %arg4: memref<256x16xbf16, #tpu.memory_space<vmem>>) attributes {dimension_semantics = [#tpu.dimension_semantics<parallel>], iteration_bounds = array<i64: 1>, scalar_prefetch = 0 : i64, scratch_operands = 0 : i64, tpu.core_type = #tpu.core_type<tc>, window_params = [{transform_indices = @transform_0, window_bounds = array<i64: 256, 72>}, {pipeline_mode = #tpu.pipeline_mode<synchronous>, transform_indices = @transform_1, window_bounds = array<i64: 72, 16>}, {pipeline_mode = #tpu.pipeline_mode<synchronous>, transform_indices = @transform_2, window_bounds = array<i64: 1, 16>}, {transform_indices = @transform_3, window_bounds = array<i64: 256, 16>}]} {
    %c0 = arith.constant 0 : index
    %c0_0 = arith.constant 0 : index
    %0 = vector.load %arg1[%c0, %c0_0] : memref<256x72xbf16, #tpu.memory_space<vmem>>, vector<256x72xbf16>
    %c0_1 = arith.constant 0 : index
    %c0_2 = arith.constant 0 : index
    %1 = vector.load %arg2[%c0_1, %c0_2] : memref<72x16xbf16, #tpu.memory_space<vmem>>, vector<72x16xbf16>
    %cst = arith.constant dense<0.000000e+00> : vector<256x16xf32>
    %2 = tpu.matmul %0, %1, %cst {dimension_numbers = #tpu.dot_dimension_numbers<[1], [0], [0], [1], [0, 0, 1, 1], [], []>} : vector<256x72xbf16>, vector<72x16xbf16>, vector<256x16xf32> -> vector<256x16xf32>
    %c0_3 = arith.constant 0 : index
    %c0_4 = arith.constant 0 : index
    %3 = vector.load %arg3[%c0_3, %c0_4] : memref<1x16xf32, #tpu.memory_space<vmem>>, vector<1x16xf32>
    %4 = vector.broadcast %3 : vector<1x16xf32> to vector<256x16xf32>
    %5 = arith.addf %2, %4 : vector<256x16xf32>
    %cst_5 = arith.constant 0.000000e+00 : f32
    %6 = vector.broadcast %cst_5 : f32 to vector<256x16xf32>
    %7 = arith.maximumf %5, %6 : vector<256x16xf32>
    %8 = arith.truncf %7 : vector<256x16xf32> to vector<256x16xbf16>
    %c0_6 = arith.constant 0 : index
    %c0_7 = arith.constant 0 : index
    %9 = vector.load %arg4[%c0_6, %c0_7] : memref<256x16xbf16, #tpu.memory_space<vmem>>, vector<256x16xbf16>
    tpu.vector_store %arg4[%c0_6, %c0_7], %8 {strides = array<i32>} : memref<256x16xbf16, #tpu.memory_space<vmem>>, vector<256x16xbf16>,
    return
  }
  func.func @transform_0(%arg0: i32) -> (i32, i32) {
    %c0_i32 = arith.constant 0 : i32
    %c0_i32_0 = arith.constant 0 : i32
    return %arg0, %c0_i32 : i32, i32
  }
  func.func @transform_1(%arg0: i32) -> (i32, i32) {
    %c0_i32 = arith.constant 0 : i32
    %c0_i32_0 = arith.constant 0 : i32
    %c0_i32_1 = arith.constant 0 : i32
    return %c0_i32, %c0_i32_0 : i32, i32
  }
  func.func @transform_2(%arg0: i32) -> (i32, i32) {
    %c0_i32 = arith.constant 0 : i32
    %c0_i32_0 = arith.constant 0 : i32
    %c0_i32_1 = arith.constant 0 : i32
    return %c0_i32, %c0_i32_0 : i32, i32
  }
  func.func @transform_3(%arg0: i32) -> (i32, i32) {
    %c0_i32 = arith.constant 0 : i32
    %c0_i32_0 = arith.constant 0 : i32
    return %arg0, %c0_i32 : i32, i32
  }
}

module attributes {stable_mosaic.version = 11 : i64} {
  func.func @_l1_partial_kernel(%arg0: i32, %arg1: memref<16x128xbf16, #tpu.memory_space<vmem>>, %arg2: memref<16x128xbf16, #tpu.memory_space<vmem>>, %arg3: memref<1x1xf32, #tpu.memory_space<vmem>>) attributes {dimension_semantics = [#tpu.dimension_semantics<arbitrary>], iteration_bounds = array<i64: 1>, scalar_prefetch = 0 : i64, scratch_operands = 0 : i64, tpu.core_type = #tpu.core_type<tc>, window_params = [{transform_indices = @transform_0, window_bounds = array<i64: 16, 128>}, {transform_indices = @transform_1, window_bounds = array<i64: 16, 128>}, {pipeline_mode = #tpu.pipeline_mode<synchronous>, transform_indices = @transform_2, window_bounds = array<i64: 1, 1>}]} {
    %c0_i32 = arith.constant 0 : i32
    %0 = arith.cmpi eq, %arg0, %c0_i32 : i32
    %1 = arith.extui %0 : i1 to i32
    %c0_i32_0 = arith.constant 0 : i32
    %2 = arith.cmpi ne, %1, %c0_i32_0 : i32
    scf.if %2 {
      %cst_8 = arith.constant 0.000000e+00 : f32
      %17 = vector.broadcast %cst_8 : f32 to vector<1x1xf32>
      %c0_9 = arith.constant 0 : index
      %c0_10 = arith.constant 0 : index
      %18 = vector.load %arg3[%c0_9, %c0_10] : memref<1x1xf32, #tpu.memory_space<vmem>>, vector<1x1xf32>
      tpu.vector_store %arg3[%c0_9, %c0_10], %17 {strides = array<i32>} : memref<1x1xf32, #tpu.memory_space<vmem>>, vector<1x1xf32>,
    } else {
    }
    %c0 = arith.constant 0 : index
    %c0_1 = arith.constant 0 : index
    %3 = vector.load %arg1[%c0, %c0_1] : memref<16x128xbf16, #tpu.memory_space<vmem>>, vector<16x128xbf16>
    %4 = arith.extf %3 : vector<16x128xbf16> to vector<16x128xf32>
    %c0_2 = arith.constant 0 : index
    %c0_3 = arith.constant 0 : index
    %5 = vector.load %arg2[%c0_2, %c0_3] : memref<16x128xbf16, #tpu.memory_space<vmem>>, vector<16x128xbf16>
    %6 = arith.extf %5 : vector<16x128xbf16> to vector<16x128xf32>
    %7 = arith.subf %4, %6 : vector<16x128xf32>
    %c0_4 = arith.constant 0 : index
    %c0_5 = arith.constant 0 : index
    %8 = vector.load %arg3[%c0_4, %c0_5] : memref<1x1xf32, #tpu.memory_space<vmem>>, vector<1x1xf32>
    %9 = math.absf %7 : vector<16x128xf32>
    %10 = vector.shape_cast %9 : vector<16x128xf32> to vector<1x16x128xf32>
    %cst = arith.constant dense<0.000000e+00> : vector<1xf32>
    %11 = vector.multi_reduction <add>, %10, %cst [1, 2] : vector<1x16x128xf32> to vector<1xf32>
    %12 = vector.shape_cast %11 : vector<1xf32> to vector<1x1x1xf32>
    %13 = vector.extract %12[0, 0, 0] : f32 from vector<1x1x1xf32>
    %14 = vector.broadcast %13 : f32 to vector<1x1xf32>
    %15 = arith.addf %8, %14 : vector<1x1xf32>
    %c0_6 = arith.constant 0 : index
    %c0_7 = arith.constant 0 : index
    %16 = vector.load %arg3[%c0_6, %c0_7] : memref<1x1xf32, #tpu.memory_space<vmem>>, vector<1x1xf32>
    tpu.vector_store %arg3[%c0_6, %c0_7], %15 {strides = array<i32>} : memref<1x1xf32, #tpu.memory_space<vmem>>, vector<1x1xf32>,
    return
  }
  func.func @transform_0(%arg0: i32) -> (i32, i32) {
    %c0_i32 = arith.constant 0 : i32
    %c0_i32_0 = arith.constant 0 : i32
    return %arg0, %c0_i32 : i32, i32
  }
  func.func @transform_1(%arg0: i32) -> (i32, i32) {
    %c0_i32 = arith.constant 0 : i32
    %c0_i32_0 = arith.constant 0 : i32
    return %arg0, %c0_i32 : i32, i32
  }
  func.func @transform_2(%arg0: i32) -> (i32, i32) {
    %c0_i32 = arith.constant 0 : i32
    %c0_i32_0 = arith.constant 0 : i32
    %c0_i32_1 = arith.constant 0 : i32
    return %c0_i32, %c0_i32_0 : i32, i32
  }
}

module attributes {stable_mosaic.version = 11 : i64} {
  func.func @_conv_matmul_relu_kernel(%arg0: i32, %arg1: memref<256x144xbf16, #tpu.memory_space<vmem>>, %arg2: memref<144x16xbf16, #tpu.memory_space<vmem>>, %arg3: memref<1x16xf32, #tpu.memory_space<vmem>>, %arg4: memref<256x16xbf16, #tpu.memory_space<vmem>>) attributes {dimension_semantics = [#tpu.dimension_semantics<parallel>], iteration_bounds = array<i64: 1>, scalar_prefetch = 0 : i64, scratch_operands = 0 : i64, tpu.core_type = #tpu.core_type<tc>, window_params = [{transform_indices = @transform_0, window_bounds = array<i64: 256, 144>}, {pipeline_mode = #tpu.pipeline_mode<synchronous>, transform_indices = @transform_1, window_bounds = array<i64: 144, 16>}, {pipeline_mode = #tpu.pipeline_mode<synchronous>, transform_indices = @transform_2, window_bounds = array<i64: 1, 16>}, {transform_indices = @transform_3, window_bounds = array<i64: 256, 16>}]} {
    %c0 = arith.constant 0 : index
    %c0_0 = arith.constant 0 : index
    %0 = vector.load %arg1[%c0, %c0_0] : memref<256x144xbf16, #tpu.memory_space<vmem>>, vector<256x144xbf16>
    %c0_1 = arith.constant 0 : index
    %c0_2 = arith.constant 0 : index
    %1 = vector.load %arg2[%c0_1, %c0_2] : memref<144x16xbf16, #tpu.memory_space<vmem>>, vector<144x16xbf16>
    %cst = arith.constant dense<0.000000e+00> : vector<256x16xf32>
    %2 = tpu.matmul %0, %1, %cst {dimension_numbers = #tpu.dot_dimension_numbers<[1], [0], [0], [1], [0, 0, 1, 1], [], []>} : vector<256x144xbf16>, vector<144x16xbf16>, vector<256x16xf32> -> vector<256x16xf32>
    %c0_3 = arith.constant 0 : index
    %c0_4 = arith.constant 0 : index
    %3 = vector.load %arg3[%c0_3, %c0_4] : memref<1x16xf32, #tpu.memory_space<vmem>>, vector<1x16xf32>
    %4 = vector.broadcast %3 : vector<1x16xf32> to vector<256x16xf32>
    %5 = arith.addf %2, %4 : vector<256x16xf32>
    %cst_5 = arith.constant 0.000000e+00 : f32
    %6 = vector.broadcast %cst_5 : f32 to vector<256x16xf32>
    %7 = arith.maximumf %5, %6 : vector<256x16xf32>
    %8 = arith.truncf %7 : vector<256x16xf32> to vector<256x16xbf16>
    %c0_6 = arith.constant 0 : index
    %c0_7 = arith.constant 0 : index
    %9 = vector.load %arg4[%c0_6, %c0_7] : memref<256x16xbf16, #tpu.memory_space<vmem>>, vector<256x16xbf16>
    tpu.vector_store %arg4[%c0_6, %c0_7], %8 {strides = array<i32>} : memref<256x16xbf16, #tpu.memory_space<vmem>>, vector<256x16xbf16>,
    return
  }
  func.func @transform_0(%arg0: i32) -> (i32, i32) {
    %c0_i32 = arith.constant 0 : i32
    %c0_i32_0 = arith.constant 0 : i32
    return %arg0, %c0_i32 : i32, i32
  }
  func.func @transform_1(%arg0: i32) -> (i32, i32) {
    %c0_i32 = arith.constant 0 : i32
    %c0_i32_0 = arith.constant 0 : i32
    %c0_i32_1 = arith.constant 0 : i32
    return %c0_i32, %c0_i32_0 : i32, i32
  }
  func.func @transform_2(%arg0: i32) -> (i32, i32) {
    %c0_i32 = arith.constant 0 : i32
    %c0_i32_0 = arith.constant 0 : i32
    %c0_i32_1 = arith.constant 0 : i32
    return %c0_i32, %c0_i32_0 : i32, i32
  }
  func.func @transform_3(%arg0: i32) -> (i32, i32) {
    %c0_i32 = arith.constant 0 : i32
    %c0_i32_0 = arith.constant 0 : i32
    return %arg0, %c0_i32 : i32, i32
  }
}

module attributes {stable_mosaic.version = 11 : i64} {
  func.func @_conv_matmul_relu_kernel(%arg0: i32, %arg1: memref<64x144xbf16, #tpu.memory_space<vmem>>, %arg2: memref<144x32xbf16, #tpu.memory_space<vmem>>, %arg3: memref<1x32xf32, #tpu.memory_space<vmem>>, %arg4: memref<64x32xbf16, #tpu.memory_space<vmem>>) attributes {dimension_semantics = [#tpu.dimension_semantics<parallel>], iteration_bounds = array<i64: 1>, scalar_prefetch = 0 : i64, scratch_operands = 0 : i64, tpu.core_type = #tpu.core_type<tc>, window_params = [{transform_indices = @transform_0, window_bounds = array<i64: 64, 144>}, {pipeline_mode = #tpu.pipeline_mode<synchronous>, transform_indices = @transform_1, window_bounds = array<i64: 144, 32>}, {pipeline_mode = #tpu.pipeline_mode<synchronous>, transform_indices = @transform_2, window_bounds = array<i64: 1, 32>}, {transform_indices = @transform_3, window_bounds = array<i64: 64, 32>}]} {
    %c0 = arith.constant 0 : index
    %c0_0 = arith.constant 0 : index
    %0 = vector.load %arg1[%c0, %c0_0] : memref<64x144xbf16, #tpu.memory_space<vmem>>, vector<64x144xbf16>
    %c0_1 = arith.constant 0 : index
    %c0_2 = arith.constant 0 : index
    %1 = vector.load %arg2[%c0_1, %c0_2] : memref<144x32xbf16, #tpu.memory_space<vmem>>, vector<144x32xbf16>
    %cst = arith.constant dense<0.000000e+00> : vector<64x32xf32>
    %2 = tpu.matmul %0, %1, %cst {dimension_numbers = #tpu.dot_dimension_numbers<[1], [0], [0], [1], [0, 0, 1, 1], [], []>} : vector<64x144xbf16>, vector<144x32xbf16>, vector<64x32xf32> -> vector<64x32xf32>
    %c0_3 = arith.constant 0 : index
    %c0_4 = arith.constant 0 : index
    %3 = vector.load %arg3[%c0_3, %c0_4] : memref<1x32xf32, #tpu.memory_space<vmem>>, vector<1x32xf32>
    %4 = vector.broadcast %3 : vector<1x32xf32> to vector<64x32xf32>
    %5 = arith.addf %2, %4 : vector<64x32xf32>
    %cst_5 = arith.constant 0.000000e+00 : f32
    %6 = vector.broadcast %cst_5 : f32 to vector<64x32xf32>
    %7 = arith.maximumf %5, %6 : vector<64x32xf32>
    %8 = arith.truncf %7 : vector<64x32xf32> to vector<64x32xbf16>
    %c0_6 = arith.constant 0 : index
    %c0_7 = arith.constant 0 : index
    %9 = vector.load %arg4[%c0_6, %c0_7] : memref<64x32xbf16, #tpu.memory_space<vmem>>, vector<64x32xbf16>
    tpu.vector_store %arg4[%c0_6, %c0_7], %8 {strides = array<i32>} : memref<64x32xbf16, #tpu.memory_space<vmem>>, vector<64x32xbf16>,
    return
  }
  func.func @transform_0(%arg0: i32) -> (i32, i32) {
    %c0_i32 = arith.constant 0 : i32
    %c0_i32_0 = arith.constant 0 : i32
    return %arg0, %c0_i32 : i32, i32
  }
  func.func @transform_1(%arg0: i32) -> (i32, i32) {
    %c0_i32 = arith.constant 0 : i32
    %c0_i32_0 = arith.constant 0 : i32
    %c0_i32_1 = arith.constant 0 : i32
    return %c0_i32, %c0_i32_0 : i32, i32
  }
  func.func @transform_2(%arg0: i32) -> (i32, i32) {
    %c0_i32 = arith.constant 0 : i32
    %c0_i32_0 = arith.constant 0 : i32
    %c0_i32_1 = arith.constant 0 : i32
    return %c0_i32, %c0_i32_0 : i32, i32
  }
  func.func @transform_3(%arg0: i32) -> (i32, i32) {
    %c0_i32 = arith.constant 0 : i32
    %c0_i32_0 = arith.constant 0 : i32
    return %arg0, %c0_i32 : i32, i32
  }
}

module attributes {stable_mosaic.version = 11 : i64} {
  func.func @_l1_partial_kernel(%arg0: i32, %arg1: memref<8x128xbf16, #tpu.memory_space<vmem>>, %arg2: memref<8x128xbf16, #tpu.memory_space<vmem>>, %arg3: memref<1x1xf32, #tpu.memory_space<vmem>>) attributes {dimension_semantics = [#tpu.dimension_semantics<arbitrary>], iteration_bounds = array<i64: 1>, scalar_prefetch = 0 : i64, scratch_operands = 0 : i64, tpu.core_type = #tpu.core_type<tc>, window_params = [{transform_indices = @transform_0, window_bounds = array<i64: 8, 128>}, {transform_indices = @transform_1, window_bounds = array<i64: 8, 128>}, {pipeline_mode = #tpu.pipeline_mode<synchronous>, transform_indices = @transform_2, window_bounds = array<i64: 1, 1>}]} {
    %c0_i32 = arith.constant 0 : i32
    %0 = arith.cmpi eq, %arg0, %c0_i32 : i32
    %1 = arith.extui %0 : i1 to i32
    %c0_i32_0 = arith.constant 0 : i32
    %2 = arith.cmpi ne, %1, %c0_i32_0 : i32
    scf.if %2 {
      %cst_8 = arith.constant 0.000000e+00 : f32
      %17 = vector.broadcast %cst_8 : f32 to vector<1x1xf32>
      %c0_9 = arith.constant 0 : index
      %c0_10 = arith.constant 0 : index
      %18 = vector.load %arg3[%c0_9, %c0_10] : memref<1x1xf32, #tpu.memory_space<vmem>>, vector<1x1xf32>
      tpu.vector_store %arg3[%c0_9, %c0_10], %17 {strides = array<i32>} : memref<1x1xf32, #tpu.memory_space<vmem>>, vector<1x1xf32>,
    } else {
    }
    %c0 = arith.constant 0 : index
    %c0_1 = arith.constant 0 : index
    %3 = vector.load %arg1[%c0, %c0_1] : memref<8x128xbf16, #tpu.memory_space<vmem>>, vector<8x128xbf16>
    %4 = arith.extf %3 : vector<8x128xbf16> to vector<8x128xf32>
    %c0_2 = arith.constant 0 : index
    %c0_3 = arith.constant 0 : index
    %5 = vector.load %arg2[%c0_2, %c0_3] : memref<8x128xbf16, #tpu.memory_space<vmem>>, vector<8x128xbf16>
    %6 = arith.extf %5 : vector<8x128xbf16> to vector<8x128xf32>
    %7 = arith.subf %4, %6 : vector<8x128xf32>
    %c0_4 = arith.constant 0 : index
    %c0_5 = arith.constant 0 : index
    %8 = vector.load %arg3[%c0_4, %c0_5] : memref<1x1xf32, #tpu.memory_space<vmem>>, vector<1x1xf32>
    %9 = math.absf %7 : vector<8x128xf32>
    %10 = vector.shape_cast %9 : vector<8x128xf32> to vector<1x8x128xf32>
    %cst = arith.constant dense<0.000000e+00> : vector<1xf32>
    %11 = vector.multi_reduction <add>, %10, %cst [1, 2] : vector<1x8x128xf32> to vector<1xf32>
    %12 = vector.shape_cast %11 : vector<1xf32> to vector<1x1x1xf32>
    %13 = vector.extract %12[0, 0, 0] : f32 from vector<1x1x1xf32>
    %14 = vector.broadcast %13 : f32 to vector<1x1xf32>
    %15 = arith.addf %8, %14 : vector<1x1xf32>
    %c0_6 = arith.constant 0 : index
    %c0_7 = arith.constant 0 : index
    %16 = vector.load %arg3[%c0_6, %c0_7] : memref<1x1xf32, #tpu.memory_space<vmem>>, vector<1x1xf32>
    tpu.vector_store %arg3[%c0_6, %c0_7], %15 {strides = array<i32>} : memref<1x1xf32, #tpu.memory_space<vmem>>, vector<1x1xf32>,
    return
  }
  func.func @transform_0(%arg0: i32) -> (i32, i32) {
    %c0_i32 = arith.constant 0 : i32
    %c0_i32_0 = arith.constant 0 : i32
    return %arg0, %c0_i32 : i32, i32
  }
  func.func @transform_1(%arg0: i32) -> (i32, i32) {
    %c0_i32 = arith.constant 0 : i32
    %c0_i32_0 = arith.constant 0 : i32
    return %arg0, %c0_i32 : i32, i32
  }
  func.func @transform_2(%arg0: i32) -> (i32, i32) {
    %c0_i32 = arith.constant 0 : i32
    %c0_i32_0 = arith.constant 0 : i32
    %c0_i32_1 = arith.constant 0 : i32
    return %c0_i32, %c0_i32_0 : i32, i32
  }
}

module attributes {stable_mosaic.version = 11 : i64} {
  func.func @_conv_matmul_relu_kernel(%arg0: i32, %arg1: memref<64x288xbf16, #tpu.memory_space<vmem>>, %arg2: memref<288x32xbf16, #tpu.memory_space<vmem>>, %arg3: memref<1x32xf32, #tpu.memory_space<vmem>>, %arg4: memref<64x32xbf16, #tpu.memory_space<vmem>>) attributes {dimension_semantics = [#tpu.dimension_semantics<parallel>], iteration_bounds = array<i64: 1>, scalar_prefetch = 0 : i64, scratch_operands = 0 : i64, tpu.core_type = #tpu.core_type<tc>, window_params = [{transform_indices = @transform_0, window_bounds = array<i64: 64, 288>}, {pipeline_mode = #tpu.pipeline_mode<synchronous>, transform_indices = @transform_1, window_bounds = array<i64: 288, 32>}, {pipeline_mode = #tpu.pipeline_mode<synchronous>, transform_indices = @transform_2, window_bounds = array<i64: 1, 32>}, {transform_indices = @transform_3, window_bounds = array<i64: 64, 32>}]} {
    %c0 = arith.constant 0 : index
    %c0_0 = arith.constant 0 : index
    %0 = vector.load %arg1[%c0, %c0_0] : memref<64x288xbf16, #tpu.memory_space<vmem>>, vector<64x288xbf16>
    %c0_1 = arith.constant 0 : index
    %c0_2 = arith.constant 0 : index
    %1 = vector.load %arg2[%c0_1, %c0_2] : memref<288x32xbf16, #tpu.memory_space<vmem>>, vector<288x32xbf16>
    %cst = arith.constant dense<0.000000e+00> : vector<64x32xf32>
    %2 = tpu.matmul %0, %1, %cst {dimension_numbers = #tpu.dot_dimension_numbers<[1], [0], [0], [1], [0, 0, 1, 1], [], []>} : vector<64x288xbf16>, vector<288x32xbf16>, vector<64x32xf32> -> vector<64x32xf32>
    %c0_3 = arith.constant 0 : index
    %c0_4 = arith.constant 0 : index
    %3 = vector.load %arg3[%c0_3, %c0_4] : memref<1x32xf32, #tpu.memory_space<vmem>>, vector<1x32xf32>
    %4 = vector.broadcast %3 : vector<1x32xf32> to vector<64x32xf32>
    %5 = arith.addf %2, %4 : vector<64x32xf32>
    %cst_5 = arith.constant 0.000000e+00 : f32
    %6 = vector.broadcast %cst_5 : f32 to vector<64x32xf32>
    %7 = arith.maximumf %5, %6 : vector<64x32xf32>
    %8 = arith.truncf %7 : vector<64x32xf32> to vector<64x32xbf16>
    %c0_6 = arith.constant 0 : index
    %c0_7 = arith.constant 0 : index
    %9 = vector.load %arg4[%c0_6, %c0_7] : memref<64x32xbf16, #tpu.memory_space<vmem>>, vector<64x32xbf16>
    tpu.vector_store %arg4[%c0_6, %c0_7], %8 {strides = array<i32>} : memref<64x32xbf16, #tpu.memory_space<vmem>>, vector<64x32xbf16>,
    return
  }
  func.func @transform_0(%arg0: i32) -> (i32, i32) {
    %c0_i32 = arith.constant 0 : i32
    %c0_i32_0 = arith.constant 0 : i32
    return %arg0, %c0_i32 : i32, i32
  }
  func.func @transform_1(%arg0: i32) -> (i32, i32) {
    %c0_i32 = arith.constant 0 : i32
    %c0_i32_0 = arith.constant 0 : i32
    %c0_i32_1 = arith.constant 0 : i32
    return %c0_i32, %c0_i32_0 : i32, i32
  }
  func.func @transform_2(%arg0: i32) -> (i32, i32) {
    %c0_i32 = arith.constant 0 : i32
    %c0_i32_0 = arith.constant 0 : i32
    %c0_i32_1 = arith.constant 0 : i32
    return %c0_i32, %c0_i32_0 : i32, i32
  }
  func.func @transform_3(%arg0: i32) -> (i32, i32) {
    %c0_i32 = arith.constant 0 : i32
    %c0_i32_0 = arith.constant 0 : i32
    return %arg0, %c0_i32 : i32, i32
  }
}

</mosaic_0001>

<llo_original>
// kernel: sketchanet_loss.15
$region0: #{sketchanet_loss.15}
  #allocation0 [shape = 'u32[]', space=smem, size = 0x4, offset = 0x4, fixed_abs, tag = 'smem constant byte address 0x4 - core index']
  #allocation1 [shape = 'u32[144,128]{1,0:T(1,128)}', space=vmem, size = 0x12000, scoped, tag = 'internal scratch']
  %s0 = inlined_call_operand.vmem [shape: bf16[32,128], index: 0, kind: input, shape index: {}]
  %s1 = inlined_call_operand.vmem [shape: bf16[32,128], index: 1, kind: input, shape index: {}]
  %s2 = inlined_call_operand.hbm [shape: f32[1,1], index: 2, kind: output, shape index: {}]
  %s3 = sld [smem:[#allocation0]]
  $region22: #{sketchanet_loss.15} parent=0
    _
  %s5 = ssub.s32 1, %s3
  %s6 = scalar_select 0, %s5, %s3
  $region1: #{sketchanet_loss.15} parent=0
    #allocation2 [shape = 'u8[512]{0}', space=vmem, size = 0x400, scoped, tag = 'output window, operand 0, single buffered']
    #allocation3 [shape = 's32[1]{0}', space=sflag, size = 0x4, scoped, tag = 'scoped memory for sketchanet_loss.15']
    %7 = vsyncpa [#allocation3], 0
    // Predicated region
    $region2: #{sketchanet_loss.15} parent=1 // pred_check
      _
    $region3: #{sketchanet_loss.15} parent=1 // pred_check_branch
      %9 = sbr.rel (0) target = $region5
    $region4: #{sketchanet_loss.15} parent=1 // pred_region
      _
    $region5: #{sketchanet_loss.15} parent=1 // pred_fallthru
      _
    // Predicated region
    $region6: #{sketchanet_loss.15} parent=1 // pred_check
      _
    $region7: #{sketchanet_loss.15} parent=1 // pred_check_branch
      %11 = sbr.rel (0) target = $region9
    $region8: #{sketchanet_loss.15} parent=1 // pred_region
      _
    $region9: #{sketchanet_loss.15} parent=1 // pred_fallthru
      _
    %p12 = scmp.eq.s32.totalorder 0, 0
    // Predicated region
    $region10: #{sketchanet_loss.15} parent=1 // pred_check
      %p13 = pneg %p12
    $region11: #{sketchanet_loss.15} parent=1 // pred_check_branch
      %15 = sbr.rel (%p13) target = $region13
    $region12: #{sketchanet_loss.15} parent=1 // pred_region
      %vm16 = vcmask 0
      %17 = vst.msk [vmem:[#allocation2] sm:$0x1] %vm16, 0.0
    $region13: #{sketchanet_loss.15} parent=1 // pred_fallthru
      _
    %v18 = vld [vmem:[%s0] sm:$0xf]
    %v19 = vld [vmem:[%s0 + $0x4] sm:$0xf]
    %v20 = vld [vmem:[%s0 + $0x8] sm:$0xf]
    %v21 = vld [vmem:[%s0 + $0xc] sm:$0xf]
    %v22 = vunpack.c.l.bf16 %v18
    %v23 = vunpack.c.l.bf16 %v19
    %v24 = vunpack.c.l.bf16 %v20
    %v25 = vunpack.c.l.bf16 %v21
    %v26 = vld [vmem:[%s1] sm:$0xf]
    %v27 = vld [vmem:[%s1 + $0x4] sm:$0xf]
    %v28 = vld [vmem:[%s1 + $0x8] sm:$0xf]
    %v29 = vld [vmem:[%s1 + $0xc] sm:$0xf]
    %v30 = vunpack.c.l.bf16 %v26
    %v31 = vunpack.c.l.bf16 %v27
    %v32 = vunpack.c.l.bf16 %v28
    %v33 = vunpack.c.l.bf16 %v29
    %v34 = vsub.f32 %v22, %v30
    %v35 = vsub.f32 %v23, %v31
    %v36 = vsub.f32 %v24, %v32
    %v37 = vsub.f32 %v25, %v33
    %v38 = vld [vmem:[#allocation2] sm:$0x1]
    %v39 = vand.u32 2147483647, %v34
    %v40 = vand.u32 2147483647, %v35
    %v41 = vand.u32 2147483647, %v36
    %v42 = vand.u32 2147483647, %v37
    %v43 = vadd.f32 %v39, %v40
    %v44 = vadd.f32 %v43, %v41
    %v45 = vadd.f32 %v44, %v42
    %46 = vadd.xlane.f32.xlu0 %v45
    %v47 = vpop.xlane.xlu0 %46
    %v48 = vrot.slane %v47, 4
    %v49 = vadd.f32 %v47, %v48
    %v50 = vrot.slane %v49, 2
    %v51 = vadd.f32 %v49, %v50
    %v52 = vrot.slane %v51, 1
    %v53 = vadd.f32 %v51, %v52
    %s54 = vtos %v53
    %v55 = vstv %s54
    %v56 = vadd.f32 %v38, %v55
    %vm57 = vcmask 0
    %58 = vst.msk [vmem:[#allocation2] sm:$0x1] %vm57, %v56
    // Predicated region
    $region14: #{sketchanet_loss.15} parent=1 // pred_check
      _
    $region15: #{sketchanet_loss.15} parent=1 // pred_check_branch
      %60 = sbr.rel (0) target = $region17
    $region16: #{sketchanet_loss.15} parent=1 // pred_region
      %s62 = ssub.s32 16, 16
      %63 = vsyncadd [#allocation3], %s62
      %s65 = sshll.u32 [#allocation2], 4
      %s66 = int_to_ptr.vmem [resolvable:$true] %s65
      %68 = dma.vmem_to_hbm [thread:$0]  %s66, 16, %s2, [#allocation3]
    $region17: #{sketchanet_loss.15} parent=1 // pred_fallthru
      _
    // Predicated region
    $region18: #{sketchanet_loss.15} parent=1 // pred_check
      _
    $region19: #{sketchanet_loss.15} parent=1 // pred_check_branch
      %70 = sbr.rel (0) target = $region21
    $region20: #{sketchanet_loss.15} parent=1 // pred_region
      %71 = dma.done [#allocation3], 16
    $region21: #{sketchanet_loss.15} parent=1 // pred_fallthru
      _
    %72 = vsyncpa [#allocation3], 1

// kernel: sketchanet_loss.10
$region0: #{sketchanet_loss.10}
  #allocation0 [shape = 'u32[]', space=smem, size = 0x4, offset = 0x4, fixed_abs, tag = 'smem constant byte address 0x4 - core index']
  #allocation1 [shape = 'u32[144,128]{1,0:T(1,128)}', space=vmem, size = 0x12000, scoped, tag = 'internal scratch']
  %s0 = inlined_call_operand.vmem [shape: bf16[1024,16], index: 0, kind: input, shape index: {}]
  %s1 = inlined_call_operand.vmem [shape: bf16[16,8], index: 1, kind: input, shape index: {}]
  %s2 = inlined_call_operand.vmem [shape: f32[1,8], index: 2, kind: input, shape index: {}]
  %s3 = inlined_call_operand.vmem [shape: bf16[1024,8], index: 3, kind: output, shape index: {}]
  %s4 = sld [smem:[#allocation0]]
  $region22: #{sketchanet_loss.10} parent=0
    _
  %s6 = ssub.s32 1, %s4
  %s7 = scalar_select 0, %s6, %s4
  // Predicated region
  $region2: #{sketchanet_loss.10} parent=0 // pred_check
    _
  $region3: #{sketchanet_loss.10} parent=0 // pred_check_branch
    %9 = sbr.rel (0) target = $region5
  $region4: #{sketchanet_loss.10} parent=0 // pred_region
    _
  $region5: #{sketchanet_loss.10} parent=0 // pred_fallthru
    _
  // Predicated region
  $region6: #{sketchanet_loss.10} parent=0 // pred_check
    _
  $region7: #{sketchanet_loss.10} parent=0 // pred_check_branch
    %11 = sbr.rel (0) target = $region9
  $region8: #{sketchanet_loss.10} parent=0 // pred_region
    _
  $region9: #{sketchanet_loss.10} parent=0 // pred_fallthru
    _
  // Predicated region
  $region10: #{sketchanet_loss.10} parent=0 // pred_check
    _
  $region11: #{sketchanet_loss.10} parent=0 // pred_check_branch
    %13 = sbr.rel (0) target = $region13
  $region12: #{sketchanet_loss.10} parent=0 // pred_region
    _
  $region13: #{sketchanet_loss.10} parent=0 // pred_fallthru
    _
  %v15 = vld [vmem:[%s0] sm:$0xf]
  %v16 = vld [vmem:[%s0 + $0x4] sm:$0xf]
  %v17 = vld [vmem:[%s0 + $0x8] sm:$0xf]
  %v18 = vld [vmem:[%s0 + $0xc] sm:$0xf]
  %v19 = vld [vmem:[%s0 + $0x10] sm:$0xf]
  %v20 = vld [vmem:[%s0 + $0x14] sm:$0xf]
  %v21 = vld [vmem:[%s0 + $0x18] sm:$0xf]
  %v22 = vld [vmem:[%s0 + $0x1c] sm:$0xf]
  %v23 = vld [vmem:[%s0 + $0x20] sm:$0xf]
  %v24 = vld [vmem:[%s0 + $0x24] sm:$0xf]
  %v25 = vld [vmem:[%s0 + $0x28] sm:$0xf]
  %v26 = vld [vmem:[%s0 + $0x2c] sm:$0xf]
  %v27 = vld [vmem:[%s0 + $0x30] sm:$0xf]
  %v28 = vld [vmem:[%s0 + $0x34] sm:$0xf]
  %v29 = vld [vmem:[%s0 + $0x38] sm:$0xf]
  %v30 = vld [vmem:[%s0 + $0x3c] sm:$0xf]
  %v31 = vld [vmem:[%s0 + $0x40] sm:$0xf]
  %v32 = vld [vmem:[%s0 + $0x44] sm:$0xf]
  %v33 = vld [vmem:[%s0 + $0x48] sm:$0xf]
  %v34 = vld [vmem:[%s0 + $0x4c] sm:$0xf]
  %v35 = vld [vmem:[%s0 + $0x50] sm:$0xf]
  %v36 = vld [vmem:[%s0 + $0x54] sm:$0xf]
  %v37 = vld [vmem:[%s0 + $0x58] sm:$0xf]
  %v38 = vld [vmem:[%s0 + $0x5c] sm:$0xf]
  %v39 = vld [vmem:[%s0 + $0x60] sm:$0xf]
  %v40 = vld [vmem:[%s0 + $0x64] sm:$0xf]
  %v41 = vld [vmem:[%s0 + $0x68] sm:$0xf]
  %v42 = vld [vmem:[%s0 + $0x6c] sm:$0xf]
  %v43 = vld [vmem:[%s0 + $0x70] sm:$0xf]
  %v44 = vld [vmem:[%s0 + $0x74] sm:$0xf]
  %v45 = vld [vmem:[%s0 + $0x78] sm:$0xf]
  %v46 = vld [vmem:[%s0 + $0x7c] sm:$0xf]
  %v47 = vld [vmem:[%s0 + $0x80] sm:$0xf]
  %v48 = vld [vmem:[%s0 + $0x84] sm:$0xf]
  %v49 = vld [vmem:[%s0 + $0x88] sm:$0xf]
  %v50 = vld [vmem:[%s0 + $0x8c] sm:$0xf]
  %v51 = vld [vmem:[%s0 + $0x90] sm:$0xf]
  %v52 = vld [vmem:[%s0 + $0x94] sm:$0xf]
  %v53 = vld [vmem:[%s0 + $0x98] sm:$0xf]
  %v54 = vld [vmem:[%s0 + $0x9c] sm:$0xf]
  %v55 = vld [vmem:[%s0 + $0xa0] sm:$0xf]
  %v56 = vld [vmem:[%s0 + $0xa4] sm:$0xf]
  %v57 = vld [vmem:[%s0 + $0xa8] sm:$0xf]
  %v58 = vld [vmem:[%s0 + $0xac] sm:$0xf]
  %v59 = vld [vmem:[%s0 + $0xb0] sm:$0xf]
  %v60 = vld [vmem:[%s0 + $0xb4] sm:$0xf]
  %v61 = vld [vmem:[%s0 + $0xb8] sm:$0xf]
  %v62 = vld [vmem:[%s0 + $0xbc] sm:$0xf]
  %v63 = vld [vmem:[%s0 + $0xc0] sm:$0xf]
  %v64 = vld [vmem:[%s0 + $0xc4] sm:$0xf]
  %v65 = vld [vmem:[%s0 + $0xc8] sm:$0xf]
  %v66 = vld [vmem:[%s0 + $0xcc] sm:$0xf]
  %v67 = vld [vmem:[%s0 + $0xd0] sm:$0xf]
  %v68 = vld [vmem:[%s0 + $0xd4] sm:$0xf]
  %v69 = vld [vmem:[%s0 + $0xd8] sm:$0xf]
  %v70 = vld [vmem:[%s0 + $0xdc] sm:$0xf]
  %v71 = vld [vmem:[%s0 + $0xe0] sm:$0xf]
  %v72 = vld [vmem:[%s0 + $0xe4] sm:$0xf]
  %v73 = vld [vmem:[%s0 + $0xe8] sm:$0xf]
  %v74 = vld [vmem:[%s0 + $0xec] sm:$0xf]
  %v75 = vld [vmem:[%s0 + $0xf0] sm:$0xf]
  %v76 = vld [vmem:[%s0 + $0xf4] sm:$0xf]
  %v77 = vld [vmem:[%s0 + $0xf8] sm:$0xf]
  %v78 = vld [vmem:[%s0 + $0xfc] sm:$0xf]
  %v79 = vld [vmem:[%s0 + $0x100] sm:$0xf]
  %v80 = vld [vmem:[%s0 + $0x104] sm:$0xf]
  %v81 = vld [vmem:[%s0 + $0x108] sm:$0xf]
  %v82 = vld [vmem:[%s0 + $0x10c] sm:$0xf]
  %v83 = vld [vmem:[%s0 + $0x110] sm:$0xf]
  %v84 = vld [vmem:[%s0 + $0x114] sm:$0xf]
  %v85 = vld [vmem:[%s0 + $0x118] sm:$0xf]
  %v86 = vld [vmem:[%s0 + $0x11c] sm:$0xf]
  %v87 = vld [vmem:[%s0 + $0x120] sm:$0xf]
  %v88 = vld [vmem:[%s0 + $0x124] sm:$0xf]
  %v89 = vld [vmem:[%s0 + $0x128] sm:$0xf]
  %v90 = vld [vmem:[%s0 + $0x12c] sm:$0xf]
  %v91 = vld [vmem:[%s0 + $0x130] sm:$0xf]
  %v92 = vld [vmem:[%s0 + $0x134] sm:$0xf]
  %v93 = vld [vmem:[%s0 + $0x138] sm:$0xf]
  %v94 = vld [vmem:[%s0 + $0x13c] sm:$0xf]
  %v95 = vld [vmem:[%s0 + $0x140] sm:$0xf]
  %v96 = vld [vmem:[%s0 + $0x144] sm:$0xf]
  %v97 = vld [vmem:[%s0 + $0x148] sm:$0xf]
  %v98 = vld [vmem:[%s0 + $0x14c] sm:$0xf]
  %v99 = vld [vmem:[%s0 + $0x150] sm:$0xf]
  %v100 = vld [vmem:[%s0 + $0x154] sm:$0xf]
  %v101 = vld [vmem:[%s0 + $0x158] sm:$0xf]
  %v102 = vld [vmem:[%s0 + $0x15c] sm:$0xf]
  %v103 = vld [vmem:[%s0 + $0x160] sm:$0xf]
  %v104 = vld [vmem:[%s0 + $0x164] sm:$0xf]
  %v105 = vld [vmem:[%s0 + $0x168] sm:$0xf]
  %v106 = vld [vmem:[%s0 + $0x16c] sm:$0xf]
  %v107 = vld [vmem:[%s0 + $0x170] sm:$0xf]
  %v108 = vld [vmem:[%s0 + $0x174] sm:$0xf]
  %v109 = vld [vmem:[%s0 + $0x178] sm:$0xf]
  %v110 = vld [vmem:[%s0 + $0x17c] sm:$0xf]
  %v111 = vld [vmem:[%s0 + $0x180] sm:$0xf]
  %v112 = vld [vmem:[%s0 + $0x184] sm:$0xf]
  %v113 = vld [vmem:[%s0 + $0x188] sm:$0xf]
  %v114 = vld [vmem:[%s0 + $0x18c] sm:$0xf]
  %v115 = vld [vmem:[%s0 + $0x190] sm:$0xf]
  %v116 = vld [vmem:[%s0 + $0x194] sm:$0xf]
  %v117 = vld [vmem:[%s0 + $0x198] sm:$0xf]
  %v118 = vld [vmem:[%s0 + $0x19c] sm:$0xf]
  %v119 = vld [vmem:[%s0 + $0x1a0] sm:$0xf]
  %v120 = vld [vmem:[%s0 + $0x1a4] sm:$0xf]
  %v121 = vld [vmem:[%s0 + $0x1a8] sm:$0xf]
  %v122 = vld [vmem:[%s0 + $0x1ac] sm:$0xf]
  %v123 = vld [vmem:[%s0 + $0x1b0] sm:$0xf]
  %v124 = vld [vmem:[%s0 + $0x1b4] sm:$0xf]
  %v125 = vld [vmem:[%s0 + $0x1b8] sm:$0xf]
  %v126 = vld [vmem:[%s0 + $0x1bc] sm:$0xf]
  %v127 = vld [vmem:[%s0 + $0x1c0] sm:$0xf]
  %v128 = vld [vmem:[%s0 + $0x1c4] sm:$0xf]
  %v129 = vld [vmem:[%s0 + $0x1c8] sm:$0xf]
  %v130 = vld [vmem:[%s0 + $0x1cc] sm:$0xf]
  %v131 = vld [vmem:[%s0 + $0x1d0] sm:$0xf]
  %v132 = vld [vmem:[%s0 + $0x1d4] sm:$0xf]
  %v133 = vld [vmem:[%s0 + $0x1d8] sm:$0xf]
  %v134 = vld [vmem:[%s0 + $0x1dc] sm:$0xf]
  %v135 = vld [vmem:[%s0 + $0x1e0] sm:$0xf]
  %v136 = vld [vmem:[%s0 + $0x1e4] sm:$0xf]
  %v137 = vld [vmem:[%s0 + $0x1e8] sm:$0xf]
  %v138 = vld [vmem:[%s0 + $0x1ec] sm:$0xf]
  %v139 = vld [vmem:[%s0 + $0x1f0] sm:$0xf]
  %v140 = vld [vmem:[%s0 + $0x1f4] sm:$0xf]
  %v141 = vld [vmem:[%s0 + $0x1f8] sm:$0xf]
  %v142 = vld [vmem:[%s0 + $0x1fc] sm:$0xf]
  %v143 = vld [vmem:[%s1] sm:$0xf]
  %v144 = vld [vmem:[%s1 + $0x4] sm:$0xf]
  %v145 = vld [vmem:[%s2] sm:$0x1]
  %v147 = vlaneseq
  %v148 = vshrl.u32 %v147, 7
  %v149 = vsub.s32 0, %v148
  %v150 = vrot.slane %v145, %v149
  %v280 = vunpack.c.l.b16 %v15
  %v281 = vunpack.c.l.b16 %v16
  %v282 = vunpack.c.l.b16 %v17
  %v283 = vunpack.c.l.b16 %v18
  %v284 = vunpack.c.l.b16 %v19
  %v285 = vunpack.c.l.b16 %v20
  %v286 = vunpack.c.l.b16 %v21
  %v287 = vunpack.c.l.b16 %v22
  %v288 = vunpack.c.l.b16 %v23
  %v289 = vunpack.c.l.b16 %v24
  %v290 = vunpack.c.l.b16 %v25
  %v291 = vunpack.c.l.b16 %v26
  %v292 = vunpack.c.l.b16 %v27
  %v293 = vunpack.c.l.b16 %v28
  %v294 = vunpack.c.l.b16 %v29
  %v295 = vunpack.c.l.b16 %v30
  %v296 = vunpack.c.l.b16 %v31
  %v297 = vunpack.c.l.b16 %v32
  %v298 = vunpack.c.l.b16 %v33
  %v299 = vunpack.c.l.b16 %v34
  %v300 = vunpack.c.l.b16 %v35
  %v301 = vunpack.c.l.b16 %v36
  %v302 = vunpack.c.l.b16 %v37
  %v303 = vunpack.c.l.b16 %v38
  %v304 = vunpack.c.l.b16 %v39
  %v305 = vunpack.c.l.b16 %v40
  %v306 = vunpack.c.l.b16 %v41
  %v307 = vunpack.c.l.b16 %v42
  %v308 = vunpack.c.l.b16 %v43
  %v309 = vunpack.c.l.b16 %v44
  %v310 = vunpack.c.l.b16 %v45
  %v311 = vunpack.c.l.b16 %v46
  %v312 = vunpack.c.l.b16 %v47
  %v313 = vunpack.c.l.b16 %v48
  %v314 = vunpack.c.l.b16 %v49
  %v315 = vunpack.c.l.b16 %v50
  %v316 = vunpack.c.l.b16 %v51
  %v317 = vunpack.c.l.b16 %v52
  %v318 = vunpack.c.l.b16 %v53
  %v319 = vunpack.c.l.b16 %v54
  %v320 = vunpack.c.l.b16 %v55
  %v321 = vunpack.c.l.b16 %v56
  %v322 = vunpack.c.l.b16 %v57
  %v323 = vunpack.c.l.b16 %v58
  %v324 = vunpack.c.l.b16 %v59
  %v325 = vunpack.c.l.b16 %v60
  %v326 = vunpack.c.l.b16 %v61
  %v327 = vunpack.c.l.b16 %v62
  %v328 = vunpack.c.l.b16 %v63
  %v329 = vunpack.c.l.b16 %v64
  %v330 = vunpack.c.l.b16 %v65
  %v331 = vunpack.c.l.b16 %v66
  %v332 = vunpack.c.l.b16 %v67
  %v333 = vunpack.c.l.b16 %v68
  %v334 = vunpack.c.l.b16 %v69
  %v335 = vunpack.c.l.b16 %v70
  %v336 = vunpack.c.l.b16 %v71
  %v337 = vunpack.c.l.b16 %v72
  %v338 = vunpack.c.l.b16 %v73
  %v339 = vunpack.c.l.b16 %v74
  %v340 = vunpack.c.l.b16 %v75
  %v341 = vunpack.c.l.b16 %v76
  %v342 = vunpack.c.l.b16 %v77
  %v343 = vunpack.c.l.b16 %v78
  %v344 = vunpack.c.l.b16 %v79
  %v345 = vunpack.c.l.b16 %v80
  %v346 = vunpack.c.l.b16 %v81
  %v347 = vunpack.c.l.b16 %v82
  %v348 = vunpack.c.l.b16 %v83
  %v349 = vunpack.c.l.b16 %v84
  %v350 = vunpack.c.l.b16 %v85
  %v351 = vunpack.c.l.b16 %v86
  %v352 = vunpack.c.l.b16 %v87
  %v353 = vunpack.c.l.b16 %v88
  %v354 = vunpack.c.l.b16 %v89
  %v355 = vunpack.c.l.b16 %v90
  %v356 = vunpack.c.l.b16 %v91
  %v357 = vunpack.c.l.b16 %v92
  %v358 = vunpack.c.l.b16 %v93
  %v359 = vunpack.c.l.b16 %v94
  %v360 = vunpack.c.l.b16 %v95
  %v361 = vunpack.c.l.b16 %v96
  %v362 = vunpack.c.l.b16 %v97
  %v363 = vunpack.c.l.b16 %v98
  %v364 = vunpack.c.l.b16 %v99
  %v365 = vunpack.c.l.b16 %v100
  %v366 = vunpack.c.l.b16 %v101
  %v367 = vunpack.c.l.b16 %v102
  %v368 = vunpack.c.l.b16 %v103
  %v369 = vunpack.c.l.b16 %v104
  %v370 = vunpack.c.l.b16 %v105
  %v371 = vunpack.c.l.b16 %v106
  %v372 = vunpack.c.l.b16 %v107
  %v373 = vunpack.c.l.b16 %v108
  %v374 = vunpack.c.l.b16 %v109
  %v375 = vunpack.c.l.b16 %v110
  %v376 = vunpack.c.l.b16 %v111
  %v377 = vunpack.c.l.b16 %v112
  %v378 = vunpack.c.l.b16 %v113
  %v379 = vunpack.c.l.b16 %v114
  %v380 = vunpack.c.l.b16 %v115
  %v381 = vunpack.c.l.b16 %v116
  %v382 = vunpack.c.l.b16 %v117
  %v383 = vunpack.c.l.b16 %v118
  %v384 = vunpack.c.l.b16 %v119
  %v385 = vunpack.c.l.b16 %v120
  %v386 = vunpack.c.l.b16 %v121
  %v387 = vunpack.c.l.b16 %v122
  %v388 = vunpack.c.l.b16 %v123
  %v389 = vunpack.c.l.b16 %v124
  %v390 = vunpack.c.l.b16 %v125
  %v391 = vunpack.c.l.b16 %v126
  %v392 = vunpack.c.l.b16 %v127
  %v393 = vunpack.c.l.b16 %v128
  %v394 = vunpack.c.l.b16 %v129
  %v395 = vunpack.c.l.b16 %v130
  %v396 = vunpack.c.l.b16 %v131
  %v397 = vunpack.c.l.b16 %v132
  %v398 = vunpack.c.l.b16 %v133
  %v399 = vunpack.c.l.b16 %v134
  %v400 = vunpack.c.l.b16 %v135
  %v401 = vunpack.c.l.b16 %v136
  %v402 = vunpack.c.l.b16 %v137
  %v403 = vunpack.c.l.b16 %v138
  %v404 = vunpack.c.l.b16 %v139
  %v405 = vunpack.c.l.b16 %v140
  %v406 = vunpack.c.l.b16 %v141
  %v407 = vunpack.c.l.b16 %v142
  %v408 = vpack.c.b16 %v281, %v280
  %v409 = vpack.c.b16 %v283, %v282
  %v410 = vpack.c.b16 %v285, %v284
  %v411 = vpack.c.b16 %v287, %v286
  %v412 = vpack.c.b16 %v289, %v288
  %v413 = vpack.c.b16 %v291, %v290
  %v414 = vpack.c.b16 %v293, %v292
  %v415 = vpack.c.b16 %v295, %v294
  %v416 = vpack.c.b16 %v297, %v296
  %v417 = vpack.c.b16 %v299, %v298
  %v418 = vpack.c.b16 %v301, %v300
  %v419 = vpack.c.b16 %v303, %v302
  %v420 = vpack.c.b16 %v305, %v304
  %v421 = vpack.c.b16 %v307, %v306
  %v422 = vpack.c.b16 %v309, %v308
  %v423 = vpack.c.b16 %v311, %v310
  %v424 = vpack.c.b16 %v313, %v312
  %v425 = vpack.c.b16 %v315, %v314
  %v426 = vpack.c.b16 %v317, %v316
  %v427 = vpack.c.b16 %v319, %v318
  %v428 = vpack.c.b16 %v321, %v320
  %v429 = vpack.c.b16 %v323, %v322
  %v430 = vpack.c.b16 %v325, %v324
  %v431 = vpack.c.b16 %v327, %v326
  %v432 = vpack.c.b16 %v329, %v328
  %v433 = vpack.c.b16 %v331, %v330
  %v434 = vpack.c.b16 %v333, %v332
  %v435 = vpack.c.b16 %v335, %v334
  %v436 = vpack.c.b16 %v337, %v336
  %v437 = vpack.c.b16 %v339, %v338
  %v438 = vpack.c.b16 %v341, %v340
  %v439 = vpack.c.b16 %v343, %v342
  %v440 = vpack.c.b16 %v345, %v344
  %v441 = vpack.c.b16 %v347, %v346
  %v442 = vpack.c.b16 %v349, %v348
  %v443 = vpack.c.b16 %v351, %v350
  %v444 = vpack.c.b16 %v353, %v352
  %v445 = vpack.c.b16 %v355, %v354
  %v446 = vpack.c.b16 %v357, %v356
  %v447 = vpack.c.b16 %v359, %v358
  %v448 = vpack.c.b16 %v361, %v360
  %v449 = vpack.c.b16 %v363, %v362
  %v450 = vpack.c.b16 %v365, %v364
  %v451 = vpack.c.b16 %v367, %v366
  %v452 = vpack.c.b16 %v369, %v368
  %v453 = vpack.c.b16 %v371, %v370
  %v454 = vpack.c.b16 %v373, %v372
  %v455 = vpack.c.b16 %v375, %v374
  %v456 = vpack.c.b16 %v377, %v376
  %v457 = vpack.c.b16 %v379, %v378
  %v458 = vpack.c.b16 %v381, %v380
  %v459 = vpack.c.b16 %v383, %v382
  %v460 = vpack.c.b16 %v385, %v384
  %v461 = vpack.c.b16 %v387, %v386
  %v462 = vpack.c.b16 %v389, %v388
  %v463 = vpack.c.b16 %v391, %v390
  %v464 = vpack.c.b16 %v393, %v392
  %v465 = vpack.c.b16 %v395, %v394
  %v466 = vpack.c.b16 %v397, %v396
  %v467 = vpack.c.b16 %v399, %v398
  %v468 = vpack.c.b16 %v401, %v400
  %v469 = vpack.c.b16 %v403, %v402
  %v470 = vpack.c.b16 %v405, %v404
  %v471 = vpack.c.b16 %v407, %v406
  %v474 = vunpack.c.l.b16 %v143
  %v475 = vunpack.c.l.b16 %v144
  %v476 = vpack.c.b16 %v475, %v474
  %vm478 = vcmask 130048
  %v480 = vsel %vm478, %v408, 0
  %v483 = vsel %vm478, %v409, 0
  %v486 = vsel %vm478, %v410, 0
  %v489 = vsel %vm478, %v411, 0
  %v492 = vsel %vm478, %v412, 0
  %v495 = vsel %vm478, %v413, 0
  %v498 = vsel %vm478, %v414, 0
  %v501 = vsel %vm478, %v415, 0
  %v504 = vsel %vm478, %v416, 0
  %v507 = vsel %vm478, %v417, 0
  %v510 = vsel %vm478, %v418, 0
  %v513 = vsel %vm478, %v419, 0
  %v516 = vsel %vm478, %v420, 0
  %v519 = vsel %vm478, %v421, 0
  %v522 = vsel %vm478, %v422, 0
  %v525 = vsel %vm478, %v423, 0
  %v528 = vsel %vm478, %v424, 0
  %v531 = vsel %vm478, %v425, 0
  %v534 = vsel %vm478, %v426, 0
  %v537 = vsel %vm478, %v427, 0
  %v540 = vsel %vm478, %v428, 0
  %v543 = vsel %vm478, %v429, 0
  %v546 = vsel %vm478, %v430, 0
  %v549 = vsel %vm478, %v431, 0
  %v552 = vsel %vm478, %v432, 0
  %v555 = vsel %vm478, %v433, 0
  %v558 = vsel %vm478, %v434, 0
  %v561 = vsel %vm478, %v435, 0
  %v564 = vsel %vm478, %v436, 0
  %v567 = vsel %vm478, %v437, 0
  %v570 = vsel %vm478, %v438, 0
  %v573 = vsel %vm478, %v439, 0
  %v576 = vsel %vm478, %v440, 0
  %v579 = vsel %vm478, %v441, 0
  %v582 = vsel %vm478, %v442, 0
  %v585 = vsel %vm478, %v443, 0
  %v588 = vsel %vm478, %v444, 0
  %v591 = vsel %vm478, %v445, 0
  %v594 = vsel %vm478, %v446, 0
  %v597 = vsel %vm478, %v447, 0
  %v600 = vsel %vm478, %v448, 0
  %v603 = vsel %vm478, %v449, 0
  %v606 = vsel %vm478, %v450, 0
  %v609 = vsel %vm478, %v451, 0
  %v612 = vsel %vm478, %v452, 0
  %v615 = vsel %vm478, %v453, 0
  %v618 = vsel %vm478, %v454, 0
  %v621 = vsel %vm478, %v455, 0
  %v624 = vsel %vm478, %v456, 0
  %v627 = vsel %vm478, %v457, 0
  %v630 = vsel %vm478, %v458, 0
  %v633 = vsel %vm478, %v459, 0
  %v636 = vsel %vm478, %v460, 0
  %v639 = vsel %vm478, %v461, 0
  %v642 = vsel %vm478, %v462, 0
  %v645 = vsel %vm478, %v463, 0
  %v648 = vsel %vm478, %v464, 0
  %v651 = vsel %vm478, %v465, 0
  %v654 = vsel %vm478, %v466, 0
  %v657 = vsel %vm478, %v467, 0
  %v660 = vsel %vm478, %v468, 0
  %v663 = vsel %vm478, %v469, 0
  %v666 = vsel %vm478, %v470, 0
  %v669 = vsel %vm478, %v471, 0
  %671 = vmatprep.subr.bf16.mxu0 0
  %672 = vmatpush1.bf16.msra.mxu0 %v476
  %673 = vmatprep.subr.bf16.mxu0 0
  %674 = vmatpush1.bf16.msra.mxu0 0
  %675 = vmatprep.subr.bf16.mxu0 0
  %676 = vmatpush1.bf16.msra.mxu0 0
  %677 = vmatprep.subr.bf16.mxu0 0
  %678 = vmatpush1.bf16.msra.mxu0 0
  %679 = vmatprep.subr.bf16.mxu0 0
  %680 = vmatpush1.bf16.msra.mxu0 0
  %681 = vmatprep.subr.bf16.mxu0 0
  %682 = vmatpush1.bf16.msra.mxu0 0
  %683 = vmatprep.subr.bf16.mxu0 0
  %684 = vmatpush1.bf16.msra.mxu0 0
  %685 = vmatprep.subr.bf16.mxu0 0
  %686 = vmatpush1.bf16.msra.mxu0 0
  %687 = vmatprep.subr.bf16.mxu0 0
  %688 = vmatpush1.bf16.msra.mxu0 0
  %689 = vmatprep.subr.bf16.mxu0 0
  %690 = vmatpush1.bf16.msra.mxu0 0
  %691 = vmatprep.subr.bf16.mxu0 0
  %692 = vmatpush1.bf16.msra.mxu0 0
  %693 = vmatprep.subr.bf16.mxu0 0
  %694 = vmatpush1.bf16.msra.mxu0 0
  %695 = vmatprep.subr.bf16.mxu0 0
  %696 = vmatpush1.bf16.msra.mxu0 0
  %697 = vmatprep.subr.bf16.mxu0 0
  %698 = vmatpush1.bf16.msra.mxu0 0
  %699 = vmatprep.subr.bf16.mxu0 0
  %700 = vmatpush1.bf16.msra.mxu0 0
  %701 = vmatprep.subr.bf16.mxu0 0
  %702 = vmatpush1.bf16.msra.mxu0 0
  %703 = vmatprep.mubr.bf16.mxu0 0
  %704 = vmatmul.mubr.bf16.gmra.mrb[0].mxu0 %v480
  %v705 = vpop.f32.mrb[0].mxu0
  %v706 = vadd.f32 %v150, %v705
  %v707 = vpop.f32.mrb[0].mxu0
  %v708 = vpop.f32.mrb[0].mxu0
  %v709 = vadd.f32 %v150, %v708
  %v710 = vpop.f32.mrb[0].mxu0
  %711 = vmatprep.mubr.bf16.mxu0 0
  %712 = vmatmul.mubr.bf16.gmra.mrb[0].mxu0 %v483
  %v713 = vpop.f32.mrb[0].mxu0
  %v714 = vadd.f32 %v150, %v713
  %v715 = vpop.f32.mrb[0].mxu0
  %v716 = vpop.f32.mrb[0].mxu0
  %v717 = vadd.f32 %v150, %v716
  %v718 = vpop.f32.mrb[0].mxu0
  %719 = vmatprep.mubr.bf16.mxu0 0
  %720 = vmatmul.mubr.bf16.gmra.mrb[0].mxu0 %v486
  %v721 = vpop.f32.mrb[0].mxu0
  %v722 = vadd.f32 %v150, %v721
  %v723 = vpop.f32.mrb[0].mxu0
  %v724 = vpop.f32.mrb[0].mxu0
  %v725 = vadd.f32 %v150, %v724
  %v726 = vpop.f32.mrb[0].mxu0
  %727 = vmatprep.mubr.bf16.mxu0 0
  %728 = vmatmul.mubr.bf16.gmra.mrb[0].mxu0 %v489
  %v729 = vpop.f32.mrb[0].mxu0
  %v730 = vadd.f32 %v150, %v729
  %v731 = vpop.f32.mrb[0].mxu0
  %v732 = vpop.f32.mrb[0].mxu0
  %v733 = vadd.f32 %v150, %v732
  %v734 = vpop.f32.mrb[0].mxu0
  %735 = vmatprep.mubr.bf16.mxu0 0
  %736 = vmatmul.mubr.bf16.gmra.mrb[0].mxu0 %v492
  %v737 = vpop.f32.mrb[0].mxu0
  %v738 = vadd.f32 %v150, %v737
  %v739 = vpop.f32.mrb[0].mxu0
  %v740 = vpop.f32.mrb[0].mxu0
  %v741 = vadd.f32 %v150, %v740
  %v742 = vpop.f32.mrb[0].mxu0
  %743 = vmatprep.mubr.bf16.mxu0 0
  %744 = vmatmul.mubr.bf16.gmra.mrb[0].mxu0 %v495
  %v745 = vpop.f32.mrb[0].mxu0
  %v746 = vadd.f32 %v150, %v745
  %v747 = vpop.f32.mrb[0].mxu0
  %v748 = vpop.f32.mrb[0].mxu0
  %v749 = vadd.f32 %v150, %v748
  %v750 = vpop.f32.mrb[0].mxu0
  %751 = vmatprep.mubr.bf16.mxu0 0
  %752 = vmatmul.mubr.bf16.gmra.mrb[0].mxu0 %v498
  %v753 = vpop.f32.mrb[0].mxu0
  %v754 = vadd.f32 %v150, %v753
  %v755 = vpop.f32.mrb[0].mxu0
  %v756 = vpop.f32.mrb[0].mxu0
  %v757 = vadd.f32 %v150, %v756
  %v758 = vpop.f32.mrb[0].mxu0
  %759 = vmatprep.mubr.bf16.mxu0 0
  %760 = vmatmul.mubr.bf16.gmra.mrb[0].mxu0 %v501
  %v761 = vpop.f32.mrb[0].mxu0
  %v762 = vadd.f32 %v150, %v761
  %v763 = vpop.f32.mrb[0].mxu0
  %v764 = vpop.f32.mrb[0].mxu0
  %v765 = vadd.f32 %v150, %v764
  %v766 = vpop.f32.mrb[0].mxu0
  %767 = vmatprep.mubr.bf16.mxu0 0
  %768 = vmatmul.mubr.bf16.gmra.mrb[0].mxu0 %v504
  %v769 = vpop.f32.mrb[0].mxu0
  %v770 = vadd.f32 %v150, %v769
  %v771 = vpop.f32.mrb[0].mxu0
  %v772 = vpop.f32.mrb[0].mxu0
  %v773 = vadd.f32 %v150, %v772
  %v774 = vpop.f32.mrb[0].mxu0
  %775 = vmatprep.mubr.bf16.mxu0 0
  %776 = vmatmul.mubr.bf16.gmra.mrb[0].mxu0 %v507
  %v777 = vpop.f32.mrb[0].mxu0
  %v778 = vadd.f32 %v150, %v777
  %v779 = vpop.f32.mrb[0].mxu0
  %v780 = vpop.f32.mrb[0].mxu0
  %v781 = vadd.f32 %v150, %v780
  %v782 = vpop.f32.mrb[0].mxu0
  %783 = vmatprep.mubr.bf16.mxu0 0
  %784 = vmatmul.mubr.bf16.gmra.mrb[0].mxu0 %v510
  %v785 = vpop.f32.mrb[0].mxu0
  %v786 = vadd.f32 %v150, %v785
  %v787 = vpop.f32.mrb[0].mxu0
  %v788 = vpop.f32.mrb[0].mxu0
  %v789 = vadd.f32 %v150, %v788
  %v790 = vpop.f32.mrb[0].mxu0
  %791 = vmatprep.mubr.bf16.mxu0 0
  %792 = vmatmul.mubr.bf16.gmra.mrb[0].mxu0 %v513
  %v793 = vpop.f32.mrb[0].mxu0
  %v794 = vadd.f32 %v150, %v793
  %v795 = vpop.f32.mrb[0].mxu0
  %v796 = vpop.f32.mrb[0].mxu0
  %v797 = vadd.f32 %v150, %v796
  %v798 = vpop.f32.mrb[0].mxu0
  %799 = vmatprep.mubr.bf16.mxu0 0
  %800 = vmatmul.mubr.bf16.gmra.mrb[0].mxu0 %v516
  %v801 = vpop.f32.mrb[0].mxu0
  %v802 = vadd.f32 %v150, %v801
  %v803 = vpop.f32.mrb[0].mxu0
  %v804 = vpop.f32.mrb[0].mxu0
  %v805 = vadd.f32 %v150, %v804
  %v806 = vpop.f32.mrb[0].mxu0
  %807 = vmatprep.mubr.bf16.mxu0 0
  %808 = vmatmul.mubr.bf16.gmra.mrb[0].mxu0 %v519
  %v809 = vpop.f32.mrb[0].mxu0
  %v810 = vadd.f32 %v150, %v809
  %v811 = vpop.f32.mrb[0].mxu0
  %v812 = vpop.f32.mrb[0].mxu0
  %v813 = vadd.f32 %v150, %v812
  %v814 = vpop.f32.mrb[0].mxu0
  %815 = vmatprep.mubr.bf16.mxu0 0
  %816 = vmatmul.mubr.bf16.gmra.mrb[0].mxu0 %v522
  %v817 = vpop.f32.mrb[0].mxu0
  %v818 = vadd.f32 %v150, %v817
  %v819 = vpop.f32.mrb[0].mxu0
  %v820 = vpop.f32.mrb[0].mxu0
  %v821 = vadd.f32 %v150, %v820
  %v822 = vpop.f32.mrb[0].mxu0
  %823 = vmatprep.mubr.bf16.mxu0 0
  %824 = vmatmul.mubr.bf16.gmra.mrb[0].mxu0 %v525
  %v825 = vpop.f32.mrb[0].mxu0
  %v826 = vadd.f32 %v150, %v825
  %v827 = vpop.f32.mrb[0].mxu0
  %v828 = vpop.f32.mrb[0].mxu0
  %v829 = vadd.f32 %v150, %v828
  %v830 = vpop.f32.mrb[0].mxu0
  %831 = vmatprep.mubr.bf16.mxu0 0
  %832 = vmatmul.mubr.bf16.gmra.mrb[0].mxu0 %v528
  %v833 = vpop.f32.mrb[0].mxu0
  %v834 = vadd.f32 %v150, %v833
  %v835 = vpop.f32.mrb[0].mxu0
  %v836 = vpop.f32.mrb[0].mxu0
  %v837 = vadd.f32 %v150, %v836
  %v838 = vpop.f32.mrb[0].mxu0
  %839 = vmatprep.mubr.bf16.mxu0 0
  %840 = vmatmul.mubr.bf16.gmra.mrb[0].mxu0 %v531
  %v841 = vpop.f32.mrb[0].mxu0
  %v842 = vadd.f32 %v150, %v841
  %v843 = vpop.f32.mrb[0].mxu0
  %v844 = vpop.f32.mrb[0].mxu0
  %v845 = vadd.f32 %v150, %v844
  %v846 = vpop.f32.mrb[0].mxu0
  %847 = vmatprep.mubr.bf16.mxu0 0
  %848 = vmatmul.mubr.bf16.gmra.mrb[0].mxu0 %v534
  %v849 = vpop.f32.mrb[0].mxu0
  %v850 = vadd.f32 %v150, %v849
  %v851 = vpop.f32.mrb[0].mxu0
  %v852 = vpop.f32.mrb[0].mxu0
  %v853 = vadd.f32 %v150, %v852
  %v854 = vpop.f32.mrb[0].mxu0
  %855 = vmatprep.mubr.bf16.mxu0 0
  %856 = vmatmul.mubr.bf16.gmra.mrb[0].mxu0 %v537
  %v857 = vpop.f32.mrb[0].mxu0
  %v858 = vadd.f32 %v150, %v857
  %v859 = vpop.f32.mrb[0].mxu0
  %v860 = vpop.f32.mrb[0].mxu0
  %v861 = vadd.f32 %v150, %v860
  %v862 = vpop.f32.mrb[0].mxu0
  %863 = vmatprep.mubr.bf16.mxu0 0
  %864 = vmatmul.mubr.bf16.gmra.mrb[0].mxu0 %v540
  %v865 = vpop.f32.mrb[0].mxu0
  %v866 = vadd.f32 %v150, %v865
  %v867 = vpop.f32.mrb[0].mxu0
  %v868 = vpop.f32.mrb[0].mxu0
  %v869 = vadd.f32 %v150, %v868
  %v870 = vpop.f32.mrb[0].mxu0
  %871 = vmatprep.mubr.bf16.mxu0 0
  %872 = vmatmul.mubr.bf16.gmra.mrb[0].mxu0 %v543
  %v873 = vpop.f32.mrb[0].mxu0
  %v874 = vadd.f32 %v150, %v873
  %v875 = vpop.f32.mrb[0].mxu0
  %v876 = vpop.f32.mrb[0].mxu0
  %v877 = vadd.f32 %v150, %v876
  %v878 = vpop.f32.mrb[0].mxu0
  %879 = vmatprep.mubr.bf16.mxu0 0
  %880 = vmatmul.mubr.bf16.gmra.mrb[0].mxu0 %v546
  %v881 = vpop.f32.mrb[0].mxu0
  %v882 = vadd.f32 %v150, %v881
  %v883 = vpop.f32.mrb[0].mxu0
  %v884 = vpop.f32.mrb[0].mxu0
  %v885 = vadd.f32 %v150, %v884
  %v886 = vpop.f32.mrb[0].mxu0
  %887 = vmatprep.mubr.bf16.mxu0 0
  %888 = vmatmul.mubr.bf16.gmra.mrb[0].mxu0 %v549
  %v889 = vpop.f32.mrb[0].mxu0
  %v890 = vadd.f32 %v150, %v889
  %v891 = vpop.f32.mrb[0].mxu0
  %v892 = vpop.f32.mrb[0].mxu0
  %v893 = vadd.f32 %v150, %v892
  %v894 = vpop.f32.mrb[0].mxu0
  %895 = vmatprep.mubr.bf16.mxu0 0
  %896 = vmatmul.mubr.bf16.gmra.mrb[0].mxu0 %v552
  %v897 = vpop.f32.mrb[0].mxu0
  %v898 = vadd.f32 %v150, %v897
  %v899 = vpop.f32.mrb[0].mxu0
  %v900 = vpop.f32.mrb[0].mxu0
  %v901 = vadd.f32 %v150, %v900
  %v902 = vpop.f32.mrb[0].mxu0
  %903 = vmatprep.mubr.bf16.mxu0 0
  %904 = vmatmul.mubr.bf16.gmra.mrb[0].mxu0 %v555
  %v905 = vpop.f32.mrb[0].mxu0
  %v906 = vadd.f32 %v150, %v905
  %v907 = vpop.f32.mrb[0].mxu0
  %v908 = vpop.f32.mrb[0].mxu0
  %v909 = vadd.f32 %v150, %v908
  %v910 = vpop.f32.mrb[0].mxu0
  %911 = vmatprep.mubr.bf16.mxu0 0
  %912 = vmatmul.mubr.bf16.gmra.mrb[0].mxu0 %v558
  %v913 = vpop.f32.mrb[0].mxu0
  %v914 = vadd.f32 %v150, %v913
  %v915 = vpop.f32.mrb[0].mxu0
  %v916 = vpop.f32.mrb[0].mxu0
  %v917 = vadd.f32 %v150, %v916
  %v918 = vpop.f32.mrb[0].mxu0
  %919 = vmatprep.mubr.bf16.mxu0 0
  %920 = vmatmul.mubr.bf16.gmra.mrb[0].mxu0 %v561
  %v921 = vpop.f32.mrb[0].mxu0
  %v922 = vadd.f32 %v150, %v921
  %v923 = vpop.f32.mrb[0].mxu0
  %v924 = vpop.f32.mrb[0].mxu0
  %v925 = vadd.f32 %v150, %v924
  %v926 = vpop.f32.mrb[0].mxu0
  %927 = vmatprep.mubr.bf16.mxu0 0
  %928 = vmatmul.mubr.bf16.gmra.mrb[0].mxu0 %v564
  %v929 = vpop.f32.mrb[0].mxu0
  %v930 = vadd.f32 %v150, %v929
  %v931 = vpop.f32.mrb[0].mxu0
  %v932 = vpop.f32.mrb[0].mxu0
  %v933 = vadd.f32 %v150, %v932
  %v934 = vpop.f32.mrb[0].mxu0
  %935 = vmatprep.mubr.bf16.mxu0 0
  %936 = vmatmul.mubr.bf16.gmra.mrb[0].mxu0 %v567
  %v937 = vpop.f32.mrb[0].mxu0
  %v938 = vadd.f32 %v150, %v937
  %v939 = vpop.f32.mrb[0].mxu0
  %v940 = vpop.f32.mrb[0].mxu0
  %v941 = vadd.f32 %v150, %v940
  %v942 = vpop.f32.mrb[0].mxu0
  %943 = vmatprep.mubr.bf16.mxu0 0
  %944 = vmatmul.mubr.bf16.gmra.mrb[0].mxu0 %v570
  %v945 = vpop.f32.mrb[0].mxu0
  %v946 = vadd.f32 %v150, %v945
  %v947 = vpop.f32.mrb[0].mxu0
  %v948 = vpop.f32.mrb[0].mxu0
  %v949 = vadd.f32 %v150, %v948
  %v950 = vpop.f32.mrb[0].mxu0
  %951 = vmatprep.mubr.bf16.mxu0 0
  %952 = vmatmul.mubr.bf16.gmra.mrb[0].mxu0 %v573
  %v953 = vpop.f32.mrb[0].mxu0
  %v954 = vadd.f32 %v150, %v953
  %v955 = vpop.f32.mrb[0].mxu0
  %v956 = vpop.f32.mrb[0].mxu0
  %v957 = vadd.f32 %v150, %v956
  %v958 = vpop.f32.mrb[0].mxu0
  %959 = vmatprep.mubr.bf16.mxu0 0
  %960 = vmatmul.mubr.bf16.gmra.mrb[0].mxu0 %v576
  %v961 = vpop.f32.mrb[0].mxu0
  %v962 = vadd.f32 %v150, %v961
  %v963 = vpop.f32.mrb[0].mxu0
  %v964 = vpop.f32.mrb[0].mxu0
  %v965 = vadd.f32 %v150, %v964
  %v966 = vpop.f32.mrb[0].mxu0
  %967 = vmatprep.mubr.bf16.mxu0 0
  %968 = vmatmul.mubr.bf16.gmra.mrb[0].mxu0 %v579
  %v969 = vpop.f32.mrb[0].mxu0
  %v970 = vadd.f32 %v150, %v969
  %v971 = vpop.f32.mrb[0].mxu0
  %v972 = vpop.f32.mrb[0].mxu0
  %v973 = vadd.f32 %v150, %v972
  %v974 = vpop.f32.mrb[0].mxu0
  %975 = vmatprep.mubr.bf16.mxu0 0
  %976 = vmatmul.mubr.bf16.gmra.mrb[0].mxu0 %v582
  %v977 = vpop.f32.mrb[0].mxu0
  %v978 = vadd.f32 %v150, %v977
  %v979 = vpop.f32.mrb[0].mxu0
  %v980 = vpop.f32.mrb[0].mxu0
  %v981 = vadd.f32 %v150, %v980
  %v982 = vpop.f32.mrb[0].mxu0
  %983 = vmatprep.mubr.bf16.mxu0 0
  %984 = vmatmul.mubr.bf16.gmra.mrb[0].mxu0 %v585
  %v985 = vpop.f32.mrb[0].mxu0
  %v986 = vadd.f32 %v150, %v985
  %v987 = vpop.f32.mrb[0].mxu0
  %v988 = vpop.f32.mrb[0].mxu0
  %v989 = vadd.f32 %v150, %v988
  %v990 = vpop.f32.mrb[0].mxu0
  %991 = vmatprep.mubr.bf16.mxu0 0
  %992 = vmatmul.mubr.bf16.gmra.mrb[0].mxu0 %v588
  %v993 = vpop.f32.mrb[0].mxu0
  %v994 = vadd.f32 %v150, %v993
  %v995 = vpop.f32.mrb[0].mxu0
  %v996 = vpop.f32.mrb[0].mxu0
  %v997 = vadd.f32 %v150, %v996
  %v998 = vpop.f32.mrb[0].mxu0
  %999 = vmatprep.mubr.bf16.mxu0 0
  %1000 = vmatmul.mubr.bf16.gmra.mrb[0].mxu0 %v591
  %v1001 = vpop.f32.mrb[0].mxu0
  %v1002 = vadd.f32 %v150, %v1001
  %v1003 = vpop.f32.mrb[0].mxu0
  %v1004 = vpop.f32.mrb[0].mxu0
  %v1005 = vadd.f32 %v150, %v1004
  %v1006 = vpop.f32.mrb[0].mxu0
  %1007 = vmatprep.mubr.bf16.mxu0 0
  %1008 = vmatmul.mubr.bf16.gmra.mrb[0].mxu0 %v594
  %v1009 = vpop.f32.mrb[0].mxu0
  %v1010 = vadd.f32 %v150, %v1009
  %v1011 = vpop.f32.mrb[0].mxu0
  %v1012 = vpop.f32.mrb[0].mxu0
  %v1013 = vadd.f32 %v150, %v1012
  %v1014 = vpop.f32.mrb[0].mxu0
  %1015 = vmatprep.mubr.bf16.mxu0 0
  %1016 = vmatmul.mubr.bf16.gmra.mrb[0].mxu0 %v597
  %v1017 = vpop.f32.mrb[0].mxu0
  %v1018 = vadd.f32 %v150, %v1017
  %v1019 = vpop.f32.mrb[0].mxu0
  %v1020 = vpop.f32.mrb[0].mxu0
  %v1021 = vadd.f32 %v150, %v1020
  %v1022 = vpop.f32.mrb[0].mxu0
  %1023 = vmatprep.mubr.bf16.mxu0 0
  %1024 = vmatmul.mubr.bf16.gmra.mrb[0].mxu0 %v600
  %v1025 = vpop.f32.mrb[0].mxu0
  %v1026 = vadd.f32 %v150, %v1025
  %v1027 = vpop.f32.mrb[0].mxu0
  %v1028 = vpop.f32.mrb[0].mxu0
  %v1029 = vadd.f32 %v150, %v1028
  %v1030 = vpop.f32.mrb[0].mxu0
  %1031 = vmatprep.mubr.bf16.mxu0 0
  %1032 = vmatmul.mubr.bf16.gmra.mrb[0].mxu0 %v603
  %v1033 = vpop.f32.mrb[0].mxu0
  %v1034 = vadd.f32 %v150, %v1033
  %v1035 = vpop.f32.mrb[0].mxu0
  %v1036 = vpop.f32.mrb[0].mxu0
  %v1037 = vadd.f32 %v150, %v1036
  %v1038 = vpop.f32.mrb[0].mxu0
  %1039 = vmatprep.mubr.bf16.mxu0 0
  %1040 = vmatmul.mubr.bf16.gmra.mrb[0].mxu0 %v606
  %v1041 = vpop.f32.mrb[0].mxu0
  %v1042 = vadd.f32 %v150, %v1041
  %v1043 = vpop.f32.mrb[0].mxu0
  %v1044 = vpop.f32.mrb[0].mxu0
  %v1045 = vadd.f32 %v150, %v1044
  %v1046 = vpop.f32.mrb[0].mxu0
  %1047 = vmatprep.mubr.bf16.mxu0 0
  %1048 = vmatmul.mubr.bf16.gmra.mrb[0].mxu0 %v609
  %v1049 = vpop.f32.mrb[0].mxu0
  %v1050 = vadd.f32 %v150, %v1049
  %v1051 = vpop.f32.mrb[0].mxu0
  %v1052 = vpop.f32.mrb[0].mxu0
  %v1053 = vadd.f32 %v150, %v1052
  %v1054 = vpop.f32.mrb[0].mxu0
  %1055 = vmatprep.mubr.bf16.mxu0 0
  %1056 = vmatmul.mubr.bf16.gmra.mrb[0].mxu0 %v612
  %v1057 = vpop.f32.mrb[0].mxu0
  %v1058 = vadd.f32 %v150, %v1057
  %v1059 = vpop.f32.mrb[0].mxu0
  %v1060 = vpop.f32.mrb[0].mxu0
  %v1061 = vadd.f32 %v150, %v1060
  %v1062 = vpop.f32.mrb[0].mxu0
  %1063 = vmatprep.mubr.bf16.mxu0 0
  %1064 = vmatmul.mubr.bf16.gmra.mrb[0].mxu0 %v615
  %v1065 = vpop.f32.mrb[0].mxu0
  %v1066 = vadd.f32 %v150, %v1065
  %v1067 = vpop.f32.mrb[0].mxu0
  %v1068 = vpop.f32.mrb[0].mxu0
  %v1069 = vadd.f32 %v150, %v1068
  %v1070 = vpop.f32.mrb[0].mxu0
  %1071 = vmatprep.mubr.bf16.mxu0 0
  %1072 = vmatmul.mubr.bf16.gmra.mrb[0].mxu0 %v618
  %v1073 = vpop.f32.mrb[0].mxu0
  %v1074 = vadd.f32 %v150, %v1073
  %v1075 = vpop.f32.mrb[0].mxu0
  %v1076 = vpop.f32.mrb[0].mxu0
  %v1077 = vadd.f32 %v150, %v1076
  %v1078 = vpop.f32.mrb[0].mxu0
  %1079 = vmatprep.mubr.bf16.mxu0 0
  %1080 = vmatmul.mubr.bf16.gmra.mrb[0].mxu0 %v621
  %v1081 = vpop.f32.mrb[0].mxu0
  %v1082 = vadd.f32 %v150, %v1081
  %v1083 = vpop.f32.mrb[0].mxu0
  %v1084 = vpop.f32.mrb[0].mxu0
  %v1085 = vadd.f32 %v150, %v1084
  %v1086 = vpop.f32.mrb[0].mxu0
  %1087 = vmatprep.mubr.bf16.mxu0 0
  %1088 = vmatmul.mubr.bf16.gmra.mrb[0].mxu0 %v624
  %v1089 = vpop.f32.mrb[0].mxu0
  %v1090 = vadd.f32 %v150, %v1089
  %v1091 = vpop.f32.mrb[0].mxu0
  %v1092 = vpop.f32.mrb[0].mxu0
  %v1093 = vadd.f32 %v150, %v1092
  %v1094 = vpop.f32.mrb[0].mxu0
  %1095 = vmatprep.mubr.bf16.mxu0 0
  %1096 = vmatmul.mubr.bf16.gmra.mrb[0].mxu0 %v627
  %v1097 = vpop.f32.mrb[0].mxu0
  %v1098 = vadd.f32 %v150, %v1097
  %v1099 = vpop.f32.mrb[0].mxu0
  %v1100 = vpop.f32.mrb[0].mxu0
  %v1101 = vadd.f32 %v150, %v1100
  %v1102 = vpop.f32.mrb[0].mxu0
  %1103 = vmatprep.mubr.bf16.mxu0 0
  %1104 = vmatmul.mubr.bf16.gmra.mrb[0].mxu0 %v630
  %v1105 = vpop.f32.mrb[0].mxu0
  %v1106 = vadd.f32 %v150, %v1105
  %v1107 = vpop.f32.mrb[0].mxu0
  %v1108 = vpop.f32.mrb[0].mxu0
  %v1109 = vadd.f32 %v150, %v1108
  %v1110 = vpop.f32.mrb[0].mxu0
  %1111 = vmatprep.mubr.bf16.mxu0 0
  %1112 = vmatmul.mubr.bf16.gmra.mrb[0].mxu0 %v633
  %v1113 = vpop.f32.mrb[0].mxu0
  %v1114 = vadd.f32 %v150, %v1113
  %v1115 = vpop.f32.mrb[0].mxu0
  %v1116 = vpop.f32.mrb[0].mxu0
  %v1117 = vadd.f32 %v150, %v1116
  %v1118 = vpop.f32.mrb[0].mxu0
  %1119 = vmatprep.mubr.bf16.mxu0 0
  %1120 = vmatmul.mubr.bf16.gmra.mrb[0].mxu0 %v636
  %v1121 = vpop.f32.mrb[0].mxu0
  %v1122 = vadd.f32 %v150, %v1121
  %v1123 = vpop.f32.mrb[0].mxu0
  %v1124 = vpop.f32.mrb[0].mxu0
  %v1125 = vadd.f32 %v150, %v1124
  %v1126 = vpop.f32.mrb[0].mxu0
  %1127 = vmatprep.mubr.bf16.mxu0 0
  %1128 = vmatmul.mubr.bf16.gmra.mrb[0].mxu0 %v639
  %v1129 = vpop.f32.mrb[0].mxu0
  %v1130 = vadd.f32 %v150, %v1129
  %v1131 = vpop.f32.mrb[0].mxu0
  %v1132 = vpop.f32.mrb[0].mxu0
  %v1133 = vadd.f32 %v150, %v1132
  %v1134 = vpop.f32.mrb[0].mxu0
  %1135 = vmatprep.mubr.bf16.mxu0 0
  %1136 = vmatmul.mubr.bf16.gmra.mrb[0].mxu0 %v642
  %v1137 = vpop.f32.mrb[0].mxu0
  %v1138 = vadd.f32 %v150, %v1137
  %v1139 = vpop.f32.mrb[0].mxu0
  %v1140 = vpop.f32.mrb[0].mxu0
  %v1141 = vadd.f32 %v150, %v1140
  %v1142 = vpop.f32.mrb[0].mxu0
  %1143 = vmatprep.mubr.bf16.mxu0 0
  %1144 = vmatmul.mubr.bf16.gmra.mrb[0].mxu0 %v645
  %v1145 = vpop.f32.mrb[0].mxu0
  %v1146 = vadd.f32 %v150, %v1145
  %v1147 = vpop.f32.mrb[0].mxu0
  %v1148 = vpop.f32.mrb[0].mxu0
  %v1149 = vadd.f32 %v150, %v1148
  %v1150 = vpop.f32.mrb[0].mxu0
  %1151 = vmatprep.mubr.bf16.mxu0 0
  %1152 = vmatmul.mubr.bf16.gmra.mrb[0].mxu0 %v648
  %v1153 = vpop.f32.mrb[0].mxu0
  %v1154 = vadd.f32 %v150, %v1153
  %v1155 = vpop.f32.mrb[0].mxu0
  %v1156 = vpop.f32.mrb[0].mxu0
  %v1157 = vadd.f32 %v150, %v1156
  %v1158 = vpop.f32.mrb[0].mxu0
  %1159 = vmatprep.mubr.bf16.mxu0 0
  %1160 = vmatmul.mubr.bf16.gmra.mrb[0].mxu0 %v651
  %v1161 = vpop.f32.mrb[0].mxu0
  %v1162 = vadd.f32 %v150, %v1161
  %v1163 = vpop.f32.mrb[0].mxu0
  %v1164 = vpop.f32.mrb[0].mxu0
  %v1165 = vadd.f32 %v150, %v1164
  %v1166 = vpop.f32.mrb[0].mxu0
  %1167 = vmatprep.mubr.bf16.mxu0 0
  %1168 = vmatmul.mubr.bf16.gmra.mrb[0].mxu0 %v654
  %v1169 = vpop.f32.mrb[0].mxu0
  %v1170 = vadd.f32 %v150, %v1169
  %v1171 = vpop.f32.mrb[0].mxu0
  %v1172 = vpop.f32.mrb[0].mxu0
  %v1173 = vadd.f32 %v150, %v1172
  %v1174 = vpop.f32.mrb[0].mxu0
  %1175 = vmatprep.mubr.bf16.mxu0 0
  %1176 = vmatmul.mubr.bf16.gmra.mrb[0].mxu0 %v657
  %v1177 = vpop.f32.mrb[0].mxu0
  %v1178 = vadd.f32 %v150, %v1177
  %v1179 = vpop.f32.mrb[0].mxu0
  %v1180 = vpop.f32.mrb[0].mxu0
  %v1181 = vadd.f32 %v150, %v1180
  %v1182 = vpop.f32.mrb[0].mxu0
  %1183 = vmatprep.mubr.bf16.mxu0 0
  %1184 = vmatmul.mubr.bf16.gmra.mrb[0].mxu0 %v660
  %v1185 = vpop.f32.mrb[0].mxu0
  %v1186 = vadd.f32 %v150, %v1185
  %v1187 = vpop.f32.mrb[0].mxu0
  %v1188 = vpop.f32.mrb[0].mxu0
  %v1189 = vadd.f32 %v150, %v1188
  %v1190 = vpop.f32.mrb[0].mxu0
  %1191 = vmatprep.mubr.bf16.mxu0 0
  %1192 = vmatmul.mubr.bf16.gmra.mrb[0].mxu0 %v663
  %v1193 = vpop.f32.mrb[0].mxu0
  %v1194 = vadd.f32 %v150, %v1193
  %v1195 = vpop.f32.mrb[0].mxu0
  %v1196 = vpop.f32.mrb[0].mxu0
  %v1197 = vadd.f32 %v150, %v1196
  %v1198 = vpop.f32.mrb[0].mxu0
  %1199 = vmatprep.mubr.bf16.mxu0 0
  %1200 = vmatmul.mubr.bf16.gmra.mrb[0].mxu0 %v666
  %v1201 = vpop.f32.mrb[0].mxu0
  %v1202 = vadd.f32 %v150, %v1201
  %v1203 = vpop.f32.mrb[0].mxu0
  %v1204 = vpop.f32.mrb[0].mxu0
  %v1205 = vadd.f32 %v150, %v1204
  %v1206 = vpop.f32.mrb[0].mxu0
  %1207 = vmatprep.mubr.bf16.mxu0 0
  %1208 = vmatmul.mubr.bf16.gmra.mrb[0].mxu0 %v669
  %v1209 = vpop.f32.mrb[0].mxu0
  %v1210 = vadd.f32 %v150, %v1209
  %v1211 = vpop.f32.mrb[0].mxu0
  %v1212 = vpop.f32.mrb[0].mxu0
  %v1213 = vadd.f32 %v150, %v1212
  %v1214 = vpop.f32.mrb[0].mxu0
  %1215 = vdwg.mxu0
  %v1216 = vmax.f32 %v706, 0.0
  %v1217 = vmax.f32 %v709, 0.0
  %v1218 = vmax.f32 %v714, 0.0
  %v1219 = vmax.f32 %v717, 0.0
  %v1220 = vmax.f32 %v722, 0.0
  %v1221 = vmax.f32 %v725, 0.0
  %v1222 = vmax.f32 %v730, 0.0
  %v1223 = vmax.f32 %v733, 0.0
  %v1224 = vmax.f32 %v738, 0.0
  %v1225 = vmax.f32 %v741, 0.0
  %v1226 = vmax.f32 %v746, 0.0
  %v1227 = vmax.f32 %v749, 0.0
  %v1228 = vmax.f32 %v754, 0.0
  %v1229 = vmax.f32 %v757, 0.0
  %v1230 = vmax.f32 %v762, 0.0
  %v1231 = vmax.f32 %v765, 0.0
  %v1232 = vmax.f32 %v770, 0.0
  %v1233 = vmax.f32 %v773, 0.0
  %v1234 = vmax.f32 %v778, 0.0
  %v1235 = vmax.f32 %v781, 0.0
  %v1236 = vmax.f32 %v786, 0.0
  %v1237 = vmax.f32 %v789, 0.0
  %v1238 = vmax.f32 %v794, 0.0
  %v1239 = vmax.f32 %v797, 0.0
  %v1240 = vmax.f32 %v802, 0.0
  %v1241 = vmax.f32 %v805, 0.0
  %v1242 = vmax.f32 %v810, 0.0
  %v1243 = vmax.f32 %v813, 0.0
  %v1244 = vmax.f32 %v818, 0.0
  %v1245 = vmax.f32 %v821, 0.0
  %v1246 = vmax.f32 %v826, 0.0
  %v1247 = vmax.f32 %v829, 0.0
  %v1248 = vmax.f32 %v834, 0.0
  %v1249 = vmax.f32 %v837, 0.0
  %v1250 = vmax.f32 %v842, 0.0
  %v1251 = vmax.f32 %v845, 0.0
  %v1252 = vmax.f32 %v850, 0.0
  %v1253 = vmax.f32 %v853, 0.0
  %v1254 = vmax.f32 %v858, 0.0
  %v1255 = vmax.f32 %v861, 0.0
  %v1256 = vmax.f32 %v866, 0.0
  %v1257 = vmax.f32 %v869, 0.0
  %v1258 = vmax.f32 %v874, 0.0
  %v1259 = vmax.f32 %v877, 0.0
  %v1260 = vmax.f32 %v882, 0.0
  %v1261 = vmax.f32 %v885, 0.0
  %v1262 = vmax.f32 %v890, 0.0
  %v1263 = vmax.f32 %v893, 0.0
  %v1264 = vmax.f32 %v898, 0.0
  %v1265 = vmax.f32 %v901, 0.0
  %v1266 = vmax.f32 %v906, 0.0
  %v1267 = vmax.f32 %v909, 0.0
  %v1268 = vmax.f32 %v914, 0.0
  %v1269 = vmax.f32 %v917, 0.0
  %v1270 = vmax.f32 %v922, 0.0
  %v1271 = vmax.f32 %v925, 0.0
  %v1272 = vmax.f32 %v930, 0.0
  %v1273 = vmax.f32 %v933, 0.0
  %v1274 = vmax.f32 %v938, 0.0
  %v1275 = vmax.f32 %v941, 0.0
  %v1276 = vmax.f32 %v946, 0.0
  %v1277 = vmax.f32 %v949, 0.0
  %v1278 = vmax.f32 %v954, 0.0
  %v1279 = vmax.f32 %v957, 0.0
  %v1280 = vmax.f32 %v962, 0.0
  %v1281 = vmax.f32 %v965, 0.0
  %v1282 = vmax.f32 %v970, 0.0
  %v1283 = vmax.f32 %v973, 0.0
  %v1284 = vmax.f32 %v978, 0.0
  %v1285 = vmax.f32 %v981, 0.0
  %v1286 = vmax.f32 %v986, 0.0
  %v1287 = vmax.f32 %v989, 0.0
  %v1288 = vmax.f32 %v994, 0.0
  %v1289 = vmax.f32 %v997, 0.0
  %v1290 = vmax.f32 %v1002, 0.0
  %v1291 = vmax.f32 %v1005, 0.0
  %v1292 = vmax.f32 %v1010, 0.0
  %v1293 = vmax.f32 %v1013, 0.0
  %v1294 = vmax.f32 %v1018, 0.0
  %v1295 = vmax.f32 %v1021, 0.0
  %v1296 = vmax.f32 %v1026, 0.0
  %v1297 = vmax.f32 %v1029, 0.0
  %v1298 = vmax.f32 %v1034, 0.0
  %v1299 = vmax.f32 %v1037, 0.0
  %v1300 = vmax.f32 %v1042, 0.0
  %v1301 = vmax.f32 %v1045, 0.0
  %v1302 = vmax.f32 %v1050, 0.0
  %v1303 = vmax.f32 %v1053, 0.0
  %v1304 = vmax.f32 %v1058, 0.0
  %v1305 = vmax.f32 %v1061, 0.0
  %v1306 = vmax.f32 %v1066, 0.0
  %v1307 = vmax.f32 %v1069, 0.0
  %v1308 = vmax.f32 %v1074, 0.0
  %v1309 = vmax.f32 %v1077, 0.0
  %v1310 = vmax.f32 %v1082, 0.0
  %v1311 = vmax.f32 %v1085, 0.0
  %v1312 = vmax.f32 %v1090, 0.0
  %v1313 = vmax.f32 %v1093, 0.0
  %v1314 = vmax.f32 %v1098, 0.0
  %v1315 = vmax.f32 %v1101, 0.0
  %v1316 = vmax.f32 %v1106, 0.0
  %v1317 = vmax.f32 %v1109, 0.0
  %v1318 = vmax.f32 %v1114, 0.0
  %v1319 = vmax.f32 %v1117, 0.0
  %v1320 = vmax.f32 %v1122, 0.0
  %v1321 = vmax.f32 %v1125, 0.0
  %v1322 = vmax.f32 %v1130, 0.0
  %v1323 = vmax.f32 %v1133, 0.0
  %v1324 = vmax.f32 %v1138, 0.0
  %v1325 = vmax.f32 %v1141, 0.0
  %v1326 = vmax.f32 %v1146, 0.0
  %v1327 = vmax.f32 %v1149, 0.0
  %v1328 = vmax.f32 %v1154, 0.0
  %v1329 = vmax.f32 %v1157, 0.0
  %v1330 = vmax.f32 %v1162, 0.0
  %v1331 = vmax.f32 %v1165, 0.0
  %v1332 = vmax.f32 %v1170, 0.0
  %v1333 = vmax.f32 %v1173, 0.0
  %v1334 = vmax.f32 %v1178, 0.0
  %v1335 = vmax.f32 %v1181, 0.0
  %v1336 = vmax.f32 %v1186, 0.0
  %v1337 = vmax.f32 %v1189, 0.0
  %v1338 = vmax.f32 %v1194, 0.0
  %v1339 = vmax.f32 %v1197, 0.0
  %v1340 = vmax.f32 %v1202, 0.0
  %v1341 = vmax.f32 %v1205, 0.0
  %v1342 = vmax.f32 %v1210, 0.0
  %v1343 = vmax.f32 %v1213, 0.0
  %v1344 = vpack.c.bf16 %v1217, %v1216
  %v1345 = vpack.c.bf16 %v1219, %v1218
  %v1346 = vpack.c.bf16 %v1221, %v1220
  %v1347 = vpack.c.bf16 %v1223, %v1222
  %v1348 = vpack.c.bf16 %v1225, %v1224
  %v1349 = vpack.c.bf16 %v1227, %v1226
  %v1350 = vpack.c.bf16 %v1229, %v1228
  %v1351 = vpack.c.bf16 %v1231, %v1230
  %v1352 = vpack.c.bf16 %v1233, %v1232
  %v1353 = vpack.c.bf16 %v1235, %v1234
  %v1354 = vpack.c.bf16 %v1237, %v1236
  %v1355 = vpack.c.bf16 %v1239, %v1238
  %v1356 = vpack.c.bf16 %v1241, %v1240
  %v1357 = vpack.c.bf16 %v1243, %v1242
  %v1358 = vpack.c.bf16 %v1245, %v1244
  %v1359 = vpack.c.bf16 %v1247, %v1246
  %v1360 = vpack.c.bf16 %v1249, %v1248
  %v1361 = vpack.c.bf16 %v1251, %v1250
  %v1362 = vpack.c.bf16 %v1253, %v1252
  %v1363 = vpack.c.bf16 %v1255, %v1254
  %v1364 = vpack.c.bf16 %v1257, %v1256
  %v1365 = vpack.c.bf16 %v1259, %v1258
  %v1366 = vpack.c.bf16 %v1261, %v1260
  %v1367 = vpack.c.bf16 %v1263, %v1262
  %v1368 = vpack.c.bf16 %v1265, %v1264
  %v1369 = vpack.c.bf16 %v1267, %v1266
  %v1370 = vpack.c.bf16 %v1269, %v1268
  %v1371 = vpack.c.bf16 %v1271, %v1270
  %v1372 = vpack.c.bf16 %v1273, %v1272
  %v1373 = vpack.c.bf16 %v1275, %v1274
  %v1374 = vpack.c.bf16 %v1277, %v1276
  %v1375 = vpack.c.bf16 %v1279, %v1278
  %v1376 = vpack.c.bf16 %v1281, %v1280
  %v1377 = vpack.c.bf16 %v1283, %v1282
  %v1378 = vpack.c.bf16 %v1285, %v1284
  %v1379 = vpack.c.bf16 %v1287, %v1286
  %v1380 = vpack.c.bf16 %v1289, %v1288
  %v1381 = vpack.c.bf16 %v1291, %v1290
  %v1382 = vpack.c.bf16 %v1293, %v1292
  %v1383 = vpack.c.bf16 %v1295, %v1294
  %v1384 = vpack.c.bf16 %v1297, %v1296
  %v1385 = vpack.c.bf16 %v1299, %v1298
  %v1386 = vpack.c.bf16 %v1301, %v1300
  %v1387 = vpack.c.bf16 %v1303, %v1302
  %v1388 = vpack.c.bf16 %v1305, %v1304
  %v1389 = vpack.c.bf16 %v1307, %v1306
  %v1390 = vpack.c.bf16 %v1309, %v1308
  %v1391 = vpack.c.bf16 %v1311, %v1310
  %v1392 = vpack.c.bf16 %v1313, %v1312
  %v1393 = vpack.c.bf16 %v1315, %v1314
  %v1394 = vpack.c.bf16 %v1317, %v1316
  %v1395 = vpack.c.bf16 %v1319, %v1318
  %v1396 = vpack.c.bf16 %v1321, %v1320
  %v1397 = vpack.c.bf16 %v1323, %v1322
  %v1398 = vpack.c.bf16 %v1325, %v1324
  %v1399 = vpack.c.bf16 %v1327, %v1326
  %v1400 = vpack.c.bf16 %v1329, %v1328
  %v1401 = vpack.c.bf16 %v1331, %v1330
  %v1402 = vpack.c.bf16 %v1333, %v1332
  %v1403 = vpack.c.bf16 %v1335, %v1334
  %v1404 = vpack.c.bf16 %v1337, %v1336
  %v1405 = vpack.c.bf16 %v1339, %v1338
  %v1406 = vpack.c.bf16 %v1341, %v1340
  %v1407 = vpack.c.bf16 %v1343, %v1342
  %v1472 = vunpack.c.l.b16 %v1344
  %v1473 = vunpack.c.h.b16 %v1344
  %v1474 = vunpack.c.l.b16 %v1345
  %v1475 = vunpack.c.h.b16 %v1345
  %v1476 = vunpack.c.l.b16 %v1346
  %v1477 = vunpack.c.h.b16 %v1346
  %v1478 = vunpack.c.l.b16 %v1347
  %v1479 = vunpack.c.h.b16 %v1347
  %v1480 = vunpack.c.l.b16 %v1348
  %v1481 = vunpack.c.h.b16 %v1348
  %v1482 = vunpack.c.l.b16 %v1349
  %v1483 = vunpack.c.h.b16 %v1349
  %v1484 = vunpack.c.l.b16 %v1350
  %v1485 = vunpack.c.h.b16 %v1350
  %v1486 = vunpack.c.l.b16 %v1351
  %v1487 = vunpack.c.h.b16 %v1351
  %v1488 = vunpack.c.l.b16 %v1352
  %v1489 = vunpack.c.h.b16 %v1352
  %v1490 = vunpack.c.l.b16 %v1353
  %v1491 = vunpack.c.h.b16 %v1353
  %v1492 = vunpack.c.l.b16 %v1354
  %v1493 = vunpack.c.h.b16 %v1354
  %v1494 = vunpack.c.l.b16 %v1355
  %v1495 = vunpack.c.h.b16 %v1355
  %v1496 = vunpack.c.l.b16 %v1356
  %v1497 = vunpack.c.h.b16 %v1356
  %v1498 = vunpack.c.l.b16 %v1357
  %v1499 = vunpack.c.h.b16 %v1357
  %v1500 = vunpack.c.l.b16 %v1358
  %v1501 = vunpack.c.h.b16 %v1358
  %v1502 = vunpack.c.l.b16 %v1359
  %v1503 = vunpack.c.h.b16 %v1359
  %v1504 = vunpack.c.l.b16 %v1360
  %v1505 = vunpack.c.h.b16 %v1360
  %v1506 = vunpack.c.l.b16 %v1361
  %v1507 = vunpack.c.h.b16 %v1361
  %v1508 = vunpack.c.l.b16 %v1362
  %v1509 = vunpack.c.h.b16 %v1362
  %v1510 = vunpack.c.l.b16 %v1363
  %v1511 = vunpack.c.h.b16 %v1363
  %v1512 = vunpack.c.l.b16 %v1364
  %v1513 = vunpack.c.h.b16 %v1364
  %v1514 = vunpack.c.l.b16 %v1365
  %v1515 = vunpack.c.h.b16 %v1365
  %v1516 = vunpack.c.l.b16 %v1366
  %v1517 = vunpack.c.h.b16 %v1366
  %v1518 = vunpack.c.l.b16 %v1367
  %v1519 = vunpack.c.h.b16 %v1367
  %v1520 = vunpack.c.l.b16 %v1368
  %v1521 = vunpack.c.h.b16 %v1368
  %v1522 = vunpack.c.l.b16 %v1369
  %v1523 = vunpack.c.h.b16 %v1369
  %v1524 = vunpack.c.l.b16 %v1370
  %v1525 = vunpack.c.h.b16 %v1370
  %v1526 = vunpack.c.l.b16 %v1371
  %v1527 = vunpack.c.h.b16 %v1371
  %v1528 = vunpack.c.l.b16 %v1372
  %v1529 = vunpack.c.h.b16 %v1372
  %v1530 = vunpack.c.l.b16 %v1373
  %v1531 = vunpack.c.h.b16 %v1373
  %v1532 = vunpack.c.l.b16 %v1374
  %v1533 = vunpack.c.h.b16 %v1374
  %v1534 = vunpack.c.l.b16 %v1375
  %v1535 = vunpack.c.h.b16 %v1375
  %v1536 = vunpack.c.l.b16 %v1376
  %v1537 = vunpack.c.h.b16 %v1376
  %v1538 = vunpack.c.l.b16 %v1377
  %v1539 = vunpack.c.h.b16 %v1377
  %v1540 = vunpack.c.l.b16 %v1378
  %v1541 = vunpack.c.h.b16 %v1378
  %v1542 = vunpack.c.l.b16 %v1379
  %v1543 = vunpack.c.h.b16 %v1379
  %v1544 = vunpack.c.l.b16 %v1380
  %v1545 = vunpack.c.h.b16 %v1380
  %v1546 = vunpack.c.l.b16 %v1381
  %v1547 = vunpack.c.h.b16 %v1381
  %v1548 = vunpack.c.l.b16 %v1382
  %v1549 = vunpack.c.h.b16 %v1382
  %v1550 = vunpack.c.l.b16 %v1383
  %v1551 = vunpack.c.h.b16 %v1383
  %v1552 = vunpack.c.l.b16 %v1384
  %v1553 = vunpack.c.h.b16 %v1384
  %v1554 = vunpack.c.l.b16 %v1385
  %v1555 = vunpack.c.h.b16 %v1385
  %v1556 = vunpack.c.l.b16 %v1386
  %v1557 = vunpack.c.h.b16 %v1386
  %v1558 = vunpack.c.l.b16 %v1387
  %v1559 = vunpack.c.h.b16 %v1387
  %v1560 = vunpack.c.l.b16 %v1388
  %v1561 = vunpack.c.h.b16 %v1388
  %v1562 = vunpack.c.l.b16 %v1389
  %v1563 = vunpack.c.h.b16 %v1389
  %v1564 = vunpack.c.l.b16 %v1390
  %v1565 = vunpack.c.h.b16 %v1390
  %v1566 = vunpack.c.l.b16 %v1391
  %v1567 = vunpack.c.h.b16 %v1391
  %v1568 = vunpack.c.l.b16 %v1392
  %v1569 = vunpack.c.h.b16 %v1392
  %v1570 = vunpack.c.l.b16 %v1393
  %v1571 = vunpack.c.h.b16 %v1393
  %v1572 = vunpack.c.l.b16 %v1394
  %v1573 = vunpack.c.h.b16 %v1394
  %v1574 = vunpack.c.l.b16 %v1395
  %v1575 = vunpack.c.h.b16 %v1395
  %v1576 = vunpack.c.l.b16 %v1396
  %v1577 = vunpack.c.h.b16 %v1396
  %v1578 = vunpack.c.l.b16 %v1397
  %v1579 = vunpack.c.h.b16 %v1397
  %v1580 = vunpack.c.l.b16 %v1398
  %v1581 = vunpack.c.h.b16 %v1398
  %v1582 = vunpack.c.l.b16 %v1399
  %v1583 = vunpack.c.h.b16 %v1399
  %v1584 = vunpack.c.l.b16 %v1400
  %v1585 = vunpack.c.h.b16 %v1400
  %v1586 = vunpack.c.l.b16 %v1401
  %v1587 = vunpack.c.h.b16 %v1401
  %v1588 = vunpack.c.l.b16 %v1402
  %v1589 = vunpack.c.h.b16 %v1402
  %v1590 = vunpack.c.l.b16 %v1403
  %v1591 = vunpack.c.h.b16 %v1403
  %v1592 = vunpack.c.l.b16 %v1404
  %v1593 = vunpack.c.h.b16 %v1404
  %v1594 = vunpack.c.l.b16 %v1405
  %v1595 = vunpack.c.h.b16 %v1405
  %v1596 = vunpack.c.l.b16 %v1406
  %v1597 = vunpack.c.h.b16 %v1406
  %v1598 = vunpack.c.l.b16 %v1407
  %v1599 = vunpack.c.h.b16 %v1407
  %v1600 = vpack.c.b16 %v1472, %v1472
  %v1601 = vpack.c.b16 %v1473, %v1473
  %v1602 = vpack.c.b16 %v1474, %v1474
  %v1603 = vpack.c.b16 %v1475, %v1475
  %v1604 = vpack.c.b16 %v1476, %v1476
  %v1605 = vpack.c.b16 %v1477, %v1477
  %v1606 = vpack.c.b16 %v1478, %v1478
  %v1607 = vpack.c.b16 %v1479, %v1479
  %v1608 = vpack.c.b16 %v1480, %v1480
  %v1609 = vpack.c.b16 %v1481, %v1481
  %v1610 = vpack.c.b16 %v1482, %v1482
  %v1611 = vpack.c.b16 %v1483, %v1483
  %v1612 = vpack.c.b16 %v1484, %v1484
  %v1613 = vpack.c.b16 %v1485, %v1485
  %v1614 = vpack.c.b16 %v1486, %v1486
  %v1615 = vpack.c.b16 %v1487, %v1487
  %v1616 = vpack.c.b16 %v1488, %v1488
  %v1617 = vpack.c.b16 %v1489, %v1489
  %v1618 = vpack.c.b16 %v1490, %v1490
  %v1619 = vpack.c.b16 %v1491, %v1491
  %v1620 = vpack.c.b16 %v1492, %v1492
  %v1621 = vpack.c.b16 %v1493, %v1493
  %v1622 = vpack.c.b16 %v1494, %v1494
  %v1623 = vpack.c.b16 %v1495, %v1495
  %v1624 = vpack.c.b16 %v1496, %v1496
  %v1625 = vpack.c.b16 %v1497, %v1497
  %v1626 = vpack.c.b16 %v1498, %v1498
  %v1627 = vpack.c.b16 %v1499, %v1499
  %v1628 = vpack.c.b16 %v1500, %v1500
  %v1629 = vpack.c.b16 %v1501, %v1501
  %v1630 = vpack.c.b16 %v1502, %v1502
  %v1631 = vpack.c.b16 %v1503, %v1503
  %v1632 = vpack.c.b16 %v1504, %v1504
  %v1633 = vpack.c.b16 %v1505, %v1505
  %v1634 = vpack.c.b16 %v1506, %v1506
  %v1635 = vpack.c.b16 %v1507, %v1507
  %v1636 = vpack.c.b16 %v1508, %v1508
  %v1637 = vpack.c.b16 %v1509, %v1509
  %v1638 = vpack.c.b16 %v1510, %v1510
  %v1639 = vpack.c.b16 %v1511, %v1511
  %v1640 = vpack.c.b16 %v1512, %v1512
  %v1641 = vpack.c.b16 %v1513, %v1513
  %v1642 = vpack.c.b16 %v1514, %v1514
  %v1643 = vpack.c.b16 %v1515, %v1515
  %v1644 = vpack.c.b16 %v1516, %v1516
  %v1645 = vpack.c.b16 %v1517, %v1517
  %v1646 = vpack.c.b16 %v1518, %v1518
  %v1647 = vpack.c.b16 %v1519, %v1519
  %v1648 = vpack.c.b16 %v1520, %v1520
  %v1649 = vpack.c.b16 %v1521, %v1521
  %v1650 = vpack.c.b16 %v1522, %v1522
  %v1651 = vpack.c.b16 %v1523, %v1523
  %v1652 = vpack.c.b16 %v1524, %v1524
  %v1653 = vpack.c.b16 %v1525, %v1525
  %v1654 = vpack.c.b16 %v1526, %v1526
  %v1655 = vpack.c.b16 %v1527, %v1527
  %v1656 = vpack.c.b16 %v1528, %v1528
  %v1657 = vpack.c.b16 %v1529, %v1529
  %v1658 = vpack.c.b16 %v1530, %v1530
  %v1659 = vpack.c.b16 %v1531, %v1531
  %v1660 = vpack.c.b16 %v1532, %v1532
  %v1661 = vpack.c.b16 %v1533, %v1533
  %v1662 = vpack.c.b16 %v1534, %v1534
  %v1663 = vpack.c.b16 %v1535, %v1535
  %v1664 = vpack.c.b16 %v1536, %v1536
  %v1665 = vpack.c.b16 %v1537, %v1537
  %v1666 = vpack.c.b16 %v1538, %v1538
  %v1667 = vpack.c.b16 %v1539, %v1539
  %v1668 = vpack.c.b16 %v1540, %v1540
  %v1669 = vpack.c.b16 %v1541, %v1541
  %v1670 = vpack.c.b16 %v1542, %v1542
  %v1671 = vpack.c.b16 %v1543, %v1543
  %v1672 = vpack.c.b16 %v1544, %v1544
  %v1673 = vpack.c.b16 %v1545, %v1545
  %v1674 = vpack.c.b16 %v1546, %v1546
  %v1675 = vpack.c.b16 %v1547, %v1547
  %v1676 = vpack.c.b16 %v1548, %v1548
  %v1677 = vpack.c.b16 %v1549, %v1549
  %v1678 = vpack.c.b16 %v1550, %v1550
  %v1679 = vpack.c.b16 %v1551, %v1551
  %v1680 = vpack.c.b16 %v1552, %v1552
  %v1681 = vpack.c.b16 %v1553, %v1553
  %v1682 = vpack.c.b16 %v1554, %v1554
  %v1683 = vpack.c.b16 %v1555, %v1555
  %v1684 = vpack.c.b16 %v1556, %v1556
  %v1685 = vpack.c.b16 %v1557, %v1557
  %v1686 = vpack.c.b16 %v1558, %v1558
  %v1687 = vpack.c.b16 %v1559, %v1559
  %v1688 = vpack.c.b16 %v1560, %v1560
  %v1689 = vpack.c.b16 %v1561, %v1561
  %v1690 = vpack.c.b16 %v1562, %v1562
  %v1691 = vpack.c.b16 %v1563, %v1563
  %v1692 = vpack.c.b16 %v1564, %v1564
  %v1693 = vpack.c.b16 %v1565, %v1565
  %v1694 = vpack.c.b16 %v1566, %v1566
  %v1695 = vpack.c.b16 %v1567, %v1567
  %v1696 = vpack.c.b16 %v1568, %v1568
  %v1697 = vpack.c.b16 %v1569, %v1569
  %v1698 = vpack.c.b16 %v1570, %v1570
  %v1699 = vpack.c.b16 %v1571, %v1571
  %v1700 = vpack.c.b16 %v1572, %v1572
  %v1701 = vpack.c.b16 %v1573, %v1573
  %v1702 = vpack.c.b16 %v1574, %v1574
  %v1703 = vpack.c.b16 %v1575, %v1575
  %v1704 = vpack.c.b16 %v1576, %v1576
  %v1705 = vpack.c.b16 %v1577, %v1577
  %v1706 = vpack.c.b16 %v1578, %v1578
  %v1707 = vpack.c.b16 %v1579, %v1579
  %v1708 = vpack.c.b16 %v1580, %v1580
  %v1709 = vpack.c.b16 %v1581, %v1581
  %v1710 = vpack.c.b16 %v1582, %v1582
  %v1711 = vpack.c.b16 %v1583, %v1583
  %v1712 = vpack.c.b16 %v1584, %v1584
  %v1713 = vpack.c.b16 %v1585, %v1585
  %v1714 = vpack.c.b16 %v1586, %v1586
  %v1715 = vpack.c.b16 %v1587, %v1587
  %v1716 = vpack.c.b16 %v1588, %v1588
  %v1717 = vpack.c.b16 %v1589, %v1589
  %v1718 = vpack.c.b16 %v1590, %v1590
  %v1719 = vpack.c.b16 %v1591, %v1591
  %v1720 = vpack.c.b16 %v1592, %v1592
  %v1721 = vpack.c.b16 %v1593, %v1593
  %v1722 = vpack.c.b16 %v1594, %v1594
  %v1723 = vpack.c.b16 %v1595, %v1595
  %v1724 = vpack.c.b16 %v1596, %v1596
  %v1725 = vpack.c.b16 %v1597, %v1597
  %v1726 = vpack.c.b16 %v1598, %v1598
  %v1727 = vpack.c.b16 %v1599, %v1599
  %vm1856 = vcmask 60416
  %1857 = vst.msk [vmem:[%s3] sm:$0xf] %vm1856, %v1600
  %1858 = vst.msk [vmem:[%s3 + $0x4] sm:$0xf] %vm1856, %v1601
  %1859 = vst.msk [vmem:[%s3 + $0x8] sm:$0xf] %vm1856, %v1602
  %1860 = vst.msk [vmem:[%s3 + $0xc] sm:$0xf] %vm1856, %v1603
  %1861 = vst.msk [vmem:[%s3 + $0x10] sm:$0xf] %vm1856, %v1604
  %1862 = vst.msk [vmem:[%s3 + $0x14] sm:$0xf] %vm1856, %v1605
  %1863 = vst.msk [vmem:[%s3 + $0x18] sm:$0xf] %vm1856, %v1606
  %1864 = vst.msk [vmem:[%s3 + $0x1c] sm:$0xf] %vm1856, %v1607
  %1865 = vst.msk [vmem:[%s3 + $0x20] sm:$0xf] %vm1856, %v1608
  %1866 = vst.msk [vmem:[%s3 + $0x24] sm:$0xf] %vm1856, %v1609
  %1867 = vst.msk [vmem:[%s3 + $0x28] sm:$0xf] %vm1856, %v1610
  %1868 = vst.msk [vmem:[%s3 + $0x2c] sm:$0xf] %vm1856, %v1611
  %1869 = vst.msk [vmem:[%s3 + $0x30] sm:$0xf] %vm1856, %v1612
  %1870 = vst.msk [vmem:[%s3 + $0x34] sm:$0xf] %vm1856, %v1613
  %1871 = vst.msk [vmem:[%s3 + $0x38] sm:$0xf] %vm1856, %v1614
  %1872 = vst.msk [vmem:[%s3 + $0x3c] sm:$0xf] %vm1856, %v1615
  %1873 = vst.msk [vmem:[%s3 + $0x40] sm:$0xf] %vm1856, %v1616
  %1874 = vst.msk [vmem:[%s3 + $0x44] sm:$0xf] %vm1856, %v1617
  %1875 = vst.msk [vmem:[%s3 + $0x48] sm:$0xf] %vm1856, %v1618
  %1876 = vst.msk [vmem:[%s3 + $0x4c] sm:$0xf] %vm1856, %v1619
  %1877 = vst.msk [vmem:[%s3 + $0x50] sm:$0xf] %vm1856, %v1620
  %1878 = vst.msk [vmem:[%s3 + $0x54] sm:$0xf] %vm1856, %v1621
  %1879 = vst.msk [vmem:[%s3 + $0x58] sm:$0xf] %vm1856, %v1622
  %1880 = vst.msk [vmem:[%s3 + $0x5c] sm:$0xf] %vm1856, %v1623
  %1881 = vst.msk [vmem:[%s3 + $0x60] sm:$0xf] %vm1856, %v1624
  %1882 = vst.msk [vmem:[%s3 + $0x64] sm:$0xf] %vm1856, %v1625
  %1883 = vst.msk [vmem:[%s3 + $0x68] sm:$0xf] %vm1856, %v1626
  %1884 = vst.msk [vmem:[%s3 + $0x6c] sm:$0xf] %vm1856, %v1627
  %1885 = vst.msk [vmem:[%s3 + $0x70] sm:$0xf] %vm1856, %v1628
  %1886 = vst.msk [vmem:[%s3 + $0x74] sm:$0xf] %vm1856, %v1629
  %1887 = vst.msk [vmem:[%s3 + $0x78] sm:$0xf] %vm1856, %v1630
  %1888 = vst.msk [vmem:[%s3 + $0x7c] sm:$0xf] %vm1856, %v1631
  %1889 = vst.msk [vmem:[%s3 + $0x80] sm:$0xf] %vm1856, %v1632
  %1890 = vst.msk [vmem:[%s3 + $0x84] sm:$0xf] %vm1856, %v1633
  %1891 = vst.msk [vmem:[%s3 + $0x88] sm:$0xf] %vm1856, %v1634
  %1892 = vst.msk [vmem:[%s3 + $0x8c] sm:$0xf] %vm1856, %v1635
  %1893 = vst.msk [vmem:[%s3 + $0x90] sm:$0xf] %vm1856, %v1636
  %1894 = vst.msk [vmem:[%s3 + $0x94] sm:$0xf] %vm1856, %v1637
  %1895 = vst.msk [vmem:[%s3 + $0x98] sm:$0xf] %vm1856, %v1638
  %1896 = vst.msk [vmem:[%s3 + $0x9c] sm:$0xf] %vm1856, %v1639
  %1897 = vst.msk [vmem:[%s3 + $0xa0] sm:$0xf] %vm1856, %v1640
  %1898 = vst.msk [vmem:[%s3 + $0xa4] sm:$0xf] %vm1856, %v1641
  %1899 = vst.msk [vmem:[%s3 + $0xa8] sm:$0xf] %vm1856, %v1642
  %1900 = vst.msk [vmem:[%s3 + $0xac] sm:$0xf] %vm1856, %v1643
  %1901 = vst.msk [vmem:[%s3 + $0xb0] sm:$0xf] %vm1856, %v1644
  %1902 = vst.msk [vmem:[%s3 + $0xb4] sm:$0xf] %vm1856, %v1645
  %1903 = vst.msk [vmem:[%s3 + $0xb8] sm:$0xf] %vm1856, %v1646
  %1904 = vst.msk [vmem:[%s3 + $0xbc] sm:$0xf] %vm1856, %v1647
  %1905 = vst.msk [vmem:[%s3 + $0xc0] sm:$0xf] %vm1856, %v1648
  %1906 = vst.msk [vmem:[%s3 + $0xc4] sm:$0xf] %vm1856, %v1649
  %1907 = vst.msk [vmem:[%s3 + $0xc8] sm:$0xf] %vm1856, %v1650
  %1908 = vst.msk [vmem:[%s3 + $0xcc] sm:$0xf] %vm1856, %v1651
  %1909 = vst.msk [vmem:[%s3 + $0xd0] sm:$0xf] %vm1856, %v1652
  %1910 = vst.msk [vmem:[%s3 + $0xd4] sm:$0xf] %vm1856, %v1653
  %1911 = vst.msk [vmem:[%s3 + $0xd8] sm:$0xf] %vm1856, %v1654
  %1912 = vst.msk [vmem:[%s3 + $0xdc] sm:$0xf] %vm1856, %v1655
  %1913 = vst.msk [vmem:[%s3 + $0xe0] sm:$0xf] %vm1856, %v1656
  %1914 = vst.msk [vmem:[%s3 + $0xe4] sm:$0xf] %vm1856, %v1657
  %1915 = vst.msk [vmem:[%s3 + $0xe8] sm:$0xf] %vm1856, %v1658
  %1916 = vst.msk [vmem:[%s3 + $0xec] sm:$0xf] %vm1856, %v1659
  %1917 = vst.msk [vmem:[%s3 + $0xf0] sm:$0xf] %vm1856, %v1660
  %1918 = vst.msk [vmem:[%s3 + $0xf4] sm:$0xf] %vm1856, %v1661
  %1919 = vst.msk [vmem:[%s3 + $0xf8] sm:$0xf] %vm1856, %v1662
  %1920 = vst.msk [vmem:[%s3 + $0xfc] sm:$0xf] %vm1856, %v1663
  %1921 = vst.msk [vmem:[%s3 + $0x100] sm:$0xf] %vm1856, %v1664
  %1922 = vst.msk [vmem:[%s3 + $0x104] sm:$0xf] %vm1856, %v1665
  %1923 = vst.msk [vmem:[%s3 + $0x108] sm:$0xf] %vm1856, %v1666
  %1924 = vst.msk [vmem:[%s3 + $0x10c] sm:$0xf] %vm1856, %v1667
  %1925 = vst.msk [vmem:[%s3 + $0x110] sm:$0xf] %vm1856, %v1668
  %1926 = vst.msk [vmem:[%s3 + $0x114] sm:$0xf] %vm1856, %v1669
  %1927 = vst.msk [vmem:[%s3 + $0x118] sm:$0xf] %vm1856, %v1670
  %1928 = vst.msk [vmem:[%s3 + $0x11c] sm:$0xf] %vm1856, %v1671
  %1929 = vst.msk [vmem:[%s3 + $0x120] sm:$0xf] %vm1856, %v1672
  %1930 = vst.msk [vmem:[%s3 + $0x124] sm:$0xf] %vm1856, %v1673
  %1931 = vst.msk [vmem:[%s3 + $0x128] sm:$0xf] %vm1856, %v1674
  %1932 = vst.msk [vmem:[%s3 + $0x12c] sm:$0xf] %vm1856, %v1675
  %1933 = vst.msk [vmem:[%s3 + $0x130] sm:$0xf] %vm1856, %v1676
  %1934 = vst.msk [vmem:[%s3 + $0x134] sm:$0xf] %vm1856, %v1677
  %1935 = vst.msk [vmem:[%s3 + $0x138] sm:$0xf] %vm1856, %v1678
  %1936 = vst.msk [vmem:[%s3 + $0x13c] sm:$0xf] %vm1856, %v1679
  %1937 = vst.msk [vmem:[%s3 + $0x140] sm:$0xf] %vm1856, %v1680
  %1938 = vst.msk [vmem:[%s3 + $0x144] sm:$0xf] %vm1856, %v1681
  %1939 = vst.msk [vmem:[%s3 + $0x148] sm:$0xf] %vm1856, %v1682
  %1940 = vst.msk [vmem:[%s3 + $0x14c] sm:$0xf] %vm1856, %v1683
  %1941 = vst.msk [vmem:[%s3 + $0x150] sm:$0xf] %vm1856, %v1684
  %1942 = vst.msk [vmem:[%s3 + $0x154] sm:$0xf] %vm1856, %v1685
  %1943 = vst.msk [vmem:[%s3 + $0x158] sm:$0xf] %vm1856, %v1686
  %1944 = vst.msk [vmem:[%s3 + $0x15c] sm:$0xf] %vm1856, %v1687
  %1945 = vst.msk [vmem:[%s3 + $0x160] sm:$0xf] %vm1856, %v1688
  %1946 = vst.msk [vmem:[%s3 + $0x164] sm:$0xf] %vm1856, %v1689
  %1947 = vst.msk [vmem:[%s3 + $0x168] sm:$0xf] %vm1856, %v1690
  %1948 = vst.msk [vmem:[%s3 + $0x16c] sm:$0xf] %vm1856, %v1691
  %1949 = vst.msk [vmem:[%s3 + $0x170] sm:$0xf] %vm1856, %v1692
  %1950 = vst.msk [vmem:[%s3 + $0x174] sm:$0xf] %vm1856, %v1693
  %1951 = vst.msk [vmem:[%s3 + $0x178] sm:$0xf] %vm1856, %v1694
  %1952 = vst.msk [vmem:[%s3 + $0x17c] sm:$0xf] %vm1856, %v1695
  %1953 = vst.msk [vmem:[%s3 + $0x180] sm:$0xf] %vm1856, %v1696
  %1954 = vst.msk [vmem:[%s3 + $0x184] sm:$0xf] %vm1856, %v1697
  %1955 = vst.msk [vmem:[%s3 + $0x188] sm:$0xf] %vm1856, %v1698
  %1956 = vst.msk [vmem:[%s3 + $0x18c] sm:$0xf] %vm1856, %v1699
  %1957 = vst.msk [vmem:[%s3 + $0x190] sm:$0xf] %vm1856, %v1700
  %1958 = vst.msk [vmem:[%s3 + $0x194] sm:$0xf] %vm1856, %v1701
  %1959 = vst.msk [vmem:[%s3 + $0x198] sm:$0xf] %vm1856, %v1702
  %1960 = vst.msk [vmem:[%s3 + $0x19c] sm:$0xf] %vm1856, %v1703
  %1961 = vst.msk [vmem:[%s3 + $0x1a0] sm:$0xf] %vm1856, %v1704
  %1962 = vst.msk [vmem:[%s3 + $0x1a4] sm:$0xf] %vm1856, %v1705
  %1963 = vst.msk [vmem:[%s3 + $0x1a8] sm:$0xf] %vm1856, %v1706
  %1964 = vst.msk [vmem:[%s3 + $0x1ac] sm:$0xf] %vm1856, %v1707
  %1965 = vst.msk [vmem:[%s3 + $0x1b0] sm:$0xf] %vm1856, %v1708
  %1966 = vst.msk [vmem:[%s3 + $0x1b4] sm:$0xf] %vm1856, %v1709
  %1967 = vst.msk [vmem:[%s3 + $0x1b8] sm:$0xf] %vm1856, %v1710
  %1968 = vst.msk [vmem:[%s3 + $0x1bc] sm:$0xf] %vm1856, %v1711
  %1969 = vst.msk [vmem:[%s3 + $0x1c0] sm:$0xf] %vm1856, %v1712
  %1970 = vst.msk [vmem:[%s3 + $0x1c4] sm:$0xf] %vm1856, %v1713
  %1971 = vst.msk [vmem:[%s3 + $0x1c8] sm:$0xf] %vm1856, %v1714
  %1972 = vst.msk [vmem:[%s3 + $0x1cc] sm:$0xf] %vm1856, %v1715
  %1973 = vst.msk [vmem:[%s3 + $0x1d0] sm:$0xf] %vm1856, %v1716
  %1974 = vst.msk [vmem:[%s3 + $0x1d4] sm:$0xf] %vm1856, %v1717
  %1975 = vst.msk [vmem:[%s3 + $0x1d8] sm:$0xf] %vm1856, %v1718
  %1976 = vst.msk [vmem:[%s3 + $0x1dc] sm:$0xf] %vm1856, %v1719
  %1977 = vst.msk [vmem:[%s3 + $0x1e0] sm:$0xf] %vm1856, %v1720
  %1978 = vst.msk [vmem:[%s3 + $0x1e4] sm:$0xf] %vm1856, %v1721
  %1979 = vst.msk [vmem:[%s3 + $0x1e8] sm:$0xf] %vm1856, %v1722
  %1980 = vst.msk [vmem:[%s3 + $0x1ec] sm:$0xf] %vm1856, %v1723
  %1981 = vst.msk [vmem:[%s3 + $0x1f0] sm:$0xf] %vm1856, %v1724
  %1982 = vst.msk [vmem:[%s3 + $0x1f4] sm:$0xf] %vm1856, %v1725
  %1983 = vst.msk [vmem:[%s3 + $0x1f8] sm:$0xf] %vm1856, %v1726
  %1984 = vst.msk [vmem:[%s3 + $0x1fc] sm:$0xf] %vm1856, %v1727
  // Predicated region
  $region14: #{sketchanet_loss.10} parent=0 // pred_check
    _
  $region15: #{sketchanet_loss.10} parent=0 // pred_check_branch
    %1986 = sbr.rel (0) target = $region17
  $region16: #{sketchanet_loss.10} parent=0 // pred_region
    _
  $region17: #{sketchanet_loss.10} parent=0 // pred_fallthru
    _
  // Predicated region
  $region18: #{sketchanet_loss.10} parent=0 // pred_check
    _
  $region19: #{sketchanet_loss.10} parent=0 // pred_check_branch
    %1988 = sbr.rel (0) target = $region21
  $region20: #{sketchanet_loss.10} parent=0 // pred_region
    _
  $region21: #{sketchanet_loss.10} parent=0 // pred_fallthru
    _

// kernel: sketchanet_loss.11
$region0: #{sketchanet_loss.11}
  #allocation0 [shape = 'u32[]', space=smem, size = 0x4, offset = 0x4, fixed_abs, tag = 'smem constant byte address 0x4 - core index']
  #allocation1 [shape = 'u32[144,128]{1,0:T(1,128)}', space=vmem, size = 0x12000, scoped, tag = 'internal scratch']
  %s0 = inlined_call_operand.vmem [shape: bf16[256,72], index: 0, kind: input, shape index: {}]
  %s1 = inlined_call_operand.vmem [shape: bf16[72,16], index: 1, kind: input, shape index: {}]
  %s2 = inlined_call_operand.vmem [shape: f32[1,16], index: 2, kind: input, shape index: {}]
  %s3 = inlined_call_operand.vmem [shape: bf16[256,16], index: 3, kind: output, shape index: {}]
  %s4 = sld [smem:[#allocation0]]
  $region22: #{sketchanet_loss.11} parent=0
    _
  %s6 = ssub.s32 1, %s4
  %s7 = scalar_select 0, %s6, %s4
  // Predicated region
  $region2: #{sketchanet_loss.11} parent=0 // pred_check
    _
  $region3: #{sketchanet_loss.11} parent=0 // pred_check_branch
    %9 = sbr.rel (0) target = $region5
  $region4: #{sketchanet_loss.11} parent=0 // pred_region
    _
  $region5: #{sketchanet_loss.11} parent=0 // pred_fallthru
    _
  // Predicated region
  $region6: #{sketchanet_loss.11} parent=0 // pred_check
    _
  $region7: #{sketchanet_loss.11} parent=0 // pred_check_branch
    %11 = sbr.rel (0) target = $region9
  $region8: #{sketchanet_loss.11} parent=0 // pred_region
    _
  $region9: #{sketchanet_loss.11} parent=0 // pred_fallthru
    _
  // Predicated region
  $region10: #{sketchanet_loss.11} parent=0 // pred_check
    _
  $region11: #{sketchanet_loss.11} parent=0 // pred_check_branch
    %13 = sbr.rel (0) target = $region13
  $region12: #{sketchanet_loss.11} parent=0 // pred_region
    _
  $region13: #{sketchanet_loss.11} parent=0 // pred_fallthru
    _
  %v15 = vld [vmem:[%s0] sm:$0xf]
  %v16 = vld [vmem:[%s0 + $0x4] sm:$0xf]
  %v17 = vld [vmem:[%s0 + $0x8] sm:$0xf]
  %v18 = vld [vmem:[%s0 + $0xc] sm:$0xf]
  %v19 = vld [vmem:[%s0 + $0x10] sm:$0xf]
  %v20 = vld [vmem:[%s0 + $0x14] sm:$0xf]
  %v21 = vld [vmem:[%s0 + $0x18] sm:$0xf]
  %v22 = vld [vmem:[%s0 + $0x1c] sm:$0xf]
  %v23 = vld [vmem:[%s0 + $0x20] sm:$0xf]
  %v24 = vld [vmem:[%s0 + $0x24] sm:$0xf]
  %v25 = vld [vmem:[%s0 + $0x28] sm:$0xf]
  %v26 = vld [vmem:[%s0 + $0x2c] sm:$0xf]
  %v27 = vld [vmem:[%s0 + $0x30] sm:$0xf]
  %v28 = vld [vmem:[%s0 + $0x34] sm:$0xf]
  %v29 = vld [vmem:[%s0 + $0x38] sm:$0xf]
  %v30 = vld [vmem:[%s0 + $0x3c] sm:$0xf]
  %v31 = vld [vmem:[%s0 + $0x40] sm:$0xf]
  %v32 = vld [vmem:[%s0 + $0x44] sm:$0xf]
  %v33 = vld [vmem:[%s0 + $0x48] sm:$0xf]
  %v34 = vld [vmem:[%s0 + $0x4c] sm:$0xf]
  %v35 = vld [vmem:[%s0 + $0x50] sm:$0xf]
  %v36 = vld [vmem:[%s0 + $0x54] sm:$0xf]
  %v37 = vld [vmem:[%s0 + $0x58] sm:$0xf]
  %v38 = vld [vmem:[%s0 + $0x5c] sm:$0xf]
  %v39 = vld [vmem:[%s0 + $0x60] sm:$0xf]
  %v40 = vld [vmem:[%s0 + $0x64] sm:$0xf]
  %v41 = vld [vmem:[%s0 + $0x68] sm:$0xf]
  %v42 = vld [vmem:[%s0 + $0x6c] sm:$0xf]
  %v43 = vld [vmem:[%s0 + $0x70] sm:$0xf]
  %v44 = vld [vmem:[%s0 + $0x74] sm:$0xf]
  %v45 = vld [vmem:[%s0 + $0x78] sm:$0xf]
  %v46 = vld [vmem:[%s0 + $0x7c] sm:$0xf]
  %v47 = vld [vmem:[%s1] sm:$0xf]
  %v48 = vld [vmem:[%s1 + $0x4] sm:$0xf]
  %v49 = vld [vmem:[%s1 + $0x8] sm:$0xf]
  %v50 = vld [vmem:[%s1 + $0xc] sm:$0xf]
  %v51 = vld [vmem:[%s1 + $0x10] sm:$0xf]
  %v52 = vld [vmem:[%s1 + $0x14] sm:$0xf]
  %v53 = vld [vmem:[%s1 + $0x18] sm:$0xf]
  %v54 = vld [vmem:[%s1 + $0x1c] sm:$0xf]
  %v55 = vld [vmem:[%s1 + $0x20] sm:$0xf]
  %v56 = vld [vmem:[%s2] sm:$0x1]
  %v58 = vlaneseq
  %v59 = vshrl.u32 %v58, 7
  %v60 = vsub.s32 0, %v59
  %v61 = vrot.slane %v56, %v60
  %v95 = vunpack.c.l.b16 %v15
  %v96 = vunpack.c.l.b16 %v16
  %v97 = vunpack.c.l.b16 %v17
  %v98 = vunpack.c.l.b16 %v18
  %v99 = vunpack.c.l.b16 %v19
  %v100 = vunpack.c.l.b16 %v20
  %v101 = vunpack.c.l.b16 %v21
  %v102 = vunpack.c.l.b16 %v22
  %v103 = vunpack.c.l.b16 %v23
  %v104 = vunpack.c.l.b16 %v24
  %v105 = vunpack.c.l.b16 %v25
  %v106 = vunpack.c.l.b16 %v26
  %v107 = vunpack.c.l.b16 %v27
  %v108 = vunpack.c.l.b16 %v28
  %v109 = vunpack.c.l.b16 %v29
  %v110 = vunpack.c.l.b16 %v30
  %v111 = vunpack.c.l.b16 %v31
  %v112 = vunpack.c.l.b16 %v32
  %v113 = vunpack.c.l.b16 %v33
  %v114 = vunpack.c.l.b16 %v34
  %v115 = vunpack.c.l.b16 %v35
  %v116 = vunpack.c.l.b16 %v36
  %v117 = vunpack.c.l.b16 %v37
  %v118 = vunpack.c.l.b16 %v38
  %v119 = vunpack.c.l.b16 %v39
  %v120 = vunpack.c.l.b16 %v40
  %v121 = vunpack.c.l.b16 %v41
  %v122 = vunpack.c.l.b16 %v42
  %v123 = vunpack.c.l.b16 %v43
  %v124 = vunpack.c.l.b16 %v44
  %v125 = vunpack.c.l.b16 %v45
  %v126 = vunpack.c.l.b16 %v46
  %v127 = vpack.c.b16 %v96, %v95
  %v128 = vpack.c.b16 %v98, %v97
  %v129 = vpack.c.b16 %v100, %v99
  %v130 = vpack.c.b16 %v102, %v101
  %v131 = vpack.c.b16 %v104, %v103
  %v132 = vpack.c.b16 %v106, %v105
  %v133 = vpack.c.b16 %v108, %v107
  %v134 = vpack.c.b16 %v110, %v109
  %v135 = vpack.c.b16 %v112, %v111
  %v136 = vpack.c.b16 %v114, %v113
  %v137 = vpack.c.b16 %v116, %v115
  %v138 = vpack.c.b16 %v118, %v117
  %v139 = vpack.c.b16 %v120, %v119
  %v140 = vpack.c.b16 %v122, %v121
  %v141 = vpack.c.b16 %v124, %v123
  %v142 = vpack.c.b16 %v126, %v125
  %v152 = vunpack.c.l.b16 %v47
  %v153 = vunpack.c.l.b16 %v48
  %v154 = vunpack.c.l.b16 %v49
  %v155 = vunpack.c.l.b16 %v50
  %v156 = vunpack.c.l.b16 %v51
  %v157 = vunpack.c.l.b16 %v52
  %v158 = vunpack.c.l.b16 %v53
  %v159 = vunpack.c.l.b16 %v54
  %v160 = vunpack.c.l.b16 %v55
  %v161 = vpack.c.b16 %v153, %v152
  %v162 = vpack.c.b16 %v155, %v154
  %v163 = vpack.c.b16 %v157, %v156
  %v164 = vpack.c.b16 %v159, %v158
  %v165 = vpack.c.b16 %v160, %v160
  %vm170 = vcmask 588800
  %v172 = vsel %vm170, %v127, 0
  %v175 = vsel %vm170, %v128, 0
  %v178 = vsel %vm170, %v129, 0
  %v181 = vsel %vm170, %v130, 0
  %v184 = vsel %vm170, %v131, 0
  %v187 = vsel %vm170, %v132, 0
  %v190 = vsel %vm170, %v133, 0
  %v193 = vsel %vm170, %v134, 0
  %v196 = vsel %vm170, %v135, 0
  %v199 = vsel %vm170, %v136, 0
  %v202 = vsel %vm170, %v137, 0
  %v205 = vsel %vm170, %v138, 0
  %v208 = vsel %vm170, %v139, 0
  %v211 = vsel %vm170, %v140, 0
  %v214 = vsel %vm170, %v141, 0
  %v217 = vsel %vm170, %v142, 0
  %vm219 = vcmask 1043456
  %v221 = vsel %vm219, %v165, 0
  %223 = vmatprep.subr.bf16.mxu0 0
  %224 = vmatpush1.bf16.msra.mxu0 %v161
  %225 = vmatprep.subr.bf16.mxu0 0
  %226 = vmatpush1.bf16.msra.mxu0 %v162
  %227 = vmatprep.subr.bf16.mxu0 0
  %228 = vmatpush1.bf16.msra.mxu0 %v163
  %229 = vmatprep.subr.bf16.mxu0 0
  %230 = vmatpush1.bf16.msra.mxu0 %v164
  %231 = vmatprep.subr.bf16.mxu0 0
  %232 = vmatpush1.bf16.msra.mxu0 %v221
  %233 = vmatprep.subr.bf16.mxu0 0
  %234 = vmatpush1.bf16.msra.mxu0 0
  %235 = vmatprep.subr.bf16.mxu0 0
  %236 = vmatpush1.bf16.msra.mxu0 0
  %237 = vmatprep.subr.bf16.mxu0 0
  %238 = vmatpush1.bf16.msra.mxu0 0
  %239 = vmatprep.subr.bf16.mxu0 0
  %240 = vmatpush1.bf16.msra.mxu0 0
  %241 = vmatprep.subr.bf16.mxu0 0
  %242 = vmatpush1.bf16.msra.mxu0 0
  %243 = vmatprep.subr.bf16.mxu0 0
  %244 = vmatpush1.bf16.msra.mxu0 0
  %245 = vmatprep.subr.bf16.mxu0 0
  %246 = vmatpush1.bf16.msra.mxu0 0
  %247 = vmatprep.subr.bf16.mxu0 0
  %248 = vmatpush1.bf16.msra.mxu0 0
  %249 = vmatprep.subr.bf16.mxu0 0
  %250 = vmatpush1.bf16.msra.mxu0 0
  %251 = vmatprep.subr.bf16.mxu0 0
  %252 = vmatpush1.bf16.msra.mxu0 0
  %253 = vmatprep.subr.bf16.mxu0 0
  %254 = vmatpush1.bf16.msra.mxu0 0
  %255 = vmatprep.mubr.bf16.mxu0 0
  %256 = vmatmul.mubr.bf16.gmra.mrb[0].mxu0 %v172
  %v257 = vpop.f32.mrb[0].mxu0
  %v258 = vadd.f32 %v61, %v257
  %v259 = vpop.f32.mrb[0].mxu0
  %v260 = vpop.f32.mrb[0].mxu0
  %v261 = vadd.f32 %v61, %v260
  %v262 = vpop.f32.mrb[0].mxu0
  %263 = vmatprep.mubr.bf16.mxu0 0
  %264 = vmatmul.mubr.bf16.gmra.mrb[0].mxu0 %v175
  %v265 = vpop.f32.mrb[0].mxu0
  %v266 = vadd.f32 %v61, %v265
  %v267 = vpop.f32.mrb[0].mxu0
  %v268 = vpop.f32.mrb[0].mxu0
  %v269 = vadd.f32 %v61, %v268
  %v270 = vpop.f32.mrb[0].mxu0
  %271 = vmatprep.mubr.bf16.mxu0 0
  %272 = vmatmul.mubr.bf16.gmra.mrb[0].mxu0 %v178
  %v273 = vpop.f32.mrb[0].mxu0
  %v274 = vadd.f32 %v61, %v273
  %v275 = vpop.f32.mrb[0].mxu0
  %v276 = vpop.f32.mrb[0].mxu0
  %v277 = vadd.f32 %v61, %v276
  %v278 = vpop.f32.mrb[0].mxu0
  %279 = vmatprep.mubr.bf16.mxu0 0
  %280 = vmatmul.mubr.bf16.gmra.mrb[0].mxu0 %v181
  %v281 = vpop.f32.mrb[0].mxu0
  %v282 = vadd.f32 %v61, %v281
  %v283 = vpop.f32.mrb[0].mxu0
  %v284 = vpop.f32.mrb[0].mxu0
  %v285 = vadd.f32 %v61, %v284
  %v286 = vpop.f32.mrb[0].mxu0
  %287 = vmatprep.mubr.bf16.mxu0 0
  %288 = vmatmul.mubr.bf16.gmra.mrb[0].mxu0 %v184
  %v289 = vpop.f32.mrb[0].mxu0
  %v290 = vadd.f32 %v61, %v289
  %v291 = vpop.f32.mrb[0].mxu0
  %v292 = vpop.f32.mrb[0].mxu0
  %v293 = vadd.f32 %v61, %v292
  %v294 = vpop.f32.mrb[0].mxu0
  %295 = vmatprep.mubr.bf16.mxu0 0
  %296 = vmatmul.mubr.bf16.gmra.mrb[0].mxu0 %v187
  %v297 = vpop.f32.mrb[0].mxu0
  %v298 = vadd.f32 %v61, %v297
  %v299 = vpop.f32.mrb[0].mxu0
  %v300 = vpop.f32.mrb[0].mxu0
  %v301 = vadd.f32 %v61, %v300
  %v302 = vpop.f32.mrb[0].mxu0
  %303 = vmatprep.mubr.bf16.mxu0 0
  %304 = vmatmul.mubr.bf16.gmra.mrb[0].mxu0 %v190
  %v305 = vpop.f32.mrb[0].mxu0
  %v306 = vadd.f32 %v61, %v305
  %v307 = vpop.f32.mrb[0].mxu0
  %v308 = vpop.f32.mrb[0].mxu0
  %v309 = vadd.f32 %v61, %v308
  %v310 = vpop.f32.mrb[0].mxu0
  %311 = vmatprep.mubr.bf16.mxu0 0
  %312 = vmatmul.mubr.bf16.gmra.mrb[0].mxu0 %v193
  %v313 = vpop.f32.mrb[0].mxu0
  %v314 = vadd.f32 %v61, %v313
  %v315 = vpop.f32.mrb[0].mxu0
  %v316 = vpop.f32.mrb[0].mxu0
  %v317 = vadd.f32 %v61, %v316
  %v318 = vpop.f32.mrb[0].mxu0
  %319 = vmatprep.mubr.bf16.mxu0 0
  %320 = vmatmul.mubr.bf16.gmra.mrb[0].mxu0 %v196
  %v321 = vpop.f32.mrb[0].mxu0
  %v322 = vadd.f32 %v61, %v321
  %v323 = vpop.f32.mrb[0].mxu0
  %v324 = vpop.f32.mrb[0].mxu0
  %v325 = vadd.f32 %v61, %v324
  %v326 = vpop.f32.mrb[0].mxu0
  %327 = vmatprep.mubr.bf16.mxu0 0
  %328 = vmatmul.mubr.bf16.gmra.mrb[0].mxu0 %v199
  %v329 = vpop.f32.mrb[0].mxu0
  %v330 = vadd.f32 %v61, %v329
  %v331 = vpop.f32.mrb[0].mxu0
  %v332 = vpop.f32.mrb[0].mxu0
  %v333 = vadd.f32 %v61, %v332
  %v334 = vpop.f32.mrb[0].mxu0
  %335 = vmatprep.mubr.bf16.mxu0 0
  %336 = vmatmul.mubr.bf16.gmra.mrb[0].mxu0 %v202
  %v337 = vpop.f32.mrb[0].mxu0
  %v338 = vadd.f32 %v61, %v337
  %v339 = vpop.f32.mrb[0].mxu0
  %v340 = vpop.f32.mrb[0].mxu0
  %v341 = vadd.f32 %v61, %v340
  %v342 = vpop.f32.mrb[0].mxu0
  %343 = vmatprep.mubr.bf16.mxu0 0
  %344 = vmatmul.mubr.bf16.gmra.mrb[0].mxu0 %v205
  %v345 = vpop.f32.mrb[0].mxu0
  %v346 = vadd.f32 %v61, %v345
  %v347 = vpop.f32.mrb[0].mxu0
  %v348 = vpop.f32.mrb[0].mxu0
  %v349 = vadd.f32 %v61, %v348
  %v350 = vpop.f32.mrb[0].mxu0
  %351 = vmatprep.mubr.bf16.mxu0 0
  %352 = vmatmul.mubr.bf16.gmra.mrb[0].mxu0 %v208
  %v353 = vpop.f32.mrb[0].mxu0
  %v354 = vadd.f32 %v61, %v353
  %v355 = vpop.f32.mrb[0].mxu0
  %v356 = vpop.f32.mrb[0].mxu0
  %v357 = vadd.f32 %v61, %v356
  %v358 = vpop.f32.mrb[0].mxu0
  %359 = vmatprep.mubr.bf16.mxu0 0
  %360 = vmatmul.mubr.bf16.gmra.mrb[0].mxu0 %v211
  %v361 = vpop.f32.mrb[0].mxu0
  %v362 = vadd.f32 %v61, %v361
  %v363 = vpop.f32.mrb[0].mxu0
  %v364 = vpop.f32.mrb[0].mxu0
  %v365 = vadd.f32 %v61, %v364
  %v366 = vpop.f32.mrb[0].mxu0
  %367 = vmatprep.mubr.bf16.mxu0 0
  %368 = vmatmul.mubr.bf16.gmra.mrb[0].mxu0 %v214
  %v369 = vpop.f32.mrb[0].mxu0
  %v370 = vadd.f32 %v61, %v369
  %v371 = vpop.f32.mrb[0].mxu0
  %v372 = vpop.f32.mrb[0].mxu0
  %v373 = vadd.f32 %v61, %v372
  %v374 = vpop.f32.mrb[0].mxu0
  %375 = vmatprep.mubr.bf16.mxu0 0
  %376 = vmatmul.mubr.bf16.gmra.mrb[0].mxu0 %v217
  %v377 = vpop.f32.mrb[0].mxu0
  %v378 = vadd.f32 %v61, %v377
  %v379 = vpop.f32.mrb[0].mxu0
  %v380 = vpop.f32.mrb[0].mxu0
  %v381 = vadd.f32 %v61, %v380
  %v382 = vpop.f32.mrb[0].mxu0
  %383 = vdwg.mxu0
  %v384 = vmax.f32 %v258, 0.0
  %v385 = vmax.f32 %v261, 0.0
  %v386 = vmax.f32 %v266, 0.0
  %v387 = vmax.f32 %v269, 0.0
  %v388 = vmax.f32 %v274, 0.0
  %v389 = vmax.f32 %v277, 0.0
  %v390 = vmax.f32 %v282, 0.0
  %v391 = vmax.f32 %v285, 0.0
  %v392 = vmax.f32 %v290, 0.0
  %v393 = vmax.f32 %v293, 0.0
  %v394 = vmax.f32 %v298, 0.0
  %v395 = vmax.f32 %v301, 0.0
  %v396 = vmax.f32 %v306, 0.0
  %v397 = vmax.f32 %v309, 0.0
  %v398 = vmax.f32 %v314, 0.0
  %v399 = vmax.f32 %v317, 0.0
  %v400 = vmax.f32 %v322, 0.0
  %v401 = vmax.f32 %v325, 0.0
  %v402 = vmax.f32 %v330, 0.0
  %v403 = vmax.f32 %v333, 0.0
  %v404 = vmax.f32 %v338, 0.0
  %v405 = vmax.f32 %v341, 0.0
  %v406 = vmax.f32 %v346, 0.0
  %v407 = vmax.f32 %v349, 0.0
  %v408 = vmax.f32 %v354, 0.0
  %v409 = vmax.f32 %v357, 0.0
  %v410 = vmax.f32 %v362, 0.0
  %v411 = vmax.f32 %v365, 0.0
  %v412 = vmax.f32 %v370, 0.0
  %v413 = vmax.f32 %v373, 0.0
  %v414 = vmax.f32 %v378, 0.0
  %v415 = vmax.f32 %v381, 0.0
  %v416 = vpack.c.bf16 %v385, %v384
  %v417 = vpack.c.bf16 %v387, %v386
  %v418 = vpack.c.bf16 %v389, %v388
  %v419 = vpack.c.bf16 %v391, %v390
  %v420 = vpack.c.bf16 %v393, %v392
  %v421 = vpack.c.bf16 %v395, %v394
  %v422 = vpack.c.bf16 %v397, %v396
  %v423 = vpack.c.bf16 %v399, %v398
  %v424 = vpack.c.bf16 %v401, %v400
  %v425 = vpack.c.bf16 %v403, %v402
  %v426 = vpack.c.bf16 %v405, %v404
  %v427 = vpack.c.bf16 %v407, %v406
  %v428 = vpack.c.bf16 %v409, %v408
  %v429 = vpack.c.bf16 %v411, %v410
  %v430 = vpack.c.bf16 %v413, %v412
  %v431 = vpack.c.bf16 %v415, %v414
  %v448 = vunpack.c.l.b16 %v416
  %v449 = vunpack.c.h.b16 %v416
  %v450 = vunpack.c.l.b16 %v417
  %v451 = vunpack.c.h.b16 %v417
  %v452 = vunpack.c.l.b16 %v418
  %v453 = vunpack.c.h.b16 %v418
  %v454 = vunpack.c.l.b16 %v419
  %v455 = vunpack.c.h.b16 %v419
  %v456 = vunpack.c.l.b16 %v420
  %v457 = vunpack.c.h.b16 %v420
  %v458 = vunpack.c.l.b16 %v421
  %v459 = vunpack.c.h.b16 %v421
  %v460 = vunpack.c.l.b16 %v422
  %v461 = vunpack.c.h.b16 %v422
  %v462 = vunpack.c.l.b16 %v423
  %v463 = vunpack.c.h.b16 %v423
  %v464 = vunpack.c.l.b16 %v424
  %v465 = vunpack.c.h.b16 %v424
  %v466 = vunpack.c.l.b16 %v425
  %v467 = vunpack.c.h.b16 %v425
  %v468 = vunpack.c.l.b16 %v426
  %v469 = vunpack.c.h.b16 %v426
  %v470 = vunpack.c.l.b16 %v427
  %v471 = vunpack.c.h.b16 %v427
  %v472 = vunpack.c.l.b16 %v428
  %v473 = vunpack.c.h.b16 %v428
  %v474 = vunpack.c.l.b16 %v429
  %v475 = vunpack.c.h.b16 %v429
  %v476 = vunpack.c.l.b16 %v430
  %v477 = vunpack.c.h.b16 %v430
  %v478 = vunpack.c.l.b16 %v431
  %v479 = vunpack.c.h.b16 %v431
  %v480 = vpack.c.b16 %v448, %v448
  %v481 = vpack.c.b16 %v449, %v449
  %v482 = vpack.c.b16 %v450, %v450
  %v483 = vpack.c.b16 %v451, %v451
  %v484 = vpack.c.b16 %v452, %v452
  %v485 = vpack.c.b16 %v453, %v453
  %v486 = vpack.c.b16 %v454, %v454
  %v487 = vpack.c.b16 %v455, %v455
  %v488 = vpack.c.b16 %v456, %v456
  %v489 = vpack.c.b16 %v457, %v457
  %v490 = vpack.c.b16 %v458, %v458
  %v491 = vpack.c.b16 %v459, %v459
  %v492 = vpack.c.b16 %v460, %v460
  %v493 = vpack.c.b16 %v461, %v461
  %v494 = vpack.c.b16 %v462, %v462
  %v495 = vpack.c.b16 %v463, %v463
  %v496 = vpack.c.b16 %v464, %v464
  %v497 = vpack.c.b16 %v465, %v465
  %v498 = vpack.c.b16 %v466, %v466
  %v499 = vpack.c.b16 %v467, %v467
  %v500 = vpack.c.b16 %v468, %v468
  %v501 = vpack.c.b16 %v469, %v469
  %v502 = vpack.c.b16 %v470, %v470
  %v503 = vpack.c.b16 %v471, %v471
  %v504 = vpack.c.b16 %v472, %v472
  %v505 = vpack.c.b16 %v473, %v473
  %v506 = vpack.c.b16 %v474, %v474
  %v507 = vpack.c.b16 %v475, %v475
  %v508 = vpack.c.b16 %v476, %v476
  %v509 = vpack.c.b16 %v477, %v477
  %v510 = vpack.c.b16 %v478, %v478
  %v511 = vpack.c.b16 %v479, %v479
  %vm544 = vcmask 125952
  %545 = vst.msk [vmem:[%s3] sm:$0xf] %vm544, %v480
  %546 = vst.msk [vmem:[%s3 + $0x4] sm:$0xf] %vm544, %v481
  %547 = vst.msk [vmem:[%s3 + $0x8] sm:$0xf] %vm544, %v482
  %548 = vst.msk [vmem:[%s3 + $0xc] sm:$0xf] %vm544, %v483
  %549 = vst.msk [vmem:[%s3 + $0x10] sm:$0xf] %vm544, %v484
  %550 = vst.msk [vmem:[%s3 + $0x14] sm:$0xf] %vm544, %v485
  %551 = vst.msk [vmem:[%s3 + $0x18] sm:$0xf] %vm544, %v486
  %552 = vst.msk [vmem:[%s3 + $0x1c] sm:$0xf] %vm544, %v487
  %553 = vst.msk [vmem:[%s3 + $0x20] sm:$0xf] %vm544, %v488
  %554 = vst.msk [vmem:[%s3 + $0x24] sm:$0xf] %vm544, %v489
  %555 = vst.msk [vmem:[%s3 + $0x28] sm:$0xf] %vm544, %v490
  %556 = vst.msk [vmem:[%s3 + $0x2c] sm:$0xf] %vm544, %v491
  %557 = vst.msk [vmem:[%s3 + $0x30] sm:$0xf] %vm544, %v492
  %558 = vst.msk [vmem:[%s3 + $0x34] sm:$0xf] %vm544, %v493
  %559 = vst.msk [vmem:[%s3 + $0x38] sm:$0xf] %vm544, %v494
  %560 = vst.msk [vmem:[%s3 + $0x3c] sm:$0xf] %vm544, %v495
  %561 = vst.msk [vmem:[%s3 + $0x40] sm:$0xf] %vm544, %v496
  %562 = vst.msk [vmem:[%s3 + $0x44] sm:$0xf] %vm544, %v497
  %563 = vst.msk [vmem:[%s3 + $0x48] sm:$0xf] %vm544, %v498
  %564 = vst.msk [vmem:[%s3 + $0x4c] sm:$0xf] %vm544, %v499
  %565 = vst.msk [vmem:[%s3 + $0x50] sm:$0xf] %vm544, %v500
  %566 = vst.msk [vmem:[%s3 + $0x54] sm:$0xf] %vm544, %v501
  %567 = vst.msk [vmem:[%s3 + $0x58] sm:$0xf] %vm544, %v502
  %568 = vst.msk [vmem:[%s3 + $0x5c] sm:$0xf] %vm544, %v503
  %569 = vst.msk [vmem:[%s3 + $0x60] sm:$0xf] %vm544, %v504
  %570 = vst.msk [vmem:[%s3 + $0x64] sm:$0xf] %vm544, %v505
  %571 = vst.msk [vmem:[%s3 + $0x68] sm:$0xf] %vm544, %v506
  %572 = vst.msk [vmem:[%s3 + $0x6c] sm:$0xf] %vm544, %v507
  %573 = vst.msk [vmem:[%s3 + $0x70] sm:$0xf] %vm544, %v508
  %574 = vst.msk [vmem:[%s3 + $0x74] sm:$0xf] %vm544, %v509
  %575 = vst.msk [vmem:[%s3 + $0x78] sm:$0xf] %vm544, %v510
  %576 = vst.msk [vmem:[%s3 + $0x7c] sm:$0xf] %vm544, %v511
  // Predicated region
  $region14: #{sketchanet_loss.11} parent=0 // pred_check
    _
  $region15: #{sketchanet_loss.11} parent=0 // pred_check_branch
    %578 = sbr.rel (0) target = $region17
  $region16: #{sketchanet_loss.11} parent=0 // pred_region
    _
  $region17: #{sketchanet_loss.11} parent=0 // pred_fallthru
    _
  // Predicated region
  $region18: #{sketchanet_loss.11} parent=0 // pred_check
    _
  $region19: #{sketchanet_loss.11} parent=0 // pred_check_branch
    %580 = sbr.rel (0) target = $region21
  $region20: #{sketchanet_loss.11} parent=0 // pred_region
    _
  $region21: #{sketchanet_loss.11} parent=0 // pred_fallthru
    _

// kernel: sketchanet_loss.16
$region0: #{sketchanet_loss.16}
  #allocation0 [shape = 'u32[]', space=smem, size = 0x4, offset = 0x4, fixed_abs, tag = 'smem constant byte address 0x4 - core index']
  #allocation1 [shape = 'u32[144,128]{1,0:T(1,128)}', space=vmem, size = 0x12000, scoped, tag = 'internal scratch']
  %s0 = inlined_call_operand.vmem [shape: bf16[16,128], index: 0, kind: input, shape index: {}]
  %s1 = inlined_call_operand.vmem [shape: bf16[16,128], index: 1, kind: input, shape index: {}]
  %s2 = inlined_call_operand.hbm [shape: f32[1,1], index: 2, kind: output, shape index: {}]
  %s3 = sld [smem:[#allocation0]]
  $region22: #{sketchanet_loss.16} parent=0
    _
  %s5 = ssub.s32 1, %s3
  %s6 = scalar_select 0, %s5, %s3
  $region1: #{sketchanet_loss.16} parent=0
    #allocation2 [shape = 'u8[512]{0}', space=vmem, size = 0x400, scoped, tag = 'output window, operand 0, single buffered']
    #allocation3 [shape = 's32[1]{0}', space=sflag, size = 0x4, scoped, tag = 'scoped memory for sketchanet_loss.16']
    %7 = vsyncpa [#allocation3], 0
    // Predicated region
    $region2: #{sketchanet_loss.16} parent=1 // pred_check
      _
    $region3: #{sketchanet_loss.16} parent=1 // pred_check_branch
      %9 = sbr.rel (0) target = $region5
    $region4: #{sketchanet_loss.16} parent=1 // pred_region
      _
    $region5: #{sketchanet_loss.16} parent=1 // pred_fallthru
      _
    // Predicated region
    $region6: #{sketchanet_loss.16} parent=1 // pred_check
      _
    $region7: #{sketchanet_loss.16} parent=1 // pred_check_branch
      %11 = sbr.rel (0) target = $region9
    $region8: #{sketchanet_loss.16} parent=1 // pred_region
      _
    $region9: #{sketchanet_loss.16} parent=1 // pred_fallthru
      _
    %p12 = scmp.eq.s32.totalorder 0, 0
    // Predicated region
    $region10: #{sketchanet_loss.16} parent=1 // pred_check
      %p13 = pneg %p12
    $region11: #{sketchanet_loss.16} parent=1 // pred_check_branch
      %15 = sbr.rel (%p13) target = $region13
    $region12: #{sketchanet_loss.16} parent=1 // pred_region
      %vm16 = vcmask 0
      %17 = vst.msk [vmem:[#allocation2] sm:$0x1] %vm16, 0.0
    $region13: #{sketchanet_loss.16} parent=1 // pred_fallthru
      _
    %v18 = vld [vmem:[%s0] sm:$0xf]
    %v19 = vld [vmem:[%s0 + $0x4] sm:$0xf]
    %v20 = vunpack.c.l.bf16 %v18
    %v21 = vunpack.c.l.bf16 %v19
    %v22 = vld [vmem:[%s1] sm:$0xf]
    %v23 = vld [vmem:[%s1 + $0x4] sm:$0xf]
    %v24 = vunpack.c.l.bf16 %v22
    %v25 = vunpack.c.l.bf16 %v23
    %v26 = vsub.f32 %v20, %v24
    %v27 = vsub.f32 %v21, %v25
    %v28 = vld [vmem:[#allocation2] sm:$0x1]
    %v29 = vand.u32 2147483647, %v26
    %v30 = vand.u32 2147483647, %v27
    %v31 = vadd.f32 %v29, %v30
    %32 = vadd.xlane.f32.xlu0 %v31
    %v33 = vpop.xlane.xlu0 %32
    %v34 = vrot.slane %v33, 4
    %v35 = vadd.f32 %v33, %v34
    %v36 = vrot.slane %v35, 2
    %v37 = vadd.f32 %v35, %v36
    %v38 = vrot.slane %v37, 1
    %v39 = vadd.f32 %v37, %v38
    %s40 = vtos %v39
    %v41 = vstv %s40
    %v42 = vadd.f32 %v28, %v41
    %vm43 = vcmask 0
    %44 = vst.msk [vmem:[#allocation2] sm:$0x1] %vm43, %v42
    // Predicated region
    $region14: #{sketchanet_loss.16} parent=1 // pred_check
      _
    $region15: #{sketchanet_loss.16} parent=1 // pred_check_branch
      %46 = sbr.rel (0) target = $region17
    $region16: #{sketchanet_loss.16} parent=1 // pred_region
      %s48 = ssub.s32 16, 16
      %49 = vsyncadd [#allocation3], %s48
      %s51 = sshll.u32 [#allocation2], 4
      %s52 = int_to_ptr.vmem [resolvable:$true] %s51
      %54 = dma.vmem_to_hbm [thread:$0]  %s52, 16, %s2, [#allocation3]
    $region17: #{sketchanet_loss.16} parent=1 // pred_fallthru
      _
    // Predicated region
    $region18: #{sketchanet_loss.16} parent=1 // pred_check
      _
    $region19: #{sketchanet_loss.16} parent=1 // pred_check_branch
      %56 = sbr.rel (0) target = $region21
    $region20: #{sketchanet_loss.16} parent=1 // pred_region
      %57 = dma.done [#allocation3], 16
    $region21: #{sketchanet_loss.16} parent=1 // pred_fallthru
      _
    %58 = vsyncpa [#allocation3], 1

// kernel: sketchanet_loss.12
$region0: #{sketchanet_loss.12}
  #allocation0 [shape = 'u32[]', space=smem, size = 0x4, offset = 0x4, fixed_abs, tag = 'smem constant byte address 0x4 - core index']
  #allocation1 [shape = 'u32[144,128]{1,0:T(1,128)}', space=vmem, size = 0x12000, scoped, tag = 'internal scratch']
  %s0 = inlined_call_operand.vmem [shape: bf16[256,144], index: 0, kind: input, shape index: {}]
  %s1 = inlined_call_operand.vmem [shape: bf16[144,16], index: 1, kind: input, shape index: {}]
  %s2 = inlined_call_operand.vmem [shape: f32[1,16], index: 2, kind: input, shape index: {}]
  %s3 = inlined_call_operand.vmem [shape: bf16[256,16], index: 3, kind: output, shape index: {}]
  %s4 = sld [smem:[#allocation0]]
  $region22: #{sketchanet_loss.12} parent=0
    _
  %s6 = ssub.s32 1, %s4
  %s7 = scalar_select 0, %s6, %s4
  // Predicated region
  $region2: #{sketchanet_loss.12} parent=0 // pred_check
    _
  $region3: #{sketchanet_loss.12} parent=0 // pred_check_branch
    %9 = sbr.rel (0) target = $region5
  $region4: #{sketchanet_loss.12} parent=0 // pred_region
    _
  $region5: #{sketchanet_loss.12} parent=0 // pred_fallthru
    _
  // Predicated region
  $region6: #{sketchanet_loss.12} parent=0 // pred_check
    _
  $region7: #{sketchanet_loss.12} parent=0 // pred_check_branch
    %11 = sbr.rel (0) target = $region9
  $region8: #{sketchanet_loss.12} parent=0 // pred_region
    _
  $region9: #{sketchanet_loss.12} parent=0 // pred_fallthru
    _
  // Predicated region
  $region10: #{sketchanet_loss.12} parent=0 // pred_check
    _
  $region11: #{sketchanet_loss.12} parent=0 // pred_check_branch
    %13 = sbr.rel (0) target = $region13
  $region12: #{sketchanet_loss.12} parent=0 // pred_region
    _
  $region13: #{sketchanet_loss.12} parent=0 // pred_fallthru
    _
  %v15 = vld [vmem:[%s0] sm:$0xff]
  %v16 = vld [vmem:[%s0 + $0x8] sm:$0xff]
  %v17 = vld [vmem:[%s0 + $0x10] sm:$0xff]
  %v18 = vld [vmem:[%s0 + $0x18] sm:$0xff]
  %v19 = vld [vmem:[%s0 + $0x20] sm:$0xff]
  %v20 = vld [vmem:[%s0 + $0x28] sm:$0xff]
  %v21 = vld [vmem:[%s0 + $0x30] sm:$0xff]
  %v22 = vld [vmem:[%s0 + $0x38] sm:$0xff]
  %v23 = vld [vmem:[%s0 + $0x40] sm:$0xff]
  %v24 = vld [vmem:[%s0 + $0x48] sm:$0xff]
  %v25 = vld [vmem:[%s0 + $0x50] sm:$0xff]
  %v26 = vld [vmem:[%s0 + $0x58] sm:$0xff]
  %v27 = vld [vmem:[%s0 + $0x60] sm:$0xff]
  %v28 = vld [vmem:[%s0 + $0x68] sm:$0xff]
  %v29 = vld [vmem:[%s0 + $0x70] sm:$0xff]
  %v30 = vld [vmem:[%s0 + $0x78] sm:$0xff]
  %v31 = vld [vmem:[%s0 + $0x80] sm:$0xff]
  %v32 = vld [vmem:[%s0 + $0x88] sm:$0xff]
  %v33 = vld [vmem:[%s0 + $0x90] sm:$0xff]
  %v34 = vld [vmem:[%s0 + $0x98] sm:$0xff]
  %v35 = vld [vmem:[%s0 + $0xa0] sm:$0xff]
  %v36 = vld [vmem:[%s0 + $0xa8] sm:$0xff]
  %v37 = vld [vmem:[%s0 + $0xb0] sm:$0xff]
  %v38 = vld [vmem:[%s0 + $0xb8] sm:$0xff]
  %v39 = vld [vmem:[%s0 + $0xc0] sm:$0xff]
  %v40 = vld [vmem:[%s0 + $0xc8] sm:$0xff]
  %v41 = vld [vmem:[%s0 + $0xd0] sm:$0xff]
  %v42 = vld [vmem:[%s0 + $0xd8] sm:$0xff]
  %v43 = vld [vmem:[%s0 + $0xe0] sm:$0xff]
  %v44 = vld [vmem:[%s0 + $0xe8] sm:$0xff]
  %v45 = vld [vmem:[%s0 + $0xf0] sm:$0xff]
  %v46 = vld [vmem:[%s0 + $0xf8] sm:$0xff]
  %v47 = vld [vmem:[%s1] sm:$0xf]
  %v48 = vld [vmem:[%s1 + $0x4] sm:$0xf]
  %v49 = vld [vmem:[%s1 + $0x8] sm:$0xf]
  %v50 = vld [vmem:[%s1 + $0xc] sm:$0xf]
  %v51 = vld [vmem:[%s1 + $0x10] sm:$0xf]
  %v52 = vld [vmem:[%s1 + $0x14] sm:$0xf]
  %v53 = vld [vmem:[%s1 + $0x18] sm:$0xf]
  %v54 = vld [vmem:[%s1 + $0x1c] sm:$0xf]
  %v55 = vld [vmem:[%s1 + $0x20] sm:$0xf]
  %v56 = vld [vmem:[%s1 + $0x24] sm:$0xf]
  %v57 = vld [vmem:[%s1 + $0x28] sm:$0xf]
  %v58 = vld [vmem:[%s1 + $0x2c] sm:$0xf]
  %v59 = vld [vmem:[%s1 + $0x30] sm:$0xf]
  %v60 = vld [vmem:[%s1 + $0x34] sm:$0xf]
  %v61 = vld [vmem:[%s1 + $0x38] sm:$0xf]
  %v62 = vld [vmem:[%s1 + $0x3c] sm:$0xf]
  %v63 = vld [vmem:[%s1 + $0x40] sm:$0xf]
  %v64 = vld [vmem:[%s1 + $0x44] sm:$0xf]
  %v65 = vld [vmem:[%s2] sm:$0x1]
  %v67 = vlaneseq
  %v68 = vshrl.u32 %v67, 7
  %v69 = vsub.s32 0, %v68
  %v70 = vrot.slane %v65, %v69
  %v104 = vunpack.c.l.b16 %v15
  %v105 = vunpack.c.h.b16 %v15
  %v106 = vunpack.c.l.b16 %v16
  %v107 = vunpack.c.h.b16 %v16
  %v108 = vunpack.c.l.b16 %v17
  %v109 = vunpack.c.h.b16 %v17
  %v110 = vunpack.c.l.b16 %v18
  %v111 = vunpack.c.h.b16 %v18
  %v112 = vunpack.c.l.b16 %v19
  %v113 = vunpack.c.h.b16 %v19
  %v114 = vunpack.c.l.b16 %v20
  %v115 = vunpack.c.h.b16 %v20
  %v116 = vunpack.c.l.b16 %v21
  %v117 = vunpack.c.h.b16 %v21
  %v118 = vunpack.c.l.b16 %v22
  %v119 = vunpack.c.h.b16 %v22
  %v120 = vunpack.c.l.b16 %v23
  %v121 = vunpack.c.h.b16 %v23
  %v122 = vunpack.c.l.b16 %v24
  %v123 = vunpack.c.h.b16 %v24
  %v124 = vunpack.c.l.b16 %v25
  %v125 = vunpack.c.h.b16 %v25
  %v126 = vunpack.c.l.b16 %v26
  %v127 = vunpack.c.h.b16 %v26
  %v128 = vunpack.c.l.b16 %v27
  %v129 = vunpack.c.h.b16 %v27
  %v130 = vunpack.c.l.b16 %v28
  %v131 = vunpack.c.h.b16 %v28
  %v132 = vunpack.c.l.b16 %v29
  %v133 = vunpack.c.h.b16 %v29
  %v134 = vunpack.c.l.b16 %v30
  %v135 = vunpack.c.h.b16 %v30
  %v136 = vunpack.c.l.b16 %v31
  %v137 = vunpack.c.h.b16 %v31
  %v138 = vunpack.c.l.b16 %v32
  %v139 = vunpack.c.h.b16 %v32
  %v140 = vunpack.c.l.b16 %v33
  %v141 = vunpack.c.h.b16 %v33
  %v142 = vunpack.c.l.b16 %v34
  %v143 = vunpack.c.h.b16 %v34
  %v144 = vunpack.c.l.b16 %v35
  %v145 = vunpack.c.h.b16 %v35
  %v146 = vunpack.c.l.b16 %v36
  %v147 = vunpack.c.h.b16 %v36
  %v148 = vunpack.c.l.b16 %v37
  %v149 = vunpack.c.h.b16 %v37
  %v150 = vunpack.c.l.b16 %v38
  %v151 = vunpack.c.h.b16 %v38
  %v152 = vunpack.c.l.b16 %v39
  %v153 = vunpack.c.h.b16 %v39
  %v154 = vunpack.c.l.b16 %v40
  %v155 = vunpack.c.h.b16 %v40
  %v156 = vunpack.c.l.b16 %v41
  %v157 = vunpack.c.h.b16 %v41
  %v158 = vunpack.c.l.b16 %v42
  %v159 = vunpack.c.h.b16 %v42
  %v160 = vunpack.c.l.b16 %v43
  %v161 = vunpack.c.h.b16 %v43
  %v162 = vunpack.c.l.b16 %v44
  %v163 = vunpack.c.h.b16 %v44
  %v164 = vunpack.c.l.b16 %v45
  %v165 = vunpack.c.h.b16 %v45
  %v166 = vunpack.c.l.b16 %v46
  %v167 = vunpack.c.h.b16 %v46
  %v168 = vpack.c.b16 %v106, %v104
  %v169 = vpack.c.b16 %v107, %v105
  %v170 = vpack.c.b16 %v110, %v108
  %v171 = vpack.c.b16 %v111, %v109
  %v172 = vpack.c.b16 %v114, %v112
  %v173 = vpack.c.b16 %v115, %v113
  %v174 = vpack.c.b16 %v118, %v116
  %v175 = vpack.c.b16 %v119, %v117
  %v176 = vpack.c.b16 %v122, %v120
  %v177 = vpack.c.b16 %v123, %v121
  %v178 = vpack.c.b16 %v126, %v124
  %v179 = vpack.c.b16 %v127, %v125
  %v180 = vpack.c.b16 %v130, %v128
  %v181 = vpack.c.b16 %v131, %v129
  %v182 = vpack.c.b16 %v134, %v132
  %v183 = vpack.c.b16 %v135, %v133
  %v184 = vpack.c.b16 %v138, %v136
  %v185 = vpack.c.b16 %v139, %v137
  %v186 = vpack.c.b16 %v142, %v140
  %v187 = vpack.c.b16 %v143, %v141
  %v188 = vpack.c.b16 %v146, %v144
  %v189 = vpack.c.b16 %v147, %v145
  %v190 = vpack.c.b16 %v150, %v148
  %v191 = vpack.c.b16 %v151, %v149
  %v192 = vpack.c.b16 %v154, %v152
  %v193 = vpack.c.b16 %v155, %v153
  %v194 = vpack.c.b16 %v158, %v156
  %v195 = vpack.c.b16 %v159, %v157
  %v196 = vpack.c.b16 %v162, %v160
  %v197 = vpack.c.b16 %v163, %v161
  %v198 = vpack.c.b16 %v166, %v164
  %v199 = vpack.c.b16 %v167, %v165
  %v234 = vunpack.c.l.b16 %v47
  %v235 = vunpack.c.l.b16 %v48
  %v236 = vunpack.c.l.b16 %v49
  %v237 = vunpack.c.l.b16 %v50
  %v238 = vunpack.c.l.b16 %v51
  %v239 = vunpack.c.l.b16 %v52
  %v240 = vunpack.c.l.b16 %v53
  %v241 = vunpack.c.l.b16 %v54
  %v242 = vunpack.c.l.b16 %v55
  %v243 = vunpack.c.l.b16 %v56
  %v244 = vunpack.c.l.b16 %v57
  %v245 = vunpack.c.l.b16 %v58
  %v246 = vunpack.c.l.b16 %v59
  %v247 = vunpack.c.l.b16 %v60
  %v248 = vunpack.c.l.b16 %v61
  %v249 = vunpack.c.l.b16 %v62
  %v250 = vunpack.c.l.b16 %v63
  %v251 = vunpack.c.l.b16 %v64
  %v252 = vpack.c.b16 %v235, %v234
  %v253 = vpack.c.b16 %v237, %v236
  %v254 = vpack.c.b16 %v239, %v238
  %v255 = vpack.c.b16 %v241, %v240
  %v256 = vpack.c.b16 %v243, %v242
  %v257 = vpack.c.b16 %v245, %v244
  %v258 = vpack.c.b16 %v247, %v246
  %v259 = vpack.c.b16 %v249, %v248
  %v260 = vpack.c.b16 %v251, %v250
  %vm270 = vcmask 130048
  %v272 = vsel %vm270, %v169, 0
  %v275 = vsel %vm270, %v171, 0
  %v278 = vsel %vm270, %v173, 0
  %v281 = vsel %vm270, %v175, 0
  %v284 = vsel %vm270, %v177, 0
  %v287 = vsel %vm270, %v179, 0
  %v290 = vsel %vm270, %v181, 0
  %v293 = vsel %vm270, %v183, 0
  %v296 = vsel %vm270, %v185, 0
  %v299 = vsel %vm270, %v187, 0
  %v302 = vsel %vm270, %v189, 0
  %v305 = vsel %vm270, %v191, 0
  %v308 = vsel %vm270, %v193, 0
  %v311 = vsel %vm270, %v195, 0
  %v314 = vsel %vm270, %v197, 0
  %v317 = vsel %vm270, %v199, 0
  %319 = vmatprep.subr.bf16.mxu0 0
  %320 = vmatpush1.bf16.msra.mxu0 %v252
  %321 = vmatprep.subr.bf16.mxu0 0
  %322 = vmatpush1.bf16.msra.mxu0 %v253
  %323 = vmatprep.subr.bf16.mxu0 0
  %324 = vmatpush1.bf16.msra.mxu0 %v254
  %325 = vmatprep.subr.bf16.mxu0 0
  %326 = vmatpush1.bf16.msra.mxu0 %v255
  %327 = vmatprep.subr.bf16.mxu0 0
  %328 = vmatpush1.bf16.msra.mxu0 %v256
  %329 = vmatprep.subr.bf16.mxu0 0
  %330 = vmatpush1.bf16.msra.mxu0 %v257
  %331 = vmatprep.subr.bf16.mxu0 0
  %332 = vmatpush1.bf16.msra.mxu0 %v258
  %333 = vmatprep.subr.bf16.mxu0 0
  %334 = vmatpush1.bf16.msra.mxu0 %v259
  %335 = vmatprep.subr.bf16.mxu0 0
  %336 = vmatpush1.bf16.msra.mxu0 %v260
  %337 = vmatprep.subr.bf16.mxu0 0
  %338 = vmatpush1.bf16.msra.mxu0 0
  %339 = vmatprep.subr.bf16.mxu0 0
  %340 = vmatpush1.bf16.msra.mxu0 0
  %341 = vmatprep.subr.bf16.mxu0 0
  %342 = vmatpush1.bf16.msra.mxu0 0
  %343 = vmatprep.subr.bf16.mxu0 0
  %344 = vmatpush1.bf16.msra.mxu0 0
  %345 = vmatprep.subr.bf16.mxu0 0
  %346 = vmatpush1.bf16.msra.mxu0 0
  %347 = vmatprep.subr.bf16.mxu0 0
  %348 = vmatpush1.bf16.msra.mxu0 0
  %349 = vmatprep.subr.bf16.mxu0 0
  %350 = vmatpush1.bf16.msra.mxu0 0
  %351 = vmatprep.mubr.bf16.mxu0 %v272
  %352 = vmatmul.mubr.bf16.gmra.mrb[0].mxu0 %v168
  %v353 = vpop.f32.mrb[0].mxu0
  %v354 = vadd.f32 %v70, %v353
  %v355 = vpop.f32.mrb[0].mxu0
  %v356 = vpop.f32.mrb[0].mxu0
  %v357 = vadd.f32 %v70, %v356
  %v358 = vpop.f32.mrb[0].mxu0
  %359 = vmatprep.mubr.bf16.mxu0 %v275
  %360 = vmatmul.mubr.bf16.gmra.mrb[0].mxu0 %v170
  %v361 = vpop.f32.mrb[0].mxu0
  %v362 = vadd.f32 %v70, %v361
  %v363 = vpop.f32.mrb[0].mxu0
  %v364 = vpop.f32.mrb[0].mxu0
  %v365 = vadd.f32 %v70, %v364
  %v366 = vpop.f32.mrb[0].mxu0
  %367 = vmatprep.mubr.bf16.mxu0 %v278
  %368 = vmatmul.mubr.bf16.gmra.mrb[0].mxu0 %v172
  %v369 = vpop.f32.mrb[0].mxu0
  %v370 = vadd.f32 %v70, %v369
  %v371 = vpop.f32.mrb[0].mxu0
  %v372 = vpop.f32.mrb[0].mxu0
  %v373 = vadd.f32 %v70, %v372
  %v374 = vpop.f32.mrb[0].mxu0
  %375 = vmatprep.mubr.bf16.mxu0 %v281
  %376 = vmatmul.mubr.bf16.gmra.mrb[0].mxu0 %v174
  %v377 = vpop.f32.mrb[0].mxu0
  %v378 = vadd.f32 %v70, %v377
  %v379 = vpop.f32.mrb[0].mxu0
  %v380 = vpop.f32.mrb[0].mxu0
  %v381 = vadd.f32 %v70, %v380
  %v382 = vpop.f32.mrb[0].mxu0
  %383 = vmatprep.mubr.bf16.mxu0 %v284
  %384 = vmatmul.mubr.bf16.gmra.mrb[0].mxu0 %v176
  %v385 = vpop.f32.mrb[0].mxu0
  %v386 = vadd.f32 %v70, %v385
  %v387 = vpop.f32.mrb[0].mxu0
  %v388 = vpop.f32.mrb[0].mxu0
  %v389 = vadd.f32 %v70, %v388
  %v390 = vpop.f32.mrb[0].mxu0
  %391 = vmatprep.mubr.bf16.mxu0 %v287
  %392 = vmatmul.mubr.bf16.gmra.mrb[0].mxu0 %v178
  %v393 = vpop.f32.mrb[0].mxu0
  %v394 = vadd.f32 %v70, %v393
  %v395 = vpop.f32.mrb[0].mxu0
  %v396 = vpop.f32.mrb[0].mxu0
  %v397 = vadd.f32 %v70, %v396
  %v398 = vpop.f32.mrb[0].mxu0
  %399 = vmatprep.mubr.bf16.mxu0 %v290
  %400 = vmatmul.mubr.bf16.gmra.mrb[0].mxu0 %v180
  %v401 = vpop.f32.mrb[0].mxu0
  %v402 = vadd.f32 %v70, %v401
  %v403 = vpop.f32.mrb[0].mxu0
  %v404 = vpop.f32.mrb[0].mxu0
  %v405 = vadd.f32 %v70, %v404
  %v406 = vpop.f32.mrb[0].mxu0
  %407 = vmatprep.mubr.bf16.mxu0 %v293
  %408 = vmatmul.mubr.bf16.gmra.mrb[0].mxu0 %v182
  %v409 = vpop.f32.mrb[0].mxu0
  %v410 = vadd.f32 %v70, %v409
  %v411 = vpop.f32.mrb[0].mxu0
  %v412 = vpop.f32.mrb[0].mxu0
  %v413 = vadd.f32 %v70, %v412
  %v414 = vpop.f32.mrb[0].mxu0
  %415 = vmatprep.mubr.bf16.mxu0 %v296
  %416 = vmatmul.mubr.bf16.gmra.mrb[0].mxu0 %v184
  %v417 = vpop.f32.mrb[0].mxu0
  %v418 = vadd.f32 %v70, %v417
  %v419 = vpop.f32.mrb[0].mxu0
  %v420 = vpop.f32.mrb[0].mxu0
  %v421 = vadd.f32 %v70, %v420
  %v422 = vpop.f32.mrb[0].mxu0
  %423 = vmatprep.mubr.bf16.mxu0 %v299
  %424 = vmatmul.mubr.bf16.gmra.mrb[0].mxu0 %v186
  %v425 = vpop.f32.mrb[0].mxu0
  %v426 = vadd.f32 %v70, %v425
  %v427 = vpop.f32.mrb[0].mxu0
  %v428 = vpop.f32.mrb[0].mxu0
  %v429 = vadd.f32 %v70, %v428
  %v430 = vpop.f32.mrb[0].mxu0
  %431 = vmatprep.mubr.bf16.mxu0 %v302
  %432 = vmatmul.mubr.bf16.gmra.mrb[0].mxu0 %v188
  %v433 = vpop.f32.mrb[0].mxu0
  %v434 = vadd.f32 %v70, %v433
  %v435 = vpop.f32.mrb[0].mxu0
  %v436 = vpop.f32.mrb[0].mxu0
  %v437 = vadd.f32 %v70, %v436
  %v438 = vpop.f32.mrb[0].mxu0
  %439 = vmatprep.mubr.bf16.mxu0 %v305
  %440 = vmatmul.mubr.bf16.gmra.mrb[0].mxu0 %v190
  %v441 = vpop.f32.mrb[0].mxu0
  %v442 = vadd.f32 %v70, %v441
  %v443 = vpop.f32.mrb[0].mxu0
  %v444 = vpop.f32.mrb[0].mxu0
  %v445 = vadd.f32 %v70, %v444
  %v446 = vpop.f32.mrb[0].mxu0
  %447 = vmatprep.mubr.bf16.mxu0 %v308
  %448 = vmatmul.mubr.bf16.gmra.mrb[0].mxu0 %v192
  %v449 = vpop.f32.mrb[0].mxu0
  %v450 = vadd.f32 %v70, %v449
  %v451 = vpop.f32.mrb[0].mxu0
  %v452 = vpop.f32.mrb[0].mxu0
  %v453 = vadd.f32 %v70, %v452
  %v454 = vpop.f32.mrb[0].mxu0
  %455 = vmatprep.mubr.bf16.mxu0 %v311
  %456 = vmatmul.mubr.bf16.gmra.mrb[0].mxu0 %v194
  %v457 = vpop.f32.mrb[0].mxu0
  %v458 = vadd.f32 %v70, %v457
  %v459 = vpop.f32.mrb[0].mxu0
  %v460 = vpop.f32.mrb[0].mxu0
  %v461 = vadd.f32 %v70, %v460
  %v462 = vpop.f32.mrb[0].mxu0
  %463 = vmatprep.mubr.bf16.mxu0 %v314
  %464 = vmatmul.mubr.bf16.gmra.mrb[0].mxu0 %v196
  %v465 = vpop.f32.mrb[0].mxu0
  %v466 = vadd.f32 %v70, %v465
  %v467 = vpop.f32.mrb[0].mxu0
  %v468 = vpop.f32.mrb[0].mxu0
  %v469 = vadd.f32 %v70, %v468
  %v470 = vpop.f32.mrb[0].mxu0
  %471 = vmatprep.mubr.bf16.mxu0 %v317
  %472 = vmatmul.mubr.bf16.gmra.mrb[0].mxu0 %v198
  %v473 = vpop.f32.mrb[0].mxu0
  %v474 = vadd.f32 %v70, %v473
  %v475 = vpop.f32.mrb[0].mxu0
  %v476 = vpop.f32.mrb[0].mxu0
  %v477 = vadd.f32 %v70, %v476
  %v478 = vpop.f32.mrb[0].mxu0
  %479 = vdwg.mxu0
  %v480 = vmax.f32 %v354, 0.0
  %v481 = vmax.f32 %v357, 0.0
  %v482 = vmax.f32 %v362, 0.0
  %v483 = vmax.f32 %v365, 0.0
  %v484 = vmax.f32 %v370, 0.0
  %v485 = vmax.f32 %v373, 0.0
  %v486 = vmax.f32 %v378, 0.0
  %v487 = vmax.f32 %v381, 0.0
  %v488 = vmax.f32 %v386, 0.0
  %v489 = vmax.f32 %v389, 0.0
  %v490 = vmax.f32 %v394, 0.0
  %v491 = vmax.f32 %v397, 0.0
  %v492 = vmax.f32 %v402, 0.0
  %v493 = vmax.f32 %v405, 0.0
  %v494 = vmax.f32 %v410, 0.0
  %v495 = vmax.f32 %v413, 0.0
  %v496 = vmax.f32 %v418, 0.0
  %v497 = vmax.f32 %v421, 0.0
  %v498 = vmax.f32 %v426, 0.0
  %v499 = vmax.f32 %v429, 0.0
  %v500 = vmax.f32 %v434, 0.0
  %v501 = vmax.f32 %v437, 0.0
  %v502 = vmax.f32 %v442, 0.0
  %v503 = vmax.f32 %v445, 0.0
  %v504 = vmax.f32 %v450, 0.0
  %v505 = vmax.f32 %v453, 0.0
  %v506 = vmax.f32 %v458, 0.0
  %v507 = vmax.f32 %v461, 0.0
  %v508 = vmax.f32 %v466, 0.0
  %v509 = vmax.f32 %v469, 0.0
  %v510 = vmax.f32 %v474, 0.0
  %v511 = vmax.f32 %v477, 0.0
  %v512 = vpack.c.bf16 %v481, %v480
  %v513 = vpack.c.bf16 %v483, %v482
  %v514 = vpack.c.bf16 %v485, %v484
  %v515 = vpack.c.bf16 %v487, %v486
  %v516 = vpack.c.bf16 %v489, %v488
  %v517 = vpack.c.bf16 %v491, %v490
  %v518 = vpack.c.bf16 %v493, %v492
  %v519 = vpack.c.bf16 %v495, %v494
  %v520 = vpack.c.bf16 %v497, %v496
  %v521 = vpack.c.bf16 %v499, %v498
  %v522 = vpack.c.bf16 %v501, %v500
  %v523 = vpack.c.bf16 %v503, %v502
  %v524 = vpack.c.bf16 %v505, %v504
  %v525 = vpack.c.bf16 %v507, %v506
  %v526 = vpack.c.bf16 %v509, %v508
  %v527 = vpack.c.bf16 %v511, %v510
  %v544 = vunpack.c.l.b16 %v512
  %v545 = vunpack.c.h.b16 %v512
  %v546 = vunpack.c.l.b16 %v513
  %v547 = vunpack.c.h.b16 %v513
  %v548 = vunpack.c.l.b16 %v514
  %v549 = vunpack.c.h.b16 %v514
  %v550 = vunpack.c.l.b16 %v515
  %v551 = vunpack.c.h.b16 %v515
  %v552 = vunpack.c.l.b16 %v516
  %v553 = vunpack.c.h.b16 %v516
  %v554 = vunpack.c.l.b16 %v517
  %v555 = vunpack.c.h.b16 %v517
  %v556 = vunpack.c.l.b16 %v518
  %v557 = vunpack.c.h.b16 %v518
  %v558 = vunpack.c.l.b16 %v519
  %v559 = vunpack.c.h.b16 %v519
  %v560 = vunpack.c.l.b16 %v520
  %v561 = vunpack.c.h.b16 %v520
  %v562 = vunpack.c.l.b16 %v521
  %v563 = vunpack.c.h.b16 %v521
  %v564 = vunpack.c.l.b16 %v522
  %v565 = vunpack.c.h.b16 %v522
  %v566 = vunpack.c.l.b16 %v523
  %v567 = vunpack.c.h.b16 %v523
  %v568 = vunpack.c.l.b16 %v524
  %v569 = vunpack.c.h.b16 %v524
  %v570 = vunpack.c.l.b16 %v525
  %v571 = vunpack.c.h.b16 %v525
  %v572 = vunpack.c.l.b16 %v526
  %v573 = vunpack.c.h.b16 %v526
  %v574 = vunpack.c.l.b16 %v527
  %v575 = vunpack.c.h.b16 %v527
  %v576 = vpack.c.b16 %v544, %v544
  %v577 = vpack.c.b16 %v545, %v545
  %v578 = vpack.c.b16 %v546, %v546
  %v579 = vpack.c.b16 %v547, %v547
  %v580 = vpack.c.b16 %v548, %v548
  %v581 = vpack.c.b16 %v549, %v549
  %v582 = vpack.c.b16 %v550, %v550
  %v583 = vpack.c.b16 %v551, %v551
  %v584 = vpack.c.b16 %v552, %v552
  %v585 = vpack.c.b16 %v553, %v553
  %v586 = vpack.c.b16 %v554, %v554
  %v587 = vpack.c.b16 %v555, %v555
  %v588 = vpack.c.b16 %v556, %v556
  %v589 = vpack.c.b16 %v557, %v557
  %v590 = vpack.c.b16 %v558, %v558
  %v591 = vpack.c.b16 %v559, %v559
  %v592 = vpack.c.b16 %v560, %v560
  %v593 = vpack.c.b16 %v561, %v561
  %v594 = vpack.c.b16 %v562, %v562
  %v595 = vpack.c.b16 %v563, %v563
  %v596 = vpack.c.b16 %v564, %v564
  %v597 = vpack.c.b16 %v565, %v565
  %v598 = vpack.c.b16 %v566, %v566
  %v599 = vpack.c.b16 %v567, %v567
  %v600 = vpack.c.b16 %v568, %v568
  %v601 = vpack.c.b16 %v569, %v569
  %v602 = vpack.c.b16 %v570, %v570
  %v603 = vpack.c.b16 %v571, %v571
  %v604 = vpack.c.b16 %v572, %v572
  %v605 = vpack.c.b16 %v573, %v573
  %v606 = vpack.c.b16 %v574, %v574
  %v607 = vpack.c.b16 %v575, %v575
  %vm640 = vcmask 125952
  %641 = vst.msk [vmem:[%s3] sm:$0xf] %vm640, %v576
  %642 = vst.msk [vmem:[%s3 + $0x4] sm:$0xf] %vm640, %v577
  %643 = vst.msk [vmem:[%s3 + $0x8] sm:$0xf] %vm640, %v578
  %644 = vst.msk [vmem:[%s3 + $0xc] sm:$0xf] %vm640, %v579
  %645 = vst.msk [vmem:[%s3 + $0x10] sm:$0xf] %vm640, %v580
  %646 = vst.msk [vmem:[%s3 + $0x14] sm:$0xf] %vm640, %v581
  %647 = vst.msk [vmem:[%s3 + $0x18] sm:$0xf] %vm640, %v582
  %648 = vst.msk [vmem:[%s3 + $0x1c] sm:$0xf] %vm640, %v583
  %649 = vst.msk [vmem:[%s3 + $0x20] sm:$0xf] %vm640, %v584
  %650 = vst.msk [vmem:[%s3 + $0x24] sm:$0xf] %vm640, %v585
  %651 = vst.msk [vmem:[%s3 + $0x28] sm:$0xf] %vm640, %v586
  %652 = vst.msk [vmem:[%s3 + $0x2c] sm:$0xf] %vm640, %v587
  %653 = vst.msk [vmem:[%s3 + $0x30] sm:$0xf] %vm640, %v588
  %654 = vst.msk [vmem:[%s3 + $0x34] sm:$0xf] %vm640, %v589
  %655 = vst.msk [vmem:[%s3 + $0x38] sm:$0xf] %vm640, %v590
  %656 = vst.msk [vmem:[%s3 + $0x3c] sm:$0xf] %vm640, %v591
  %657 = vst.msk [vmem:[%s3 + $0x40] sm:$0xf] %vm640, %v592
  %658 = vst.msk [vmem:[%s3 + $0x44] sm:$0xf] %vm640, %v593
  %659 = vst.msk [vmem:[%s3 + $0x48] sm:$0xf] %vm640, %v594
  %660 = vst.msk [vmem:[%s3 + $0x4c] sm:$0xf] %vm640, %v595
  %661 = vst.msk [vmem:[%s3 + $0x50] sm:$0xf] %vm640, %v596
  %662 = vst.msk [vmem:[%s3 + $0x54] sm:$0xf] %vm640, %v597
  %663 = vst.msk [vmem:[%s3 + $0x58] sm:$0xf] %vm640, %v598
  %664 = vst.msk [vmem:[%s3 + $0x5c] sm:$0xf] %vm640, %v599
  %665 = vst.msk [vmem:[%s3 + $0x60] sm:$0xf] %vm640, %v600
  %666 = vst.msk [vmem:[%s3 + $0x64] sm:$0xf] %vm640, %v601
  %667 = vst.msk [vmem:[%s3 + $0x68] sm:$0xf] %vm640, %v602
  %668 = vst.msk [vmem:[%s3 + $0x6c] sm:$0xf] %vm640, %v603
  %669 = vst.msk [vmem:[%s3 + $0x70] sm:$0xf] %vm640, %v604
  %670 = vst.msk [vmem:[%s3 + $0x74] sm:$0xf] %vm640, %v605
  %671 = vst.msk [vmem:[%s3 + $0x78] sm:$0xf] %vm640, %v606
  %672 = vst.msk [vmem:[%s3 + $0x7c] sm:$0xf] %vm640, %v607
  // Predicated region
  $region14: #{sketchanet_loss.12} parent=0 // pred_check
    _
  $region15: #{sketchanet_loss.12} parent=0 // pred_check_branch
    %674 = sbr.rel (0) target = $region17
  $region16: #{sketchanet_loss.12} parent=0 // pred_region
    _
  $region17: #{sketchanet_loss.12} parent=0 // pred_fallthru
    _
  // Predicated region
  $region18: #{sketchanet_loss.12} parent=0 // pred_check
    _
  $region19: #{sketchanet_loss.12} parent=0 // pred_check_branch
    %676 = sbr.rel (0) target = $region21
  $region20: #{sketchanet_loss.12} parent=0 // pred_region
    _
  $region21: #{sketchanet_loss.12} parent=0 // pred_fallthru
    _

// kernel: sketchanet_loss.13
$region0: #{sketchanet_loss.13}
  #allocation0 [shape = 'u32[]', space=smem, size = 0x4, offset = 0x4, fixed_abs, tag = 'smem constant byte address 0x4 - core index']
  #allocation1 [shape = 'u32[144,128]{1,0:T(1,128)}', space=vmem, size = 0x12000, scoped, tag = 'internal scratch']
  %s0 = inlined_call_operand.vmem [shape: bf16[64,144], index: 0, kind: input, shape index: {}]
  %s1 = inlined_call_operand.vmem [shape: bf16[144,32], index: 1, kind: input, shape index: {}]
  %s2 = inlined_call_operand.vmem [shape: f32[1,32], index: 2, kind: input, shape index: {}]
  %s3 = inlined_call_operand.vmem [shape: bf16[64,32], index: 3, kind: output, shape index: {}]
  %s4 = sld [smem:[#allocation0]]
  $region22: #{sketchanet_loss.13} parent=0
    _
  %s6 = ssub.s32 1, %s4
  %s7 = scalar_select 0, %s6, %s4
  // Predicated region
  $region2: #{sketchanet_loss.13} parent=0 // pred_check
    _
  $region3: #{sketchanet_loss.13} parent=0 // pred_check_branch
    %9 = sbr.rel (0) target = $region5
  $region4: #{sketchanet_loss.13} parent=0 // pred_region
    _
  $region5: #{sketchanet_loss.13} parent=0 // pred_fallthru
    _
  // Predicated region
  $region6: #{sketchanet_loss.13} parent=0 // pred_check
    _
  $region7: #{sketchanet_loss.13} parent=0 // pred_check_branch
    %11 = sbr.rel (0) target = $region9
  $region8: #{sketchanet_loss.13} parent=0 // pred_region
    _
  $region9: #{sketchanet_loss.13} parent=0 // pred_fallthru
    _
  // Predicated region
  $region10: #{sketchanet_loss.13} parent=0 // pred_check
    _
  $region11: #{sketchanet_loss.13} parent=0 // pred_check_branch
    %13 = sbr.rel (0) target = $region13
  $region12: #{sketchanet_loss.13} parent=0 // pred_region
    _
  $region13: #{sketchanet_loss.13} parent=0 // pred_fallthru
    _
  %v15 = vld [vmem:[%s0] sm:$0xff]
  %v16 = vld [vmem:[%s0 + $0x8] sm:$0xff]
  %v17 = vld [vmem:[%s0 + $0x10] sm:$0xff]
  %v18 = vld [vmem:[%s0 + $0x18] sm:$0xff]
  %v19 = vld [vmem:[%s0 + $0x20] sm:$0xff]
  %v20 = vld [vmem:[%s0 + $0x28] sm:$0xff]
  %v21 = vld [vmem:[%s0 + $0x30] sm:$0xff]
  %v22 = vld [vmem:[%s0 + $0x38] sm:$0xff]
  %v23 = vld [vmem:[%s1] sm:$0xf]
  %v24 = vld [vmem:[%s1 + $0x4] sm:$0xf]
  %v25 = vld [vmem:[%s1 + $0x8] sm:$0xf]
  %v26 = vld [vmem:[%s1 + $0xc] sm:$0xf]
  %v27 = vld [vmem:[%s1 + $0x10] sm:$0xf]
  %v28 = vld [vmem:[%s1 + $0x14] sm:$0xf]
  %v29 = vld [vmem:[%s1 + $0x18] sm:$0xf]
  %v30 = vld [vmem:[%s1 + $0x1c] sm:$0xf]
  %v31 = vld [vmem:[%s1 + $0x20] sm:$0xf]
  %v32 = vld [vmem:[%s1 + $0x24] sm:$0xf]
  %v33 = vld [vmem:[%s1 + $0x28] sm:$0xf]
  %v34 = vld [vmem:[%s1 + $0x2c] sm:$0xf]
  %v35 = vld [vmem:[%s1 + $0x30] sm:$0xf]
  %v36 = vld [vmem:[%s1 + $0x34] sm:$0xf]
  %v37 = vld [vmem:[%s1 + $0x38] sm:$0xf]
  %v38 = vld [vmem:[%s1 + $0x3c] sm:$0xf]
  %v39 = vld [vmem:[%s1 + $0x40] sm:$0xf]
  %v40 = vld [vmem:[%s1 + $0x44] sm:$0xf]
  %v41 = vld [vmem:[%s2] sm:$0x1]
  %v43 = vlaneseq
  %v44 = vshrl.u32 %v43, 7
  %v45 = vsub.s32 0, %v44
  %v46 = vrot.slane %v41, %v45
  %v56 = vunpack.c.l.b16 %v15
  %v57 = vunpack.c.h.b16 %v15
  %v58 = vunpack.c.l.b16 %v16
  %v59 = vunpack.c.h.b16 %v16
  %v60 = vunpack.c.l.b16 %v17
  %v61 = vunpack.c.h.b16 %v17
  %v62 = vunpack.c.l.b16 %v18
  %v63 = vunpack.c.h.b16 %v18
  %v64 = vunpack.c.l.b16 %v19
  %v65 = vunpack.c.h.b16 %v19
  %v66 = vunpack.c.l.b16 %v20
  %v67 = vunpack.c.h.b16 %v20
  %v68 = vunpack.c.l.b16 %v21
  %v69 = vunpack.c.h.b16 %v21
  %v70 = vunpack.c.l.b16 %v22
  %v71 = vunpack.c.h.b16 %v22
  %v72 = vpack.c.b16 %v58, %v56
  %v73 = vpack.c.b16 %v59, %v57
  %v74 = vpack.c.b16 %v62, %v60
  %v75 = vpack.c.b16 %v63, %v61
  %v76 = vpack.c.b16 %v66, %v64
  %v77 = vpack.c.b16 %v67, %v65
  %v78 = vpack.c.b16 %v70, %v68
  %v79 = vpack.c.b16 %v71, %v69
  %v102 = vunpack.c.l.b16 %v23
  %v103 = vunpack.c.l.b16 %v24
  %v104 = vunpack.c.l.b16 %v25
  %v105 = vunpack.c.l.b16 %v26
  %v106 = vunpack.c.l.b16 %v27
  %v107 = vunpack.c.l.b16 %v28
  %v108 = vunpack.c.l.b16 %v29
  %v109 = vunpack.c.l.b16 %v30
  %v110 = vunpack.c.l.b16 %v31
  %v111 = vunpack.c.l.b16 %v32
  %v112 = vunpack.c.l.b16 %v33
  %v113 = vunpack.c.l.b16 %v34
  %v114 = vunpack.c.l.b16 %v35
  %v115 = vunpack.c.l.b16 %v36
  %v116 = vunpack.c.l.b16 %v37
  %v117 = vunpack.c.l.b16 %v38
  %v118 = vunpack.c.l.b16 %v39
  %v119 = vunpack.c.l.b16 %v40
  %v120 = vpack.c.b16 %v103, %v102
  %v121 = vpack.c.b16 %v105, %v104
  %v122 = vpack.c.b16 %v107, %v106
  %v123 = vpack.c.b16 %v109, %v108
  %v124 = vpack.c.b16 %v111, %v110
  %v125 = vpack.c.b16 %v113, %v112
  %v126 = vpack.c.b16 %v115, %v114
  %v127 = vpack.c.b16 %v117, %v116
  %v128 = vpack.c.b16 %v119, %v118
  %vm138 = vcmask 130048
  %v140 = vsel %vm138, %v73, 0
  %v143 = vsel %vm138, %v75, 0
  %v146 = vsel %vm138, %v77, 0
  %v149 = vsel %vm138, %v79, 0
  %151 = vmatprep.subr.bf16.mxu0 0
  %152 = vmatpush1.bf16.msra.mxu0 %v120
  %153 = vmatprep.subr.bf16.mxu0 0
  %154 = vmatpush1.bf16.msra.mxu0 %v121
  %155 = vmatprep.subr.bf16.mxu0 0
  %156 = vmatpush1.bf16.msra.mxu0 %v122
  %157 = vmatprep.subr.bf16.mxu0 0
  %158 = vmatpush1.bf16.msra.mxu0 %v123
  %159 = vmatprep.subr.bf16.mxu0 0
  %160 = vmatpush1.bf16.msra.mxu0 %v124
  %161 = vmatprep.subr.bf16.mxu0 0
  %162 = vmatpush1.bf16.msra.mxu0 %v125
  %163 = vmatprep.subr.bf16.mxu0 0
  %164 = vmatpush1.bf16.msra.mxu0 %v126
  %165 = vmatprep.subr.bf16.mxu0 0
  %166 = vmatpush1.bf16.msra.mxu0 %v127
  %167 = vmatprep.subr.bf16.mxu0 0
  %168 = vmatpush1.bf16.msra.mxu0 %v128
  %169 = vmatprep.subr.bf16.mxu0 0
  %170 = vmatpush1.bf16.msra.mxu0 0
  %171 = vmatprep.subr.bf16.mxu0 0
  %172 = vmatpush1.bf16.msra.mxu0 0
  %173 = vmatprep.subr.bf16.mxu0 0
  %174 = vmatpush1.bf16.msra.mxu0 0
  %175 = vmatprep.subr.bf16.mxu0 0
  %176 = vmatpush1.bf16.msra.mxu0 0
  %177 = vmatprep.subr.bf16.mxu0 0
  %178 = vmatpush1.bf16.msra.mxu0 0
  %179 = vmatprep.subr.bf16.mxu0 0
  %180 = vmatpush1.bf16.msra.mxu0 0
  %181 = vmatprep.subr.bf16.mxu0 0
  %182 = vmatpush1.bf16.msra.mxu0 0
  %183 = vmatprep.mubr.bf16.mxu0 %v140
  %184 = vmatmul.mubr.bf16.gmra.mrb[0].mxu0 %v72
  %v185 = vpop.f32.mrb[0].mxu0
  %v186 = vadd.f32 %v46, %v185
  %v187 = vpop.f32.mrb[0].mxu0
  %v188 = vpop.f32.mrb[0].mxu0
  %v189 = vadd.f32 %v46, %v188
  %v190 = vpop.f32.mrb[0].mxu0
  %191 = vmatprep.mubr.bf16.mxu0 %v143
  %192 = vmatmul.mubr.bf16.gmra.mrb[0].mxu0 %v74
  %v193 = vpop.f32.mrb[0].mxu0
  %v194 = vadd.f32 %v46, %v193
  %v195 = vpop.f32.mrb[0].mxu0
  %v196 = vpop.f32.mrb[0].mxu0
  %v197 = vadd.f32 %v46, %v196
  %v198 = vpop.f32.mrb[0].mxu0
  %199 = vmatprep.mubr.bf16.mxu0 %v146
  %200 = vmatmul.mubr.bf16.gmra.mrb[0].mxu0 %v76
  %v201 = vpop.f32.mrb[0].mxu0
  %v202 = vadd.f32 %v46, %v201
  %v203 = vpop.f32.mrb[0].mxu0
  %v204 = vpop.f32.mrb[0].mxu0
  %v205 = vadd.f32 %v46, %v204
  %v206 = vpop.f32.mrb[0].mxu0
  %207 = vmatprep.mubr.bf16.mxu0 %v149
  %208 = vmatmul.mubr.bf16.gmra.mrb[0].mxu0 %v78
  %v209 = vpop.f32.mrb[0].mxu0
  %v210 = vadd.f32 %v46, %v209
  %v211 = vpop.f32.mrb[0].mxu0
  %v212 = vpop.f32.mrb[0].mxu0
  %v213 = vadd.f32 %v46, %v212
  %v214 = vpop.f32.mrb[0].mxu0
  %215 = vdwg.mxu0
  %v216 = vmax.f32 %v186, 0.0
  %v217 = vmax.f32 %v189, 0.0
  %v218 = vmax.f32 %v194, 0.0
  %v219 = vmax.f32 %v197, 0.0
  %v220 = vmax.f32 %v202, 0.0
  %v221 = vmax.f32 %v205, 0.0
  %v222 = vmax.f32 %v210, 0.0
  %v223 = vmax.f32 %v213, 0.0
  %v224 = vpack.c.bf16 %v217, %v216
  %v225 = vpack.c.bf16 %v219, %v218
  %v226 = vpack.c.bf16 %v221, %v220
  %v227 = vpack.c.bf16 %v223, %v222
  %v232 = vunpack.c.l.b16 %v224
  %v233 = vunpack.c.h.b16 %v224
  %v234 = vunpack.c.l.b16 %v225
  %v235 = vunpack.c.h.b16 %v225
  %v236 = vunpack.c.l.b16 %v226
  %v237 = vunpack.c.h.b16 %v226
  %v238 = vunpack.c.l.b16 %v227
  %v239 = vunpack.c.h.b16 %v227
  %v240 = vpack.c.b16 %v232, %v232
  %v241 = vpack.c.b16 %v233, %v233
  %v242 = vpack.c.b16 %v234, %v234
  %v243 = vpack.c.b16 %v235, %v235
  %v244 = vpack.c.b16 %v236, %v236
  %v245 = vpack.c.b16 %v237, %v237
  %v246 = vpack.c.b16 %v238, %v238
  %v247 = vpack.c.b16 %v239, %v239
  %vm256 = vcmask 257024
  %257 = vst.msk [vmem:[%s3] sm:$0xf] %vm256, %v240
  %258 = vst.msk [vmem:[%s3 + $0x4] sm:$0xf] %vm256, %v241
  %259 = vst.msk [vmem:[%s3 + $0x8] sm:$0xf] %vm256, %v242
  %260 = vst.msk [vmem:[%s3 + $0xc] sm:$0xf] %vm256, %v243
  %261 = vst.msk [vmem:[%s3 + $0x10] sm:$0xf] %vm256, %v244
  %262 = vst.msk [vmem:[%s3 + $0x14] sm:$0xf] %vm256, %v245
  %263 = vst.msk [vmem:[%s3 + $0x18] sm:$0xf] %vm256, %v246
  %264 = vst.msk [vmem:[%s3 + $0x1c] sm:$0xf] %vm256, %v247
  // Predicated region
  $region14: #{sketchanet_loss.13} parent=0 // pred_check
    _
  $region15: #{sketchanet_loss.13} parent=0 // pred_check_branch
    %266 = sbr.rel (0) target = $region17
  $region16: #{sketchanet_loss.13} parent=0 // pred_region
    _
  $region17: #{sketchanet_loss.13} parent=0 // pred_fallthru
    _
  // Predicated region
  $region18: #{sketchanet_loss.13} parent=0 // pred_check
    _
  $region19: #{sketchanet_loss.13} parent=0 // pred_check_branch
    %268 = sbr.rel (0) target = $region21
  $region20: #{sketchanet_loss.13} parent=0 // pred_region
    _
  $region21: #{sketchanet_loss.13} parent=0 // pred_fallthru
    _

// kernel: sketchanet_loss.18
$region0: #{sketchanet_loss.18}
  #allocation0 [shape = 'u32[]', space=smem, size = 0x4, offset = 0x4, fixed_abs, tag = 'smem constant byte address 0x4 - core index']
  #allocation1 [shape = 'u32[144,128]{1,0:T(1,128)}', space=vmem, size = 0x12000, scoped, tag = 'internal scratch']
  %s0 = inlined_call_operand.vmem [shape: bf16[8,128], index: 0, kind: input, shape index: {}]
  %s1 = inlined_call_operand.vmem [shape: bf16[8,128], index: 1, kind: input, shape index: {}]
  %s2 = inlined_call_operand.hbm [shape: f32[1,1], index: 2, kind: output, shape index: {}]
  %s3 = sld [smem:[#allocation0]]
  $region22: #{sketchanet_loss.18} parent=0
    _
  %s5 = ssub.s32 1, %s3
  %s6 = scalar_select 0, %s5, %s3
  $region1: #{sketchanet_loss.18} parent=0
    #allocation2 [shape = 'u8[512]{0}', space=vmem, size = 0x400, scoped, tag = 'output window, operand 0, single buffered']
    #allocation3 [shape = 's32[1]{0}', space=sflag, size = 0x4, scoped, tag = 'scoped memory for sketchanet_loss.18']
    %7 = vsyncpa [#allocation3], 0
    // Predicated region
    $region2: #{sketchanet_loss.18} parent=1 // pred_check
      _
    $region3: #{sketchanet_loss.18} parent=1 // pred_check_branch
      %9 = sbr.rel (0) target = $region5
    $region4: #{sketchanet_loss.18} parent=1 // pred_region
      _
    $region5: #{sketchanet_loss.18} parent=1 // pred_fallthru
      _
    // Predicated region
    $region6: #{sketchanet_loss.18} parent=1 // pred_check
      _
    $region7: #{sketchanet_loss.18} parent=1 // pred_check_branch
      %11 = sbr.rel (0) target = $region9
    $region8: #{sketchanet_loss.18} parent=1 // pred_region
      _
    $region9: #{sketchanet_loss.18} parent=1 // pred_fallthru
      _
    %p12 = scmp.eq.s32.totalorder 0, 0
    // Predicated region
    $region10: #{sketchanet_loss.18} parent=1 // pred_check
      %p13 = pneg %p12
    $region11: #{sketchanet_loss.18} parent=1 // pred_check_branch
      %15 = sbr.rel (%p13) target = $region13
    $region12: #{sketchanet_loss.18} parent=1 // pred_region
      %vm16 = vcmask 0
      %17 = vst.msk [vmem:[#allocation2] sm:$0x1] %vm16, 0.0
    $region13: #{sketchanet_loss.18} parent=1 // pred_fallthru
      _
    %v18 = vld [vmem:[%s0] sm:$0xf]
    %v19 = vunpack.c.l.bf16 %v18
    %v20 = vld [vmem:[%s1] sm:$0xf]
    %v21 = vunpack.c.l.bf16 %v20
    %v22 = vsub.f32 %v19, %v21
    %v23 = vld [vmem:[#allocation2] sm:$0x1]
    %v24 = vand.u32 2147483647, %v22
    %25 = vadd.xlane.f32.xlu0 %v24
    %v26 = vpop.xlane.xlu0 %25
    %v27 = vrot.slane %v26, 4
    %v28 = vadd.f32 %v26, %v27
    %v29 = vrot.slane %v28, 2
    %v30 = vadd.f32 %v28, %v29
    %v31 = vrot.slane %v30, 1
    %v32 = vadd.f32 %v30, %v31
    %s33 = vtos %v32
    %v34 = vstv %s33
    %v35 = vadd.f32 %v23, %v34
    %vm36 = vcmask 0
    %37 = vst.msk [vmem:[#allocation2] sm:$0x1] %vm36, %v35
    // Predicated region
    $region14: #{sketchanet_loss.18} parent=1 // pred_check
      _
    $region15: #{sketchanet_loss.18} parent=1 // pred_check_branch
      %39 = sbr.rel (0) target = $region17
    $region16: #{sketchanet_loss.18} parent=1 // pred_region
      %s41 = ssub.s32 16, 16
      %42 = vsyncadd [#allocation3], %s41
      %s44 = sshll.u32 [#allocation2], 4
      %s45 = int_to_ptr.vmem [resolvable:$true] %s44
      %47 = dma.vmem_to_hbm [thread:$0]  %s45, 16, %s2, [#allocation3]
    $region17: #{sketchanet_loss.18} parent=1 // pred_fallthru
      _
    // Predicated region
    $region18: #{sketchanet_loss.18} parent=1 // pred_check
      _
    $region19: #{sketchanet_loss.18} parent=1 // pred_check_branch
      %49 = sbr.rel (0) target = $region21
    $region20: #{sketchanet_loss.18} parent=1 // pred_region
      %50 = dma.done [#allocation3], 16
    $region21: #{sketchanet_loss.18} parent=1 // pred_fallthru
      _
    %51 = vsyncpa [#allocation3], 1

// kernel: sketchanet_loss.14
$region0: #{sketchanet_loss.14}
  #allocation0 [shape = 'u32[]', space=smem, size = 0x4, offset = 0x4, fixed_abs, tag = 'smem constant byte address 0x4 - core index']
  #allocation1 [shape = 'u32[144,128]{1,0:T(1,128)}', space=vmem, size = 0x12000, scoped, tag = 'internal scratch']
  %s0 = inlined_call_operand.vmem [shape: bf16[64,288], index: 0, kind: input, shape index: {}]
  %s1 = inlined_call_operand.vmem [shape: bf16[288,32], index: 1, kind: input, shape index: {}]
  %s2 = inlined_call_operand.vmem [shape: f32[1,32], index: 2, kind: input, shape index: {}]
  %s3 = inlined_call_operand.vmem [shape: bf16[64,32], index: 3, kind: output, shape index: {}]
  %s4 = sld [smem:[#allocation0]]
  $region22: #{sketchanet_loss.14} parent=0
    _
  %s6 = ssub.s32 1, %s4
  %s7 = scalar_select 0, %s6, %s4
  // Predicated region
  $region2: #{sketchanet_loss.14} parent=0 // pred_check
    _
  $region3: #{sketchanet_loss.14} parent=0 // pred_check_branch
    %9 = sbr.rel (0) target = $region5
  $region4: #{sketchanet_loss.14} parent=0 // pred_region
    _
  $region5: #{sketchanet_loss.14} parent=0 // pred_fallthru
    _
  // Predicated region
  $region6: #{sketchanet_loss.14} parent=0 // pred_check
    _
  $region7: #{sketchanet_loss.14} parent=0 // pred_check_branch
    %11 = sbr.rel (0) target = $region9
  $region8: #{sketchanet_loss.14} parent=0 // pred_region
    _
  $region9: #{sketchanet_loss.14} parent=0 // pred_fallthru
    _
  // Predicated region
  $region10: #{sketchanet_loss.14} parent=0 // pred_check
    _
  $region11: #{sketchanet_loss.14} parent=0 // pred_check_branch
    %13 = sbr.rel (0) target = $region13
  $region12: #{sketchanet_loss.14} parent=0 // pred_region
    _
  $region13: #{sketchanet_loss.14} parent=0 // pred_fallthru
    _
  %v15 = vld [vmem:[%s0] sm:$0xff]
  %v16 = vld [vmem:[%s0 + $0x8] sm:$0xf]
  %v17 = vld [vmem:[%s0 + $0xc] sm:$0xff]
  %v18 = vld [vmem:[%s0 + $0x14] sm:$0xf]
  %v19 = vld [vmem:[%s0 + $0x18] sm:$0xff]
  %v20 = vld [vmem:[%s0 + $0x20] sm:$0xf]
  %v21 = vld [vmem:[%s0 + $0x24] sm:$0xff]
  %v22 = vld [vmem:[%s0 + $0x2c] sm:$0xf]
  %v23 = vld [vmem:[%s0 + $0x30] sm:$0xff]
  %v24 = vld [vmem:[%s0 + $0x38] sm:$0xf]
  %v25 = vld [vmem:[%s0 + $0x3c] sm:$0xff]
  %v26 = vld [vmem:[%s0 + $0x44] sm:$0xf]
  %v27 = vld [vmem:[%s0 + $0x48] sm:$0xff]
  %v28 = vld [vmem:[%s0 + $0x50] sm:$0xf]
  %v29 = vld [vmem:[%s0 + $0x54] sm:$0xff]
  %v30 = vld [vmem:[%s0 + $0x5c] sm:$0xf]
  %v31 = vld [vmem:[%s1] sm:$0xf]
  %v32 = vld [vmem:[%s1 + $0x4] sm:$0xf]
  %v33 = vld [vmem:[%s1 + $0x8] sm:$0xf]
  %v34 = vld [vmem:[%s1 + $0xc] sm:$0xf]
  %v35 = vld [vmem:[%s1 + $0x10] sm:$0xf]
  %v36 = vld [vmem:[%s1 + $0x14] sm:$0xf]
  %v37 = vld [vmem:[%s1 + $0x18] sm:$0xf]
  %v38 = vld [vmem:[%s1 + $0x1c] sm:$0xf]
  %v39 = vld [vmem:[%s1 + $0x20] sm:$0xf]
  %v40 = vld [vmem:[%s1 + $0x24] sm:$0xf]
  %v41 = vld [vmem:[%s1 + $0x28] sm:$0xf]
  %v42 = vld [vmem:[%s1 + $0x2c] sm:$0xf]
  %v43 = vld [vmem:[%s1 + $0x30] sm:$0xf]
  %v44 = vld [vmem:[%s1 + $0x34] sm:$0xf]
  %v45 = vld [vmem:[%s1 + $0x38] sm:$0xf]
  %v46 = vld [vmem:[%s1 + $0x3c] sm:$0xf]
  %v47 = vld [vmem:[%s1 + $0x40] sm:$0xf]
  %v48 = vld [vmem:[%s1 + $0x44] sm:$0xf]
  %v49 = vld [vmem:[%s1 + $0x48] sm:$0xf]
  %v50 = vld [vmem:[%s1 + $0x4c] sm:$0xf]
  %v51 = vld [vmem:[%s1 + $0x50] sm:$0xf]
  %v52 = vld [vmem:[%s1 + $0x54] sm:$0xf]
  %v53 = vld [vmem:[%s1 + $0x58] sm:$0xf]
  %v54 = vld [vmem:[%s1 + $0x5c] sm:$0xf]
  %v55 = vld [vmem:[%s1 + $0x60] sm:$0xf]
  %v56 = vld [vmem:[%s1 + $0x64] sm:$0xf]
  %v57 = vld [vmem:[%s1 + $0x68] sm:$0xf]
  %v58 = vld [vmem:[%s1 + $0x6c] sm:$0xf]
  %v59 = vld [vmem:[%s1 + $0x70] sm:$0xf]
  %v60 = vld [vmem:[%s1 + $0x74] sm:$0xf]
  %v61 = vld [vmem:[%s1 + $0x78] sm:$0xf]
  %v62 = vld [vmem:[%s1 + $0x7c] sm:$0xf]
  %v63 = vld [vmem:[%s1 + $0x80] sm:$0xf]
  %v64 = vld [vmem:[%s1 + $0x84] sm:$0xf]
  %v65 = vld [vmem:[%s1 + $0x88] sm:$0xf]
  %v66 = vld [vmem:[%s1 + $0x8c] sm:$0xf]
  %v67 = vld [vmem:[%s2] sm:$0x1]
  %v69 = vlaneseq
  %v70 = vshrl.u32 %v69, 7
  %v71 = vsub.s32 0, %v70
  %v72 = vrot.slane %v67, %v71
  %v90 = vunpack.c.l.b16 %v15
  %v91 = vunpack.c.h.b16 %v15
  %v92 = vunpack.c.l.b16 %v16
  %v93 = vunpack.c.l.b16 %v17
  %v94 = vunpack.c.h.b16 %v17
  %v95 = vunpack.c.l.b16 %v18
  %v96 = vunpack.c.l.b16 %v19
  %v97 = vunpack.c.h.b16 %v19
  %v98 = vunpack.c.l.b16 %v20
  %v99 = vunpack.c.l.b16 %v21
  %v100 = vunpack.c.h.b16 %v21
  %v101 = vunpack.c.l.b16 %v22
  %v102 = vunpack.c.l.b16 %v23
  %v103 = vunpack.c.h.b16 %v23
  %v104 = vunpack.c.l.b16 %v24
  %v105 = vunpack.c.l.b16 %v25
  %v106 = vunpack.c.h.b16 %v25
  %v107 = vunpack.c.l.b16 %v26
  %v108 = vunpack.c.l.b16 %v27
  %v109 = vunpack.c.h.b16 %v27
  %v110 = vunpack.c.l.b16 %v28
  %v111 = vunpack.c.l.b16 %v29
  %v112 = vunpack.c.h.b16 %v29
  %v113 = vunpack.c.l.b16 %v30
  %v114 = vpack.c.b16 %v93, %v90
  %v115 = vpack.c.b16 %v94, %v91
  %v116 = vpack.c.b16 %v95, %v92
  %v117 = vpack.c.b16 %v99, %v96
  %v118 = vpack.c.b16 %v100, %v97
  %v119 = vpack.c.b16 %v101, %v98
  %v120 = vpack.c.b16 %v105, %v102
  %v121 = vpack.c.b16 %v106, %v103
  %v122 = vpack.c.b16 %v107, %v104
  %v123 = vpack.c.b16 %v111, %v108
  %v124 = vpack.c.b16 %v112, %v109
  %v125 = vpack.c.b16 %v113, %v110
  %v170 = vunpack.c.l.b16 %v31
  %v171 = vunpack.c.l.b16 %v32
  %v172 = vunpack.c.l.b16 %v33
  %v173 = vunpack.c.l.b16 %v34
  %v174 = vunpack.c.l.b16 %v35
  %v175 = vunpack.c.l.b16 %v36
  %v176 = vunpack.c.l.b16 %v37
  %v177 = vunpack.c.l.b16 %v38
  %v178 = vunpack.c.l.b16 %v39
  %v179 = vunpack.c.l.b16 %v40
  %v180 = vunpack.c.l.b16 %v41
  %v181 = vunpack.c.l.b16 %v42
  %v182 = vunpack.c.l.b16 %v43
  %v183 = vunpack.c.l.b16 %v44
  %v184 = vunpack.c.l.b16 %v45
  %v185 = vunpack.c.l.b16 %v46
  %v186 = vunpack.c.l.b16 %v47
  %v187 = vunpack.c.l.b16 %v48
  %v188 = vunpack.c.l.b16 %v49
  %v189 = vunpack.c.l.b16 %v50
  %v190 = vunpack.c.l.b16 %v51
  %v191 = vunpack.c.l.b16 %v52
  %v192 = vunpack.c.l.b16 %v53
  %v193 = vunpack.c.l.b16 %v54
  %v194 = vunpack.c.l.b16 %v55
  %v195 = vunpack.c.l.b16 %v56
  %v196 = vunpack.c.l.b16 %v57
  %v197 = vunpack.c.l.b16 %v58
  %v198 = vunpack.c.l.b16 %v59
  %v199 = vunpack.c.l.b16 %v60
  %v200 = vunpack.c.l.b16 %v61
  %v201 = vunpack.c.l.b16 %v62
  %v202 = vunpack.c.l.b16 %v63
  %v203 = vunpack.c.l.b16 %v64
  %v204 = vunpack.c.l.b16 %v65
  %v205 = vunpack.c.l.b16 %v66
  %v206 = vpack.c.b16 %v171, %v170
  %v207 = vpack.c.b16 %v173, %v172
  %v208 = vpack.c.b16 %v175, %v174
  %v209 = vpack.c.b16 %v177, %v176
  %v210 = vpack.c.b16 %v179, %v178
  %v211 = vpack.c.b16 %v181, %v180
  %v212 = vpack.c.b16 %v183, %v182
  %v213 = vpack.c.b16 %v185, %v184
  %v214 = vpack.c.b16 %v187, %v186
  %v215 = vpack.c.b16 %v189, %v188
  %v216 = vpack.c.b16 %v191, %v190
  %v217 = vpack.c.b16 %v193, %v192
  %v218 = vpack.c.b16 %v195, %v194
  %v219 = vpack.c.b16 %v197, %v196
  %v220 = vpack.c.b16 %v199, %v198
  %v221 = vpack.c.b16 %v201, %v200
  %v222 = vpack.c.b16 %v203, %v202
  %v223 = vpack.c.b16 %v205, %v204
  %vm242 = vcmask 261120
  %v244 = vsel %vm242, %v116, 0
  %v247 = vsel %vm242, %v119, 0
  %v250 = vsel %vm242, %v122, 0
  %v253 = vsel %vm242, %v125, 0
  %255 = vmatprep.subr.bf16.mxu0 0
  %256 = vmatpush1.bf16.msra.mxu0 %v206
  %257 = vmatprep.subr.bf16.mxu0 0
  %258 = vmatpush1.bf16.msra.mxu0 %v207
  %259 = vmatprep.subr.bf16.mxu0 0
  %260 = vmatpush1.bf16.msra.mxu0 %v208
  %261 = vmatprep.subr.bf16.mxu0 0
  %262 = vmatpush1.bf16.msra.mxu0 %v209
  %263 = vmatprep.subr.bf16.mxu0 0
  %264 = vmatpush1.bf16.msra.mxu0 %v210
  %265 = vmatprep.subr.bf16.mxu0 0
  %266 = vmatpush1.bf16.msra.mxu0 %v211
  %267 = vmatprep.subr.bf16.mxu0 0
  %268 = vmatpush1.bf16.msra.mxu0 %v212
  %269 = vmatprep.subr.bf16.mxu0 0
  %270 = vmatpush1.bf16.msra.mxu0 %v213
  %271 = vmatprep.subr.bf16.mxu0 0
  %272 = vmatpush1.bf16.msra.mxu0 %v214
  %273 = vmatprep.subr.bf16.mxu0 0
  %274 = vmatpush1.bf16.msra.mxu0 %v215
  %275 = vmatprep.subr.bf16.mxu0 0
  %276 = vmatpush1.bf16.msra.mxu0 %v216
  %277 = vmatprep.subr.bf16.mxu0 0
  %278 = vmatpush1.bf16.msra.mxu0 %v217
  %279 = vmatprep.subr.bf16.mxu0 0
  %280 = vmatpush1.bf16.msra.mxu0 %v218
  %281 = vmatprep.subr.bf16.mxu0 0
  %282 = vmatpush1.bf16.msra.mxu0 %v219
  %283 = vmatprep.subr.bf16.mxu0 0
  %284 = vmatpush1.bf16.msra.mxu0 %v220
  %285 = vmatprep.subr.bf16.mxu0 0
  %286 = vmatpush1.bf16.msra.mxu0 %v221
  %287 = vmatprep.mubr.bf16.mxu0 %v115
  %288 = vmatmul.mubr.bf16.gmra.mrb[0].mxu0 %v114
  %v289 = vpop.f32.mrb[0].mxu0
  %v290 = vadd.f32 %v72, %v289
  %v291 = vpop.f32.mrb[0].mxu0
  %v292 = vpop.f32.mrb[0].mxu0
  %v293 = vadd.f32 %v72, %v292
  %v294 = vpop.f32.mrb[0].mxu0
  %295 = vmatprep.mubr.bf16.mxu0 %v118
  %296 = vmatmul.mubr.bf16.gmra.mrb[0].mxu0 %v117
  %v297 = vpop.f32.mrb[0].mxu0
  %v298 = vadd.f32 %v72, %v297
  %v299 = vpop.f32.mrb[0].mxu0
  %v300 = vpop.f32.mrb[0].mxu0
  %v301 = vadd.f32 %v72, %v300
  %v302 = vpop.f32.mrb[0].mxu0
  %303 = vmatprep.mubr.bf16.mxu0 %v121
  %304 = vmatmul.mubr.bf16.gmra.mrb[0].mxu0 %v120
  %v305 = vpop.f32.mrb[0].mxu0
  %v306 = vadd.f32 %v72, %v305
  %v307 = vpop.f32.mrb[0].mxu0
  %v308 = vpop.f32.mrb[0].mxu0
  %v309 = vadd.f32 %v72, %v308
  %v310 = vpop.f32.mrb[0].mxu0
  %311 = vmatprep.mubr.bf16.mxu0 %v124
  %312 = vmatmul.mubr.bf16.gmra.mrb[0].mxu0 %v123
  %v313 = vpop.f32.mrb[0].mxu0
  %v314 = vadd.f32 %v72, %v313
  %v315 = vpop.f32.mrb[0].mxu0
  %v316 = vpop.f32.mrb[0].mxu0
  %v317 = vadd.f32 %v72, %v316
  %v318 = vpop.f32.mrb[0].mxu0
  %319 = vdwg.mxu0
  %320 = vmatprep.subr.bf16.mxu0 0
  %321 = vmatpush1.bf16.msra.mxu0 %v222
  %322 = vmatprep.subr.bf16.mxu0 0
  %323 = vmatpush1.bf16.msra.mxu0 %v223
  %324 = vmatprep.subr.bf16.mxu0 0
  %325 = vmatpush1.bf16.msra.mxu0 0
  %326 = vmatprep.subr.bf16.mxu0 0
  %327 = vmatpush1.bf16.msra.mxu0 0
  %328 = vmatprep.subr.bf16.mxu0 0
  %329 = vmatpush1.bf16.msra.mxu0 0
  %330 = vmatprep.subr.bf16.mxu0 0
  %331 = vmatpush1.bf16.msra.mxu0 0
  %332 = vmatprep.subr.bf16.mxu0 0
  %333 = vmatpush1.bf16.msra.mxu0 0
  %334 = vmatprep.subr.bf16.mxu0 0
  %335 = vmatpush1.bf16.msra.mxu0 0
  %336 = vmatprep.subr.bf16.mxu0 0
  %337 = vmatpush1.bf16.msra.mxu0 0
  %338 = vmatprep.subr.bf16.mxu0 0
  %339 = vmatpush1.bf16.msra.mxu0 0
  %340 = vmatprep.subr.bf16.mxu0 0
  %341 = vmatpush1.bf16.msra.mxu0 0
  %342 = vmatprep.subr.bf16.mxu0 0
  %343 = vmatpush1.bf16.msra.mxu0 0
  %344 = vmatprep.subr.bf16.mxu0 0
  %345 = vmatpush1.bf16.msra.mxu0 0
  %346 = vmatprep.subr.bf16.mxu0 0
  %347 = vmatpush1.bf16.msra.mxu0 0
  %348 = vmatprep.subr.bf16.mxu0 0
  %349 = vmatpush1.bf16.msra.mxu0 0
  %350 = vmatprep.subr.bf16.mxu0 0
  %351 = vmatpush1.bf16.msra.mxu0 0
  %352 = vmatprep.mubr.bf16.mxu0 0
  %353 = vmatmul.mubr.bf16.gmra.mrb[0].mxu0 %v244
  %v354 = vpop.f32.mrb[0].mxu0
  %v355 = vadd.f32 %v290, %v354
  %v356 = vpop.f32.mrb[0].mxu0
  %v357 = vpop.f32.mrb[0].mxu0
  %v358 = vadd.f32 %v293, %v357
  %v359 = vpop.f32.mrb[0].mxu0
  %360 = vmatprep.mubr.bf16.mxu0 0
  %361 = vmatmul.mubr.bf16.gmra.mrb[0].mxu0 %v247
  %v362 = vpop.f32.mrb[0].mxu0
  %v363 = vadd.f32 %v298, %v362
  %v364 = vpop.f32.mrb[0].mxu0
  %v365 = vpop.f32.mrb[0].mxu0
  %v366 = vadd.f32 %v301, %v365
  %v367 = vpop.f32.mrb[0].mxu0
  %368 = vmatprep.mubr.bf16.mxu0 0
  %369 = vmatmul.mubr.bf16.gmra.mrb[0].mxu0 %v250
  %v370 = vpop.f32.mrb[0].mxu0
  %v371 = vadd.f32 %v306, %v370
  %v372 = vpop.f32.mrb[0].mxu0
  %v373 = vpop.f32.mrb[0].mxu0
  %v374 = vadd.f32 %v309, %v373
  %v375 = vpop.f32.mrb[0].mxu0
  %376 = vmatprep.mubr.bf16.mxu0 0
  %377 = vmatmul.mubr.bf16.gmra.mrb[0].mxu0 %v253
  %v378 = vpop.f32.mrb[0].mxu0
  %v379 = vadd.f32 %v314, %v378
  %v380 = vpop.f32.mrb[0].mxu0
  %v381 = vpop.f32.mrb[0].mxu0
  %v382 = vadd.f32 %v317, %v381
  %v383 = vpop.f32.mrb[0].mxu0
  %384 = vdwg.mxu0
  %v385 = vmax.f32 %v355, 0.0
  %v386 = vmax.f32 %v358, 0.0
  %v387 = vmax.f32 %v363, 0.0
  %v388 = vmax.f32 %v366, 0.0
  %v389 = vmax.f32 %v371, 0.0
  %v390 = vmax.f32 %v374, 0.0
  %v391 = vmax.f32 %v379, 0.0
  %v392 = vmax.f32 %v382, 0.0
  %v393 = vpack.c.bf16 %v386, %v385
  %v394 = vpack.c.bf16 %v388, %v387
  %v395 = vpack.c.bf16 %v390, %v389
  %v396 = vpack.c.bf16 %v392, %v391
  %v401 = vunpack.c.l.b16 %v393
  %v402 = vunpack.c.h.b16 %v393
  %v403 = vunpack.c.l.b16 %v394
  %v404 = vunpack.c.h.b16 %v394
  %v405 = vunpack.c.l.b16 %v395
  %v406 = vunpack.c.h.b16 %v395
  %v407 = vunpack.c.l.b16 %v396
  %v408 = vunpack.c.h.b16 %v396
  %v409 = vpack.c.b16 %v401, %v401
  %v410 = vpack.c.b16 %v402, %v402
  %v411 = vpack.c.b16 %v403, %v403
  %v412 = vpack.c.b16 %v404, %v404
  %v413 = vpack.c.b16 %v405, %v405
  %v414 = vpack.c.b16 %v406, %v406
  %v415 = vpack.c.b16 %v407, %v407
  %v416 = vpack.c.b16 %v408, %v408
  %vm425 = vcmask 257024
  %426 = vst.msk [vmem:[%s3] sm:$0xf] %vm425, %v409
  %427 = vst.msk [vmem:[%s3 + $0x4] sm:$0xf] %vm425, %v410
  %428 = vst.msk [vmem:[%s3 + $0x8] sm:$0xf] %vm425, %v411
  %429 = vst.msk [vmem:[%s3 + $0xc] sm:$0xf] %vm425, %v412
  %430 = vst.msk [vmem:[%s3 + $0x10] sm:$0xf] %vm425, %v413
  %431 = vst.msk [vmem:[%s3 + $0x14] sm:$0xf] %vm425, %v414
  %432 = vst.msk [vmem:[%s3 + $0x18] sm:$0xf] %vm425, %v415
  %433 = vst.msk [vmem:[%s3 + $0x1c] sm:$0xf] %vm425, %v416
  // Predicated region
  $region14: #{sketchanet_loss.14} parent=0 // pred_check
    _
  $region15: #{sketchanet_loss.14} parent=0 // pred_check_branch
    %435 = sbr.rel (0) target = $region17
  $region16: #{sketchanet_loss.14} parent=0 // pred_region
    _
  $region17: #{sketchanet_loss.14} parent=0 // pred_fallthru
    _
  // Predicated region
  $region18: #{sketchanet_loss.14} parent=0 // pred_check
    _
  $region19: #{sketchanet_loss.14} parent=0 // pred_check_branch
    %437 = sbr.rel (0) target = $region21
  $region20: #{sketchanet_loss.14} parent=0 // pred_region
    _
  $region21: #{sketchanet_loss.14} parent=0 // pred_fallthru
    _

</llo_original>
